<compile_context>
chip_gen: v7x
topology: tpu7x:2x2x1
jax: 0.10.0
libtpu: 0.0.40
codegen_flags: <defaults>
</compile_context>

<pallas_src>
import functools

import jax
import jax.numpy as jnp
from jax.experimental import pallas as pl
from jax.experimental.pallas import tpu as pltpu


# ----------------------------------------------------------------------------
# Pallas kernels
# ----------------------------------------------------------------------------
def _matmul_bias_relu_kernel(x_ref, w_ref, b_ref, o_ref, *, relu):
    y = jnp.dot(x_ref[...], w_ref[...], preferred_element_type=jnp.float32)
    y = y + b_ref[...]
    if relu:
        y = jnp.maximum(y, 0.0)
    o_ref[...] = y.astype(o_ref.dtype)


def pallas_matmul_bias_relu(x, w, b, *, relu, out_dtype=jnp.float32, tm=512):
    """y = relu?(x @ w + b), M-tiled.  x:[M,K], w:[K,N], b:[1,N] -> [M,N].

    Matmul operands are cast to bf16 (MXU-native on v5e/v6e/v7x); accumulation
    and bias/ReLU stay in f32; the store dtype is `out_dtype` (bf16 for conv
    activations to halve HBM traffic).  Grid tiles M and is marked "parallel"
    so it shards across TensorCores (v7x megacore) and pipelines HBM<->VMEM.
    """
    M, K = x.shape
    N = w.shape[1]
    x_bf = x.astype(jnp.bfloat16)
    w_bf = w.astype(jnp.bfloat16)
    b32 = b.astype(jnp.float32).reshape(1, N)

    if M <= 2 * tm:
        tm_eff, Mp = M, M            # single block == full array dims (no pad)
    else:
        tm_eff = tm
        Mp = -(-M // tm_eff) * tm_eff
        if Mp != M:
            x_bf = jnp.pad(x_bf, ((0, Mp - M), (0, 0)))

    out_bytes = jnp.dtype(out_dtype).itemsize
    cost = pl.CostEstimate(
        flops=2 * Mp * K * N,
        transcendentals=0,
        bytes_accessed=Mp * K * 2 + K * N * 2 + Mp * N * out_bytes,
    )

    y = pl.pallas_call(
        functools.partial(_matmul_bias_relu_kernel, relu=relu),
        out_shape=jax.ShapeDtypeStruct((Mp, N), out_dtype),
        grid=(Mp // tm_eff,),
        in_specs=[
            pl.BlockSpec((tm_eff, K), lambda i: (i, 0)),
            pl.BlockSpec((K, N), lambda i: (0, 0)),
            pl.BlockSpec((1, N), lambda i: (0, 0)),
        ],
        out_specs=pl.BlockSpec((tm_eff, N), lambda i: (i, 0)),
        compiler_params=pltpu.CompilerParams(
            dimension_semantics=("parallel",)),
        cost_estimate=cost,
    )(x_bf, w_bf, b32)

    return y[:M] if Mp != M else y


def _mlp_head_kernel(feat_ref, w1_ref, b1_ref, w2_ref, b2_ref, wh_ref, bh_ref,
                     noise_ref, out_ref, *, A, deterministic, with_logprob):
    # l1 -> relu -> l2 -> relu  (bf16 operands, f32 accumulate)
    h = jnp.dot(feat_ref[...], w1_ref[...],
                preferred_element_type=jnp.float32) + b1_ref[...]
    h = jnp.maximum(h, 0.0)
    h = jnp.dot(h.astype(jnp.bfloat16), w2_ref[...],
                preferred_element_type=jnp.float32) + b2_ref[...]
    h = jnp.maximum(h, 0.0)

    # merged mean|log_std head: single [H, 2A] matmul
    ms = jnp.dot(h.astype(jnp.bfloat16), wh_ref[...],
                 preferred_element_type=jnp.float32) + bh_ref[...]
    mean = ms[:, :A]
    log_std = jnp.clip(ms[:, A:], -20.0, 2.0)
    std = jnp.exp(log_std)

    noise = noise_ref[...]
    if deterministic:
        pi_a = mean
    else:
        pi_a = mean + std * noise                   # reparameterized sample

    a = jnp.tanh(pi_a)
    tb = a.shape[0]

    if with_logprob:
        # Normal(mean, std).log_prob(pi_a) summed over action dim.
        # (pi_a - mean)/std == noise (or 0 when deterministic), so no divide.
        z = jnp.zeros_like(mean) if deterministic else noise
        logp = -0.5 * z * z - log_std - 0.5 * jnp.log(2.0 * jnp.pi)
        log_pi = jnp.sum(logp, axis=1, keepdims=True)
        # tanh-squash correction: 2*(log 2 - pi_a - softplus(-2*pi_a))
        x2 = -2.0 * pi_a
        softplus = jnp.maximum(x2, 0.0) + jnp.log1p(jnp.exp(-jnp.abs(x2)))
        corr = 2.0 * (jnp.log(2.0) - pi_a - softplus)
        log_pi = log_pi - jnp.sum(corr, axis=1, keepdims=True)
    else:
        log_pi = jnp.zeros((tb, 1), jnp.float32)

    # lane-dense output slab: [a | log_pi | zero padding] -> width 128
    pad_w = out_ref.shape[1] - (A + 1)
    out_ref[...] = jnp.concatenate(
        [a, log_pi, jnp.zeros((tb, pad_w), jnp.float32)], axis=1)


def pallas_mlp_head(feat, w1, b1, w2, b2, wh, bh, noise, *,
                    deterministic, with_logprob, tb=256):
    """Fused l1 -> l2 -> (mean|log_std) head -> sample/log-prob/tanh."""
    B, Fd = feat.shape
    H = w1.shape[1]
    A = noise.shape[1]
    outw = max(128, -(-(A + 1) // 128) * 128)

    feat_bf = feat.astype(jnp.bfloat16)
    noise32 = noise.astype(jnp.float32)

    if B <= 2 * tb:
        tb_eff, Bp = B, B
    else:
        tb_eff = tb
        Bp = -(-B // tb_eff) * tb_eff
        if Bp != B:
            feat_bf = jnp.pad(feat_bf, ((0, Bp - B), (0, 0)))
            noise32 = jnp.pad(noise32, ((0, Bp - B), (0, 0)))

    cost = pl.CostEstimate(
        flops=2 * Bp * (Fd * H + H * H + H * 2 * A),
        transcendentals=Bp * A * 4,                 # exp, tanh, exp, log1p
        bytes_accessed=(Bp * Fd * 2 + Fd * H * 2 + H * H * 2 + H * 2 * A * 2
                        + Bp * A * 4 + Bp * outw * 4),
    )

    slab = pl.pallas_call(
        functools.partial(_mlp_head_kernel, A=A,
                          deterministic=deterministic,
                          with_logprob=with_logprob),
        out_shape=jax.ShapeDtypeStruct((Bp, outw), jnp.float32),
        grid=(Bp // tb_eff,),
        in_specs=[
            pl.BlockSpec((tb_eff, Fd), lambda i: (i, 0)),
            pl.BlockSpec((Fd, H), lambda i: (0, 0)),
            pl.BlockSpec((1, H), lambda i: (0, 0)),
            pl.BlockSpec((H, H), lambda i: (0, 0)),
            pl.BlockSpec((1, H), lambda i: (0, 0)),
            pl.BlockSpec((H, 2 * A), lambda i: (0, 0)),
            pl.BlockSpec((1, 2 * A), lambda i: (0, 0)),
            pl.BlockSpec((tb_eff, A), lambda i: (i, 0)),
        ],
        out_specs=pl.BlockSpec((tb_eff, outw), lambda i: (i, 0)),
        compiler_params=pltpu.CompilerParams(
            dimension_semantics=("parallel",)),
        cost_estimate=cost,
    )(feat_bf, w1, b1, w2, b2, wh, bh, noise32)

    a = slab[:B, :A]
    log_pi = slab[:B, A:A + 1] if with_logprob else None
    return a, log_pi


# ----------------------------------------------------------------------------
# Glue: im2col conv lowering (matmul runs in the Pallas kernel)
# ----------------------------------------------------------------------------
def im2col(x_nhwc, kh, kw, stride):
    """x:[B,H,W,C] -> patches:[B*OH*OW, C*KH*KW] with (C,KH,KW) ordering."""
    B, H, W, C = x_nhwc.shape
    oh = (H - kh) // stride + 1
    ow = (W - kw) // stride + 1
    rows = []
    for i in range(kh):
        cols = []
        for j in range(kw):
            patch = x_nhwc[:, i:i + stride * oh:stride, j:j + stride * ow:stride, :]
            cols.append(patch)                        # [B, oh, ow, C]
        rows.append(jnp.stack(cols, axis=-1))         # [B, oh, ow, C, kw]
    patches = jnp.stack(rows, axis=-2)                # [B, oh, ow, C, kh, kw]
    return patches.reshape(B * oh * ow, C * kh * kw), (B, oh, ow)


def conv2d_relu(x_nhwc, w_mat, b, kh, kw, stride):
    """PyTorch-semantics Conv2d (no padding) + ReLU via im2col + tiled Pallas matmul.

    w_mat: pre-reshaped [C*KH*KW, OC] (bf16), b: [1, OC] (f32).
    Output is NHWC bf16 (downstream matmuls consume bf16, so this halves the
    HBM bytes written/re-read for activations without changing results).
    """
    patches, (B, oh, ow) = im2col(x_nhwc.astype(jnp.bfloat16), kh, kw, stride)
    oc = w_mat.shape[1]
    y = pallas_matmul_bias_relu(patches, w_mat, b, relu=True,
                                out_dtype=jnp.bfloat16)
    return y.reshape(B, oh, ow, oc)                   # NHWC, bf16


# ----------------------------------------------------------------------------
# Parameter init (deterministic, PyTorch-default-style uniform bounds)
# ----------------------------------------------------------------------------
def _uniform(key, shape, fan_in):
    bound = 1.0 / jnp.sqrt(jnp.float32(fan_in))
    return jax.random.uniform(key, shape, jnp.float32, -bound, bound)


def init_actor_params(key, state_dim, action_dim, hidden_width):
    c_in = state_dim[0]
    feature_size = 3136  # CNNEncoder.feature_size (requires 84x84 spatial input)
    keys = jax.random.split(key, 14)
    p = {}
    # CNN encoder (PyTorch layout)
    p["conv1_w"] = _uniform(keys[0], (32, c_in, 8, 8), c_in * 8 * 8)
    p["conv1_b"] = _uniform(keys[1], (32,), c_in * 8 * 8)
    p["conv2_w"] = _uniform(keys[2], (64, 32, 4, 4), 32 * 4 * 4)
    p["conv2_b"] = _uniform(keys[3], (64,), 32 * 4 * 4)
    p["conv3_w"] = _uniform(keys[4], (64, 64, 3, 3), 64 * 3 * 3)
    p["conv3_b"] = _uniform(keys[5], (64,), 64 * 3 * 3)
    # MLP + heads (stored as [in, out] for x @ W; l1 rows in NCHW-flatten order)
    p["l1_w"] = _uniform(keys[6], (feature_size, hidden_width), feature_size)
    p["l1_b"] = _uniform(keys[7], (1, hidden_width), feature_size)
    p["l2_w"] = _uniform(keys[8], (hidden_width, hidden_width), hidden_width)
    p["l2_b"] = _uniform(keys[9], (1, hidden_width), hidden_width)
    p["mean_w"] = _uniform(keys[10], (hidden_width, action_dim), hidden_width)
    p["mean_b"] = _uniform(keys[11], (1, action_dim), hidden_width)
    p["logstd_w"] = _uniform(keys[12], (hidden_width, action_dim), hidden_width)
    p["logstd_b"] = _uniform(keys[13], (1, action_dim), hidden_width)
    return p


def prepare_actor_params(p):
    """One-time conversion to kernel-friendly layout:
       * conv weights -> [C*KH*KW, OC] bf16 matrices (im2col (C,KH,KW) order)
       * l1_w rows permuted from NCHW-flatten to NHWC-flatten order (folds the
         nn.Flatten transpose into the weight, removing a per-call transpose)
       * mean/log_std heads merged into one [H, 2A] weight
       * matmul weights cast to bf16 once (biases stay f32)
    """
    H = p["l1_w"].shape[1]
    c3 = p["conv3_w"].shape[0]                               # 64
    hw = int(round((p["l1_w"].shape[0] // c3) ** 0.5))       # 7

    def conv_prep(w, b):
        oc = w.shape[0]
        return (w.reshape(oc, -1).T.astype(jnp.bfloat16),
                b.reshape(1, oc).astype(jnp.float32))

    c1w, c1b = conv_prep(p["conv1_w"], p["conv1_b"])
    c2w, c2b = conv_prep(p["conv2_w"], p["conv2_b"])
    c3w, c3b = conv_prep(p["conv3_w"], p["conv3_b"])

    # NCHW-flat row index c*hw*hw + y*hw + x  ->  NHWC-flat (y*hw + x)*C + c
    l1_w_nhwc = (p["l1_w"].reshape(c3, hw, hw, H)
                 .transpose(1, 2, 0, 3)
                 .reshape(c3 * hw * hw, H))

    return {
        "conv1_w": c1w, "conv1_b": c1b,
        "conv2_w": c2w, "conv2_b": c2b,
        "conv3_w": c3w, "conv3_b": c3b,
        "l1_w": l1_w_nhwc.astype(jnp.bfloat16),
        "l1_b": p["l1_b"].astype(jnp.float32),
        "l2_w": p["l2_w"].astype(jnp.bfloat16),
        "l2_b": p["l2_b"].astype(jnp.float32),
        "head_w": jnp.concatenate([p["mean_w"], p["logstd_w"]],
                                  axis=1).astype(jnp.bfloat16),
        "head_b": jnp.concatenate([p["mean_b"], p["logstd_b"]],
                                  axis=1).astype(jnp.float32),
    }


# ----------------------------------------------------------------------------
# Actor forward
# ----------------------------------------------------------------------------
@functools.partial(jax.jit, static_argnames=("deterministic", "with_logprob"))
def actor_forward(prepared, x_nchw, noise, deterministic=False, with_logprob=True):
    # NCHW (PyTorch) -> NHWC (kernel layout)
    x = jnp.transpose(x_nchw, (0, 2, 3, 1)).astype(jnp.float32)

    out = conv2d_relu(x, prepared["conv1_w"], prepared["conv1_b"], 8, 8, 4)
    out = conv2d_relu(out, prepared["conv2_w"], prepared["conv2_b"], 4, 4, 2)
    out = conv2d_relu(out, prepared["conv3_w"], prepared["conv3_b"], 3, 3, 1)

    # NHWC flatten; the NCHW permutation of nn.Flatten is already folded into l1_w.
    B = out.shape[0]
    feat = out.reshape(B, -1)                                 # [B, 3136] bf16

    a, log_pi = pallas_mlp_head(
        feat,
        prepared["l1_w"], prepared["l1_b"],
        prepared["l2_w"], prepared["l2_b"],
        prepared["head_w"], prepared["head_b"],
        noise,
        deterministic=deterministic, with_logprob=with_logprob)
    return a, log_pi


# ----------------------------------------------------------------------------
if __name__ == "__main__":
    batch = 2
    state_dim = (4, 84, 84)     # feature_size=3136 implies 84x84 spatial input
    action_dim = 6
    hidden_width = 32

    key = jax.random.PRNGKey(0)
    k_param, k_x, k_noise = jax.random.split(key, 3)

    params = init_actor_params(k_param, state_dim, action_dim, hidden_width)
    prepared = prepare_actor_params(params)

    x = jax.random.normal(k_x, (batch,) + state_dim, dtype=jnp.float32)
    noise = jax.random.normal(k_noise, (batch, action_dim), dtype=jnp.float32)

    a, log_pi = actor_forward(prepared, x, noise,
                              deterministic=False, with_logprob=True)
    jax.block_until_ready((a, log_pi))

    assert a.shape == (batch, action_dim)
    assert log_pi.shape == (batch, 1)
    assert bool(jnp.all(jnp.isfinite(a))) and bool(jnp.all(jnp.isfinite(log_pi)))

    # Exercise the other static branches once (deterministic / no log-prob).
    a_det, lp_none = actor_forward(prepared, x, noise,
                                   deterministic=True, with_logprob=False)
    jax.block_until_ready(a_det)
    assert a_det.shape == (batch, action_dim) and lp_none is None

    print("KERNEL_OK")
</pallas_src>

<mosaic_0001>
module attributes {stable_mosaic.version = 11 : i64} {
  func.func @_matmul_bias_relu_kernel(%arg0: i32, %arg1: memref<800x256xbf16, #tpu.memory_space<vmem>>, %arg2: memref<256x32xbf16, #tpu.memory_space<vmem>>, %arg3: memref<1x32xf32, #tpu.memory_space<vmem>>, %arg4: memref<800x32xbf16, #tpu.memory_space<vmem>>) attributes {dimension_semantics = [#tpu.dimension_semantics<parallel>], iteration_bounds = array<i64: 1>, scalar_prefetch = 0 : i64, scratch_operands = 0 : i64, tpu.core_type = #tpu.core_type<tc>, window_params = [{transform_indices = @transform_0, window_bounds = array<i64: 800, 256>}, {pipeline_mode = #tpu.pipeline_mode<synchronous>, transform_indices = @transform_1, window_bounds = array<i64: 256, 32>}, {pipeline_mode = #tpu.pipeline_mode<synchronous>, transform_indices = @transform_2, window_bounds = array<i64: 1, 32>}, {transform_indices = @transform_3, window_bounds = array<i64: 800, 32>}]} {
    %c0 = arith.constant 0 : index
    %c0_0 = arith.constant 0 : index
    %0 = vector.load %arg1[%c0, %c0_0] : memref<800x256xbf16, #tpu.memory_space<vmem>>, vector<800x256xbf16>
    %c0_1 = arith.constant 0 : index
    %c0_2 = arith.constant 0 : index
    %1 = vector.load %arg2[%c0_1, %c0_2] : memref<256x32xbf16, #tpu.memory_space<vmem>>, vector<256x32xbf16>
    %cst = arith.constant dense<0.000000e+00> : vector<800x32xf32>
    %2 = tpu.matmul %0, %1, %cst {dimension_numbers = #tpu.dot_dimension_numbers<[1], [0], [0], [1], [0, 0, 1, 1], [], []>} : vector<800x256xbf16>, vector<256x32xbf16>, vector<800x32xf32> -> vector<800x32xf32>
    %c0_3 = arith.constant 0 : index
    %c0_4 = arith.constant 0 : index
    %3 = vector.load %arg3[%c0_3, %c0_4] : memref<1x32xf32, #tpu.memory_space<vmem>>, vector<1x32xf32>
    %4 = vector.broadcast %3 : vector<1x32xf32> to vector<800x32xf32>
    %5 = arith.addf %2, %4 : vector<800x32xf32>
    %cst_5 = arith.constant 0.000000e+00 : f32
    %6 = vector.broadcast %cst_5 : f32 to vector<800x32xf32>
    %7 = arith.maximumf %5, %6 : vector<800x32xf32>
    %8 = arith.truncf %7 : vector<800x32xf32> to vector<800x32xbf16>
    %c0_6 = arith.constant 0 : index
    %c0_7 = arith.constant 0 : index
    %9 = vector.load %arg4[%c0_6, %c0_7] : memref<800x32xbf16, #tpu.memory_space<vmem>>, vector<800x32xbf16>
    tpu.vector_store %arg4[%c0_6, %c0_7], %8 {strides = array<i32>} : memref<800x32xbf16, #tpu.memory_space<vmem>>, vector<800x32xbf16>,
    return
  }
  func.func @transform_0(%arg0: i32) -> (i32, i32) {
    %c0_i32 = arith.constant 0 : i32
    %c0_i32_0 = arith.constant 0 : i32
    return %arg0, %c0_i32 : i32, i32
  }
  func.func @transform_1(%arg0: i32) -> (i32, i32) {
    %c0_i32 = arith.constant 0 : i32
    %c0_i32_0 = arith.constant 0 : i32
    %c0_i32_1 = arith.constant 0 : i32
    return %c0_i32, %c0_i32_0 : i32, i32
  }
  func.func @transform_2(%arg0: i32) -> (i32, i32) {
    %c0_i32 = arith.constant 0 : i32
    %c0_i32_0 = arith.constant 0 : i32
    %c0_i32_1 = arith.constant 0 : i32
    return %c0_i32, %c0_i32_0 : i32, i32
  }
  func.func @transform_3(%arg0: i32) -> (i32, i32) {
    %c0_i32 = arith.constant 0 : i32
    %c0_i32_0 = arith.constant 0 : i32
    return %arg0, %c0_i32 : i32, i32
  }
}

module attributes {stable_mosaic.version = 11 : i64} {
  func.func @_matmul_bias_relu_kernel(%arg0: i32, %arg1: memref<162x512xbf16, #tpu.memory_space<vmem>>, %arg2: memref<512x64xbf16, #tpu.memory_space<vmem>>, %arg3: memref<1x64xf32, #tpu.memory_space<vmem>>, %arg4: memref<162x64xbf16, #tpu.memory_space<vmem>>) attributes {dimension_semantics = [#tpu.dimension_semantics<parallel>], iteration_bounds = array<i64: 1>, scalar_prefetch = 0 : i64, scratch_operands = 0 : i64, tpu.core_type = #tpu.core_type<tc>, window_params = [{transform_indices = @transform_0, window_bounds = array<i64: 162, 512>}, {pipeline_mode = #tpu.pipeline_mode<synchronous>, transform_indices = @transform_1, window_bounds = array<i64: 512, 64>}, {pipeline_mode = #tpu.pipeline_mode<synchronous>, transform_indices = @transform_2, window_bounds = array<i64: 1, 64>}, {transform_indices = @transform_3, window_bounds = array<i64: 162, 64>}]} {
    %c0 = arith.constant 0 : index
    %c0_0 = arith.constant 0 : index
    %0 = vector.load %arg1[%c0, %c0_0] : memref<162x512xbf16, #tpu.memory_space<vmem>>, vector<162x512xbf16>
    %c0_1 = arith.constant 0 : index
    %c0_2 = arith.constant 0 : index
    %1 = vector.load %arg2[%c0_1, %c0_2] : memref<512x64xbf16, #tpu.memory_space<vmem>>, vector<512x64xbf16>
    %cst = arith.constant dense<0.000000e+00> : vector<162x64xf32>
    %2 = tpu.matmul %0, %1, %cst {dimension_numbers = #tpu.dot_dimension_numbers<[1], [0], [0], [1], [0, 0, 1, 1], [], []>} : vector<162x512xbf16>, vector<512x64xbf16>, vector<162x64xf32> -> vector<162x64xf32>
    %c0_3 = arith.constant 0 : index
    %c0_4 = arith.constant 0 : index
    %3 = vector.load %arg3[%c0_3, %c0_4] : memref<1x64xf32, #tpu.memory_space<vmem>>, vector<1x64xf32>
    %4 = vector.broadcast %3 : vector<1x64xf32> to vector<162x64xf32>
    %5 = arith.addf %2, %4 : vector<162x64xf32>
    %cst_5 = arith.constant 0.000000e+00 : f32
    %6 = vector.broadcast %cst_5 : f32 to vector<162x64xf32>
    %7 = arith.maximumf %5, %6 : vector<162x64xf32>
    %8 = arith.truncf %7 : vector<162x64xf32> to vector<162x64xbf16>
    %c0_6 = arith.constant 0 : index
    %c0_7 = arith.constant 0 : index
    %9 = vector.load %arg4[%c0_6, %c0_7] : memref<162x64xbf16, #tpu.memory_space<vmem>>, vector<162x64xbf16>
    tpu.vector_store %arg4[%c0_6, %c0_7], %8 {strides = array<i32>} : memref<162x64xbf16, #tpu.memory_space<vmem>>, vector<162x64xbf16>,
    return
  }
  func.func @transform_0(%arg0: i32) -> (i32, i32) {
    %c0_i32 = arith.constant 0 : i32
    %c0_i32_0 = arith.constant 0 : i32
    return %arg0, %c0_i32 : i32, i32
  }
  func.func @transform_1(%arg0: i32) -> (i32, i32) {
    %c0_i32 = arith.constant 0 : i32
    %c0_i32_0 = arith.constant 0 : i32
    %c0_i32_1 = arith.constant 0 : i32
    return %c0_i32, %c0_i32_0 : i32, i32
  }
  func.func @transform_2(%arg0: i32) -> (i32, i32) {
    %c0_i32 = arith.constant 0 : i32
    %c0_i32_0 = arith.constant 0 : i32
    %c0_i32_1 = arith.constant 0 : i32
    return %c0_i32, %c0_i32_0 : i32, i32
  }
  func.func @transform_3(%arg0: i32) -> (i32, i32) {
    %c0_i32 = arith.constant 0 : i32
    %c0_i32_0 = arith.constant 0 : i32
    return %arg0, %c0_i32 : i32, i32
  }
}

module attributes {stable_mosaic.version = 11 : i64} {
  func.func @_matmul_bias_relu_kernel(%arg0: i32, %arg1: memref<98x576xbf16, #tpu.memory_space<vmem>>, %arg2: memref<576x64xbf16, #tpu.memory_space<vmem>>, %arg3: memref<1x64xf32, #tpu.memory_space<vmem>>, %arg4: memref<98x64xbf16, #tpu.memory_space<vmem>>) attributes {dimension_semantics = [#tpu.dimension_semantics<parallel>], iteration_bounds = array<i64: 1>, scalar_prefetch = 0 : i64, scratch_operands = 0 : i64, tpu.core_type = #tpu.core_type<tc>, window_params = [{transform_indices = @transform_0, window_bounds = array<i64: 98, 576>}, {pipeline_mode = #tpu.pipeline_mode<synchronous>, transform_indices = @transform_1, window_bounds = array<i64: 576, 64>}, {pipeline_mode = #tpu.pipeline_mode<synchronous>, transform_indices = @transform_2, window_bounds = array<i64: 1, 64>}, {transform_indices = @transform_3, window_bounds = array<i64: 98, 64>}]} {
    %c0 = arith.constant 0 : index
    %c0_0 = arith.constant 0 : index
    %0 = vector.load %arg1[%c0, %c0_0] : memref<98x576xbf16, #tpu.memory_space<vmem>>, vector<98x576xbf16>
    %c0_1 = arith.constant 0 : index
    %c0_2 = arith.constant 0 : index
    %1 = vector.load %arg2[%c0_1, %c0_2] : memref<576x64xbf16, #tpu.memory_space<vmem>>, vector<576x64xbf16>
    %cst = arith.constant dense<0.000000e+00> : vector<98x64xf32>
    %2 = tpu.matmul %0, %1, %cst {dimension_numbers = #tpu.dot_dimension_numbers<[1], [0], [0], [1], [0, 0, 1, 1], [], []>} : vector<98x576xbf16>, vector<576x64xbf16>, vector<98x64xf32> -> vector<98x64xf32>
    %c0_3 = arith.constant 0 : index
    %c0_4 = arith.constant 0 : index
    %3 = vector.load %arg3[%c0_3, %c0_4] : memref<1x64xf32, #tpu.memory_space<vmem>>, vector<1x64xf32>
    %4 = vector.broadcast %3 : vector<1x64xf32> to vector<98x64xf32>
    %5 = arith.addf %2, %4 : vector<98x64xf32>
    %cst_5 = arith.constant 0.000000e+00 : f32
    %6 = vector.broadcast %cst_5 : f32 to vector<98x64xf32>
    %7 = arith.maximumf %5, %6 : vector<98x64xf32>
    %8 = arith.truncf %7 : vector<98x64xf32> to vector<98x64xbf16>
    %c0_6 = arith.constant 0 : index
    %c0_7 = arith.constant 0 : index
    %9 = vector.load %arg4[%c0_6, %c0_7] : memref<98x64xbf16, #tpu.memory_space<vmem>>, vector<98x64xbf16>
    tpu.vector_store %arg4[%c0_6, %c0_7], %8 {strides = array<i32>} : memref<98x64xbf16, #tpu.memory_space<vmem>>, vector<98x64xbf16>,
    return
  }
  func.func @transform_0(%arg0: i32) -> (i32, i32) {
    %c0_i32 = arith.constant 0 : i32
    %c0_i32_0 = arith.constant 0 : i32
    return %arg0, %c0_i32 : i32, i32
  }
  func.func @transform_1(%arg0: i32) -> (i32, i32) {
    %c0_i32 = arith.constant 0 : i32
    %c0_i32_0 = arith.constant 0 : i32
    %c0_i32_1 = arith.constant 0 : i32
    return %c0_i32, %c0_i32_0 : i32, i32
  }
  func.func @transform_2(%arg0: i32) -> (i32, i32) {
    %c0_i32 = arith.constant 0 : i32
    %c0_i32_0 = arith.constant 0 : i32
    %c0_i32_1 = arith.constant 0 : i32
    return %c0_i32, %c0_i32_0 : i32, i32
  }
  func.func @transform_3(%arg0: i32) -> (i32, i32) {
    %c0_i32 = arith.constant 0 : i32
    %c0_i32_0 = arith.constant 0 : i32
    return %arg0, %c0_i32 : i32, i32
  }
}

module attributes {stable_mosaic.version = 11 : i64} {
  func.func @_mlp_head_kernel(%arg0: i32, %arg1: memref<2x3136xbf16, #tpu.memory_space<vmem>>, %arg2: memref<3136x32xbf16, #tpu.memory_space<vmem>>, %arg3: memref<1x32xf32, #tpu.memory_space<vmem>>, %arg4: memref<32x32xbf16, #tpu.memory_space<vmem>>, %arg5: memref<1x32xf32, #tpu.memory_space<vmem>>, %arg6: memref<32x12xbf16, #tpu.memory_space<vmem>>, %arg7: memref<1x12xf32, #tpu.memory_space<vmem>>, %arg8: memref<2x6xf32, #tpu.memory_space<vmem>>, %arg9: memref<2x128xf32, #tpu.memory_space<vmem>>) attributes {dimension_semantics = [#tpu.dimension_semantics<parallel>], iteration_bounds = array<i64: 1>, scalar_prefetch = 0 : i64, scratch_operands = 0 : i64, tpu.core_type = #tpu.core_type<tc>, window_params = [{transform_indices = @transform_0, window_bounds = array<i64: 2, 3136>}, {pipeline_mode = #tpu.pipeline_mode<synchronous>, transform_indices = @transform_1, window_bounds = array<i64: 3136, 32>}, {pipeline_mode = #tpu.pipeline_mode<synchronous>, transform_indices = @transform_2, window_bounds = array<i64: 1, 32>}, {pipeline_mode = #tpu.pipeline_mode<synchronous>, transform_indices = @transform_3, window_bounds = array<i64: 32, 32>}, {pipeline_mode = #tpu.pipeline_mode<synchronous>, transform_indices = @transform_4, window_bounds = array<i64: 1, 32>}, {pipeline_mode = #tpu.pipeline_mode<synchronous>, transform_indices = @transform_5, window_bounds = array<i64: 32, 12>}, {pipeline_mode = #tpu.pipeline_mode<synchronous>, transform_indices = @transform_6, window_bounds = array<i64: 1, 12>}, {transform_indices = @transform_7, window_bounds = array<i64: 2, 6>}, {transform_indices = @transform_8, window_bounds = array<i64: 2, 128>}]} {
    %c0 = arith.constant 0 : index
    %c0_0 = arith.constant 0 : index
    %0 = vector.load %arg1[%c0, %c0_0] : memref<2x3136xbf16, #tpu.memory_space<vmem>>, vector<2x3136xbf16>
    %c0_1 = arith.constant 0 : index
    %c0_2 = arith.constant 0 : index
    %1 = vector.load %arg2[%c0_1, %c0_2] : memref<3136x32xbf16, #tpu.memory_space<vmem>>, vector<3136x32xbf16>
    %cst = arith.constant dense<0.000000e+00> : vector<2x32xf32>
    %2 = tpu.matmul %0, %1, %cst {dimension_numbers = #tpu.dot_dimension_numbers<[1], [0], [0], [1], [0, 0, 1, 1], [], []>} : vector<2x3136xbf16>, vector<3136x32xbf16>, vector<2x32xf32> -> vector<2x32xf32>
    %c0_3 = arith.constant 0 : index
    %c0_4 = arith.constant 0 : index
    %3 = vector.load %arg3[%c0_3, %c0_4] : memref<1x32xf32, #tpu.memory_space<vmem>>, vector<1x32xf32>
    %4 = vector.broadcast %3 : vector<1x32xf32> to vector<2x32xf32>
    %5 = arith.addf %2, %4 : vector<2x32xf32>
    %cst_5 = arith.constant 0.000000e+00 : f32
    %6 = vector.broadcast %cst_5 : f32 to vector<2x32xf32>
    %7 = arith.maximumf %5, %6 : vector<2x32xf32>
    %8 = arith.truncf %7 : vector<2x32xf32> to vector<2x32xbf16>
    %c0_6 = arith.constant 0 : index
    %c0_7 = arith.constant 0 : index
    %9 = vector.load %arg4[%c0_6, %c0_7] : memref<32x32xbf16, #tpu.memory_space<vmem>>, vector<32x32xbf16>
    %cst_8 = arith.constant dense<0.000000e+00> : vector<2x32xf32>
    %10 = tpu.matmul %8, %9, %cst_8 {dimension_numbers = #tpu.dot_dimension_numbers<[1], [0], [0], [1], [0, 0, 1, 1], [], []>} : vector<2x32xbf16>, vector<32x32xbf16>, vector<2x32xf32> -> vector<2x32xf32>
    %c0_9 = arith.constant 0 : index
    %c0_10 = arith.constant 0 : index
    %11 = vector.load %arg5[%c0_9, %c0_10] : memref<1x32xf32, #tpu.memory_space<vmem>>, vector<1x32xf32>
    %12 = vector.broadcast %11 : vector<1x32xf32> to vector<2x32xf32>
    %13 = arith.addf %10, %12 : vector<2x32xf32>
    %cst_11 = arith.constant 0.000000e+00 : f32
    %14 = vector.broadcast %cst_11 : f32 to vector<2x32xf32>
    %15 = arith.maximumf %13, %14 : vector<2x32xf32>
    %16 = arith.truncf %15 : vector<2x32xf32> to vector<2x32xbf16>
    %c0_12 = arith.constant 0 : index
    %c0_13 = arith.constant 0 : index
    %17 = vector.load %arg6[%c0_12, %c0_13] : memref<32x12xbf16, #tpu.memory_space<vmem>>, vector<32x12xbf16>
    %cst_14 = arith.constant dense<0.000000e+00> : vector<2x12xf32>
    %18 = tpu.matmul %16, %17, %cst_14 {dimension_numbers = #tpu.dot_dimension_numbers<[1], [0], [0], [1], [0, 0, 1, 1], [], []>} : vector<2x32xbf16>, vector<32x12xbf16>, vector<2x12xf32> -> vector<2x12xf32>
    %c0_15 = arith.constant 0 : index
    %c0_16 = arith.constant 0 : index
    %19 = vector.load %arg7[%c0_15, %c0_16] : memref<1x12xf32, #tpu.memory_space<vmem>>, vector<1x12xf32>
    %20 = vector.broadcast %19 : vector<1x12xf32> to vector<2x12xf32>
    %21 = arith.addf %18, %20 : vector<2x12xf32>
    %22 = vector.extract_strided_slice %21 {offsets = [0, 0], sizes = [2, 6], strides = [1, 1]} : vector<2x12xf32> to vector<2x6xf32>
    %23 = vector.extract_strided_slice %21 {offsets = [0, 6], sizes = [2, 6], strides = [1, 1]} : vector<2x12xf32> to vector<2x6xf32>
    %cst_17 = arith.constant -2.000000e+01 : f32
    %cst_18 = arith.constant 2.000000e+00 : f32
    %24 = vector.broadcast %cst_17 : f32 to vector<2x6xf32>
    %25 = arith.maximumf %24, %23 : vector<2x6xf32>
    %26 = vector.broadcast %cst_18 : f32 to vector<2x6xf32>
    %27 = arith.minimumf %26, %25 : vector<2x6xf32>
    %28 = math.exp %27 : vector<2x6xf32>
    %c0_19 = arith.constant 0 : index
    %c0_20 = arith.constant 0 : index
    %29 = vector.load %arg8[%c0_19, %c0_20] : memref<2x6xf32, #tpu.memory_space<vmem>>, vector<2x6xf32>
    %30 = arith.mulf %28, %29 : vector<2x6xf32>
    %31 = arith.addf %22, %30 : vector<2x6xf32>
    %32 = math.tanh %31 : vector<2x6xf32>
    %cst_21 = arith.constant -5.000000e-01 : f32
    %33 = vector.broadcast %cst_21 : f32 to vector<2x6xf32>
    %34 = arith.mulf %33, %29 : vector<2x6xf32>
    %35 = arith.mulf %34, %29 : vector<2x6xf32>
    %36 = arith.subf %35, %27 : vector<2x6xf32>
    %cst_22 = arith.constant 6.28318548 : f32
    %37 = math.log %cst_22 : f32
    %cst_23 = arith.constant 5.000000e-01 : f32
    %38 = arith.mulf %cst_23, %37 : f32
    %39 = vector.broadcast %38 : f32 to vector<2x6xf32>
    %40 = arith.subf %36, %39 : vector<2x6xf32>
    %cst_24 = arith.constant dense<0.000000e+00> : vector<2xf32>
    %41 = vector.multi_reduction <add>, %40, %cst_24 [1] : vector<2x6xf32> to vector<2xf32>
    %42 = vector.shape_cast %41 : vector<2xf32> to vector<2x1xf32>
    %cst_25 = arith.constant -2.000000e+00 : f32
    %43 = vector.broadcast %cst_25 : f32 to vector<2x6xf32>
    %44 = arith.mulf %43, %31 : vector<2x6xf32>
    %cst_26 = arith.constant 0.000000e+00 : f32
    %45 = vector.broadcast %cst_26 : f32 to vector<2x6xf32>
    %46 = arith.maximumf %44, %45 : vector<2x6xf32>
    %47 = math.absf %44 : vector<2x6xf32>
    %cst_27 = arith.constant 0.000000e+00 : f32
    %48 = vector.broadcast %cst_27 : f32 to vector<2x6xf32>
    %49 = arith.subf %48, %47 : vector<2x6xf32>
    %50 = math.exp %49 : vector<2x6xf32>
    %51 = math.log1p %50 : vector<2x6xf32>
    %52 = arith.addf %46, %51 : vector<2x6xf32>
    %cst_28 = arith.constant 2.000000e+00 : f32
    %53 = math.log %cst_28 : f32
    %54 = vector.broadcast %53 : f32 to vector<2x6xf32>
    %55 = arith.subf %54, %31 : vector<2x6xf32>
    %56 = arith.subf %55, %52 : vector<2x6xf32>
    %cst_29 = arith.constant 2.000000e+00 : f32
    %57 = vector.broadcast %cst_29 : f32 to vector<2x6xf32>
    %58 = arith.mulf %57, %56 : vector<2x6xf32>
    %cst_30 = arith.constant dense<0.000000e+00> : vector<2xf32>
    %59 = vector.multi_reduction <add>, %58, %cst_30 [1] : vector<2x6xf32> to vector<2xf32>
    %60 = vector.shape_cast %59 : vector<2xf32> to vector<2x1xf32>
    %61 = arith.subf %42, %60 : vector<2x1xf32>
    %cst_31 = arith.constant 0.000000e+00 : f32
    %62 = vector.broadcast %cst_31 : f32 to vector<2x121xf32>
    %63 = tpu.concatenate %32, %61, %62 in 1 : vector<2x6xf32>, vector<2x1xf32>, vector<2x121xf32> -> vector<2x128xf32>
    %c0_32 = arith.constant 0 : index
    %c0_33 = arith.constant 0 : index
    %64 = vector.load %arg9[%c0_32, %c0_33] : memref<2x128xf32, #tpu.memory_space<vmem>>, vector<2x128xf32>
    tpu.vector_store %arg9[%c0_32, %c0_33], %63 {strides = array<i32>} : memref<2x128xf32, #tpu.memory_space<vmem>>, vector<2x128xf32>,
    return
  }
  func.func @transform_0(%arg0: i32) -> (i32, i32) {
    %c0_i32 = arith.constant 0 : i32
    %c0_i32_0 = arith.constant 0 : i32
    return %arg0, %c0_i32 : i32, i32
  }
  func.func @transform_1(%arg0: i32) -> (i32, i32) {
    %c0_i32 = arith.constant 0 : i32
    %c0_i32_0 = arith.constant 0 : i32
    %c0_i32_1 = arith.constant 0 : i32
    return %c0_i32, %c0_i32_0 : i32, i32
  }
  func.func @transform_2(%arg0: i32) -> (i32, i32) {
    %c0_i32 = arith.constant 0 : i32
    %c0_i32_0 = arith.constant 0 : i32
    %c0_i32_1 = arith.constant 0 : i32
    return %c0_i32, %c0_i32_0 : i32, i32
  }
  func.func @transform_3(%arg0: i32) -> (i32, i32) {
    %c0_i32 = arith.constant 0 : i32
    %c0_i32_0 = arith.constant 0 : i32
    %c0_i32_1 = arith.constant 0 : i32
    return %c0_i32, %c0_i32_0 : i32, i32
  }
  func.func @transform_4(%arg0: i32) -> (i32, i32) {
    %c0_i32 = arith.constant 0 : i32
    %c0_i32_0 = arith.constant 0 : i32
    %c0_i32_1 = arith.constant 0 : i32
    return %c0_i32, %c0_i32_0 : i32, i32
  }
  func.func @transform_5(%arg0: i32) -> (i32, i32) {
    %c0_i32 = arith.constant 0 : i32
    %c0_i32_0 = arith.constant 0 : i32
    %c0_i32_1 = arith.constant 0 : i32
    return %c0_i32, %c0_i32_0 : i32, i32
  }
  func.func @transform_6(%arg0: i32) -> (i32, i32) {
    %c0_i32 = arith.constant 0 : i32
    %c0_i32_0 = arith.constant 0 : i32
    %c0_i32_1 = arith.constant 0 : i32
    return %c0_i32, %c0_i32_0 : i32, i32
  }
  func.func @transform_7(%arg0: i32) -> (i32, i32) {
    %c0_i32 = arith.constant 0 : i32
    %c0_i32_0 = arith.constant 0 : i32
    return %arg0, %c0_i32 : i32, i32
  }
  func.func @transform_8(%arg0: i32) -> (i32, i32) {
    %c0_i32 = arith.constant 0 : i32
    %c0_i32_0 = arith.constant 0 : i32
    return %arg0, %c0_i32 : i32, i32
  }
}

</mosaic_0001>

<llo_original>
// kernel: actor_forward.4
$region0: #{actor_forward.4}
  #allocation0 [shape = 'u32[]', space=smem, size = 0x4, offset = 0x4, fixed_abs, tag = 'smem constant byte address 0x4 - core index']
  #allocation1 [shape = 'u32[144,128]{1,0:T(1,128)}', space=vmem, size = 0x12000, scoped, tag = 'internal scratch']
  %s0 = inlined_call_operand.vmem [shape: bf16[800,256], index: 0, kind: input, shape index: {}]
  %s1 = inlined_call_operand.vmem [shape: bf16[256,32], index: 1, kind: input, shape index: {}]
  %s2 = inlined_call_operand.vmem [shape: f32[1,32], index: 2, kind: input, shape index: {}]
  %s3 = inlined_call_operand.vmem [shape: bf16[800,32], index: 3, kind: output, shape index: {}]
  %s4 = sld [smem:[#allocation0]]
  $region22: #{actor_forward.4} parent=0
    _
  %s6 = ssub.s32 1, %s4
  %s7 = scalar_select 0, %s6, %s4
  // Predicated region
  $region2: #{actor_forward.4} parent=0 // pred_check
    _
  $region3: #{actor_forward.4} parent=0 // pred_check_branch
    %9 = sbr.rel (0) target = $region5
  $region4: #{actor_forward.4} parent=0 // pred_region
    _
  $region5: #{actor_forward.4} parent=0 // pred_fallthru
    _
  // Predicated region
  $region6: #{actor_forward.4} parent=0 // pred_check
    _
  $region7: #{actor_forward.4} parent=0 // pred_check_branch
    %11 = sbr.rel (0) target = $region9
  $region8: #{actor_forward.4} parent=0 // pred_region
    _
  $region9: #{actor_forward.4} parent=0 // pred_fallthru
    _
  // Predicated region
  $region10: #{actor_forward.4} parent=0 // pred_check
    _
  $region11: #{actor_forward.4} parent=0 // pred_check_branch
    %13 = sbr.rel (0) target = $region13
  $region12: #{actor_forward.4} parent=0 // pred_region
    _
  $region13: #{actor_forward.4} parent=0 // pred_fallthru
    _
  %v15 = vld [vmem:[%s0] sm:$0xff]
  %v16 = vld [vmem:[%s0 + $0x8] sm:$0xff]
  %v17 = vld [vmem:[%s0 + $0x10] sm:$0xff]
  %v18 = vld [vmem:[%s0 + $0x18] sm:$0xff]
  %v19 = vld [vmem:[%s0 + $0x20] sm:$0xff]
  %v20 = vld [vmem:[%s0 + $0x28] sm:$0xff]
  %v21 = vld [vmem:[%s0 + $0x30] sm:$0xff]
  %v22 = vld [vmem:[%s0 + $0x38] sm:$0xff]
  %v23 = vld [vmem:[%s0 + $0x40] sm:$0xff]
  %v24 = vld [vmem:[%s0 + $0x48] sm:$0xff]
  %v25 = vld [vmem:[%s0 + $0x50] sm:$0xff]
  %v26 = vld [vmem:[%s0 + $0x58] sm:$0xff]
  %v27 = vld [vmem:[%s0 + $0x60] sm:$0xff]
  %v28 = vld [vmem:[%s0 + $0x68] sm:$0xff]
  %v29 = vld [vmem:[%s0 + $0x70] sm:$0xff]
  %v30 = vld [vmem:[%s0 + $0x78] sm:$0xff]
  %v31 = vld [vmem:[%s0 + $0x80] sm:$0xff]
  %v32 = vld [vmem:[%s0 + $0x88] sm:$0xff]
  %v33 = vld [vmem:[%s0 + $0x90] sm:$0xff]
  %v34 = vld [vmem:[%s0 + $0x98] sm:$0xff]
  %v35 = vld [vmem:[%s0 + $0xa0] sm:$0xff]
  %v36 = vld [vmem:[%s0 + $0xa8] sm:$0xff]
  %v37 = vld [vmem:[%s0 + $0xb0] sm:$0xff]
  %v38 = vld [vmem:[%s0 + $0xb8] sm:$0xff]
  %v39 = vld [vmem:[%s0 + $0xc0] sm:$0xff]
  %v40 = vld [vmem:[%s0 + $0xc8] sm:$0xff]
  %v41 = vld [vmem:[%s0 + $0xd0] sm:$0xff]
  %v42 = vld [vmem:[%s0 + $0xd8] sm:$0xff]
  %v43 = vld [vmem:[%s0 + $0xe0] sm:$0xff]
  %v44 = vld [vmem:[%s0 + $0xe8] sm:$0xff]
  %v45 = vld [vmem:[%s0 + $0xf0] sm:$0xff]
  %v46 = vld [vmem:[%s0 + $0xf8] sm:$0xff]
  %v47 = vld [vmem:[%s0 + $0x100] sm:$0xff]
  %v48 = vld [vmem:[%s0 + $0x108] sm:$0xff]
  %v49 = vld [vmem:[%s0 + $0x110] sm:$0xff]
  %v50 = vld [vmem:[%s0 + $0x118] sm:$0xff]
  %v51 = vld [vmem:[%s0 + $0x120] sm:$0xff]
  %v52 = vld [vmem:[%s0 + $0x128] sm:$0xff]
  %v53 = vld [vmem:[%s0 + $0x130] sm:$0xff]
  %v54 = vld [vmem:[%s0 + $0x138] sm:$0xff]
  %v55 = vld [vmem:[%s0 + $0x140] sm:$0xff]
  %v56 = vld [vmem:[%s0 + $0x148] sm:$0xff]
  %v57 = vld [vmem:[%s0 + $0x150] sm:$0xff]
  %v58 = vld [vmem:[%s0 + $0x158] sm:$0xff]
  %v59 = vld [vmem:[%s0 + $0x160] sm:$0xff]
  %v60 = vld [vmem:[%s0 + $0x168] sm:$0xff]
  %v61 = vld [vmem:[%s0 + $0x170] sm:$0xff]
  %v62 = vld [vmem:[%s0 + $0x178] sm:$0xff]
  %v63 = vld [vmem:[%s0 + $0x180] sm:$0xff]
  %v64 = vld [vmem:[%s0 + $0x188] sm:$0xff]
  %v65 = vld [vmem:[%s0 + $0x190] sm:$0xff]
  %v66 = vld [vmem:[%s0 + $0x198] sm:$0xff]
  %v67 = vld [vmem:[%s0 + $0x1a0] sm:$0xff]
  %v68 = vld [vmem:[%s0 + $0x1a8] sm:$0xff]
  %v69 = vld [vmem:[%s0 + $0x1b0] sm:$0xff]
  %v70 = vld [vmem:[%s0 + $0x1b8] sm:$0xff]
  %v71 = vld [vmem:[%s0 + $0x1c0] sm:$0xff]
  %v72 = vld [vmem:[%s0 + $0x1c8] sm:$0xff]
  %v73 = vld [vmem:[%s0 + $0x1d0] sm:$0xff]
  %v74 = vld [vmem:[%s0 + $0x1d8] sm:$0xff]
  %v75 = vld [vmem:[%s0 + $0x1e0] sm:$0xff]
  %v76 = vld [vmem:[%s0 + $0x1e8] sm:$0xff]
  %v77 = vld [vmem:[%s0 + $0x1f0] sm:$0xff]
  %v78 = vld [vmem:[%s0 + $0x1f8] sm:$0xff]
  %v79 = vld [vmem:[%s0 + $0x200] sm:$0xff]
  %v80 = vld [vmem:[%s0 + $0x208] sm:$0xff]
  %v81 = vld [vmem:[%s0 + $0x210] sm:$0xff]
  %v82 = vld [vmem:[%s0 + $0x218] sm:$0xff]
  %v83 = vld [vmem:[%s0 + $0x220] sm:$0xff]
  %v84 = vld [vmem:[%s0 + $0x228] sm:$0xff]
  %v85 = vld [vmem:[%s0 + $0x230] sm:$0xff]
  %v86 = vld [vmem:[%s0 + $0x238] sm:$0xff]
  %v87 = vld [vmem:[%s0 + $0x240] sm:$0xff]
  %v88 = vld [vmem:[%s0 + $0x248] sm:$0xff]
  %v89 = vld [vmem:[%s0 + $0x250] sm:$0xff]
  %v90 = vld [vmem:[%s0 + $0x258] sm:$0xff]
  %v91 = vld [vmem:[%s0 + $0x260] sm:$0xff]
  %v92 = vld [vmem:[%s0 + $0x268] sm:$0xff]
  %v93 = vld [vmem:[%s0 + $0x270] sm:$0xff]
  %v94 = vld [vmem:[%s0 + $0x278] sm:$0xff]
  %v95 = vld [vmem:[%s0 + $0x280] sm:$0xff]
  %v96 = vld [vmem:[%s0 + $0x288] sm:$0xff]
  %v97 = vld [vmem:[%s0 + $0x290] sm:$0xff]
  %v98 = vld [vmem:[%s0 + $0x298] sm:$0xff]
  %v99 = vld [vmem:[%s0 + $0x2a0] sm:$0xff]
  %v100 = vld [vmem:[%s0 + $0x2a8] sm:$0xff]
  %v101 = vld [vmem:[%s0 + $0x2b0] sm:$0xff]
  %v102 = vld [vmem:[%s0 + $0x2b8] sm:$0xff]
  %v103 = vld [vmem:[%s0 + $0x2c0] sm:$0xff]
  %v104 = vld [vmem:[%s0 + $0x2c8] sm:$0xff]
  %v105 = vld [vmem:[%s0 + $0x2d0] sm:$0xff]
  %v106 = vld [vmem:[%s0 + $0x2d8] sm:$0xff]
  %v107 = vld [vmem:[%s0 + $0x2e0] sm:$0xff]
  %v108 = vld [vmem:[%s0 + $0x2e8] sm:$0xff]
  %v109 = vld [vmem:[%s0 + $0x2f0] sm:$0xff]
  %v110 = vld [vmem:[%s0 + $0x2f8] sm:$0xff]
  %v111 = vld [vmem:[%s0 + $0x300] sm:$0xff]
  %v112 = vld [vmem:[%s0 + $0x308] sm:$0xff]
  %v113 = vld [vmem:[%s0 + $0x310] sm:$0xff]
  %v114 = vld [vmem:[%s0 + $0x318] sm:$0xff]
  %v115 = vld [vmem:[%s1] sm:$0xf]
  %v116 = vld [vmem:[%s1 + $0x4] sm:$0xf]
  %v117 = vld [vmem:[%s1 + $0x8] sm:$0xf]
  %v118 = vld [vmem:[%s1 + $0xc] sm:$0xf]
  %v119 = vld [vmem:[%s1 + $0x10] sm:$0xf]
  %v120 = vld [vmem:[%s1 + $0x14] sm:$0xf]
  %v121 = vld [vmem:[%s1 + $0x18] sm:$0xf]
  %v122 = vld [vmem:[%s1 + $0x1c] sm:$0xf]
  %v123 = vld [vmem:[%s1 + $0x20] sm:$0xf]
  %v124 = vld [vmem:[%s1 + $0x24] sm:$0xf]
  %v125 = vld [vmem:[%s1 + $0x28] sm:$0xf]
  %v126 = vld [vmem:[%s1 + $0x2c] sm:$0xf]
  %v127 = vld [vmem:[%s1 + $0x30] sm:$0xf]
  %v128 = vld [vmem:[%s1 + $0x34] sm:$0xf]
  %v129 = vld [vmem:[%s1 + $0x38] sm:$0xf]
  %v130 = vld [vmem:[%s1 + $0x3c] sm:$0xf]
  %v131 = vld [vmem:[%s1 + $0x40] sm:$0xf]
  %v132 = vld [vmem:[%s1 + $0x44] sm:$0xf]
  %v133 = vld [vmem:[%s1 + $0x48] sm:$0xf]
  %v134 = vld [vmem:[%s1 + $0x4c] sm:$0xf]
  %v135 = vld [vmem:[%s1 + $0x50] sm:$0xf]
  %v136 = vld [vmem:[%s1 + $0x54] sm:$0xf]
  %v137 = vld [vmem:[%s1 + $0x58] sm:$0xf]
  %v138 = vld [vmem:[%s1 + $0x5c] sm:$0xf]
  %v139 = vld [vmem:[%s1 + $0x60] sm:$0xf]
  %v140 = vld [vmem:[%s1 + $0x64] sm:$0xf]
  %v141 = vld [vmem:[%s1 + $0x68] sm:$0xf]
  %v142 = vld [vmem:[%s1 + $0x6c] sm:$0xf]
  %v143 = vld [vmem:[%s1 + $0x70] sm:$0xf]
  %v144 = vld [vmem:[%s1 + $0x74] sm:$0xf]
  %v145 = vld [vmem:[%s1 + $0x78] sm:$0xf]
  %v146 = vld [vmem:[%s1 + $0x7c] sm:$0xf]
  %v147 = vld [vmem:[%s2] sm:$0x1]
  %v149 = vlaneseq
  %v150 = vshrl.u32 %v149, 7
  %v151 = vsub.s32 0, %v150
  %v152 = vrot.slane %v147, %v151
  %v254 = vunpack.c.l.b16 %v15
  %v255 = vunpack.c.h.b16 %v15
  %v256 = vunpack.c.l.b16 %v16
  %v257 = vunpack.c.h.b16 %v16
  %v258 = vunpack.c.l.b16 %v17
  %v259 = vunpack.c.h.b16 %v17
  %v260 = vunpack.c.l.b16 %v18
  %v261 = vunpack.c.h.b16 %v18
  %v262 = vunpack.c.l.b16 %v19
  %v263 = vunpack.c.h.b16 %v19
  %v264 = vunpack.c.l.b16 %v20
  %v265 = vunpack.c.h.b16 %v20
  %v266 = vunpack.c.l.b16 %v21
  %v267 = vunpack.c.h.b16 %v21
  %v268 = vunpack.c.l.b16 %v22
  %v269 = vunpack.c.h.b16 %v22
  %v270 = vunpack.c.l.b16 %v23
  %v271 = vunpack.c.h.b16 %v23
  %v272 = vunpack.c.l.b16 %v24
  %v273 = vunpack.c.h.b16 %v24
  %v274 = vunpack.c.l.b16 %v25
  %v275 = vunpack.c.h.b16 %v25
  %v276 = vunpack.c.l.b16 %v26
  %v277 = vunpack.c.h.b16 %v26
  %v278 = vunpack.c.l.b16 %v27
  %v279 = vunpack.c.h.b16 %v27
  %v280 = vunpack.c.l.b16 %v28
  %v281 = vunpack.c.h.b16 %v28
  %v282 = vunpack.c.l.b16 %v29
  %v283 = vunpack.c.h.b16 %v29
  %v284 = vunpack.c.l.b16 %v30
  %v285 = vunpack.c.h.b16 %v30
  %v286 = vunpack.c.l.b16 %v31
  %v287 = vunpack.c.h.b16 %v31
  %v288 = vunpack.c.l.b16 %v32
  %v289 = vunpack.c.h.b16 %v32
  %v290 = vunpack.c.l.b16 %v33
  %v291 = vunpack.c.h.b16 %v33
  %v292 = vunpack.c.l.b16 %v34
  %v293 = vunpack.c.h.b16 %v34
  %v294 = vunpack.c.l.b16 %v35
  %v295 = vunpack.c.h.b16 %v35
  %v296 = vunpack.c.l.b16 %v36
  %v297 = vunpack.c.h.b16 %v36
  %v298 = vunpack.c.l.b16 %v37
  %v299 = vunpack.c.h.b16 %v37
  %v300 = vunpack.c.l.b16 %v38
  %v301 = vunpack.c.h.b16 %v38
  %v302 = vunpack.c.l.b16 %v39
  %v303 = vunpack.c.h.b16 %v39
  %v304 = vunpack.c.l.b16 %v40
  %v305 = vunpack.c.h.b16 %v40
  %v306 = vunpack.c.l.b16 %v41
  %v307 = vunpack.c.h.b16 %v41
  %v308 = vunpack.c.l.b16 %v42
  %v309 = vunpack.c.h.b16 %v42
  %v310 = vunpack.c.l.b16 %v43
  %v311 = vunpack.c.h.b16 %v43
  %v312 = vunpack.c.l.b16 %v44
  %v313 = vunpack.c.h.b16 %v44
  %v314 = vunpack.c.l.b16 %v45
  %v315 = vunpack.c.h.b16 %v45
  %v316 = vunpack.c.l.b16 %v46
  %v317 = vunpack.c.h.b16 %v46
  %v318 = vunpack.c.l.b16 %v47
  %v319 = vunpack.c.h.b16 %v47
  %v320 = vunpack.c.l.b16 %v48
  %v321 = vunpack.c.h.b16 %v48
  %v322 = vunpack.c.l.b16 %v49
  %v323 = vunpack.c.h.b16 %v49
  %v324 = vunpack.c.l.b16 %v50
  %v325 = vunpack.c.h.b16 %v50
  %v326 = vunpack.c.l.b16 %v51
  %v327 = vunpack.c.h.b16 %v51
  %v328 = vunpack.c.l.b16 %v52
  %v329 = vunpack.c.h.b16 %v52
  %v330 = vunpack.c.l.b16 %v53
  %v331 = vunpack.c.h.b16 %v53
  %v332 = vunpack.c.l.b16 %v54
  %v333 = vunpack.c.h.b16 %v54
  %v334 = vunpack.c.l.b16 %v55
  %v335 = vunpack.c.h.b16 %v55
  %v336 = vunpack.c.l.b16 %v56
  %v337 = vunpack.c.h.b16 %v56
  %v338 = vunpack.c.l.b16 %v57
  %v339 = vunpack.c.h.b16 %v57
  %v340 = vunpack.c.l.b16 %v58
  %v341 = vunpack.c.h.b16 %v58
  %v342 = vunpack.c.l.b16 %v59
  %v343 = vunpack.c.h.b16 %v59
  %v344 = vunpack.c.l.b16 %v60
  %v345 = vunpack.c.h.b16 %v60
  %v346 = vunpack.c.l.b16 %v61
  %v347 = vunpack.c.h.b16 %v61
  %v348 = vunpack.c.l.b16 %v62
  %v349 = vunpack.c.h.b16 %v62
  %v350 = vunpack.c.l.b16 %v63
  %v351 = vunpack.c.h.b16 %v63
  %v352 = vunpack.c.l.b16 %v64
  %v353 = vunpack.c.h.b16 %v64
  %v354 = vunpack.c.l.b16 %v65
  %v355 = vunpack.c.h.b16 %v65
  %v356 = vunpack.c.l.b16 %v66
  %v357 = vunpack.c.h.b16 %v66
  %v358 = vunpack.c.l.b16 %v67
  %v359 = vunpack.c.h.b16 %v67
  %v360 = vunpack.c.l.b16 %v68
  %v361 = vunpack.c.h.b16 %v68
  %v362 = vunpack.c.l.b16 %v69
  %v363 = vunpack.c.h.b16 %v69
  %v364 = vunpack.c.l.b16 %v70
  %v365 = vunpack.c.h.b16 %v70
  %v366 = vunpack.c.l.b16 %v71
  %v367 = vunpack.c.h.b16 %v71
  %v368 = vunpack.c.l.b16 %v72
  %v369 = vunpack.c.h.b16 %v72
  %v370 = vunpack.c.l.b16 %v73
  %v371 = vunpack.c.h.b16 %v73
  %v372 = vunpack.c.l.b16 %v74
  %v373 = vunpack.c.h.b16 %v74
  %v374 = vunpack.c.l.b16 %v75
  %v375 = vunpack.c.h.b16 %v75
  %v376 = vunpack.c.l.b16 %v76
  %v377 = vunpack.c.h.b16 %v76
  %v378 = vunpack.c.l.b16 %v77
  %v379 = vunpack.c.h.b16 %v77
  %v380 = vunpack.c.l.b16 %v78
  %v381 = vunpack.c.h.b16 %v78
  %v382 = vunpack.c.l.b16 %v79
  %v383 = vunpack.c.h.b16 %v79
  %v384 = vunpack.c.l.b16 %v80
  %v385 = vunpack.c.h.b16 %v80
  %v386 = vunpack.c.l.b16 %v81
  %v387 = vunpack.c.h.b16 %v81
  %v388 = vunpack.c.l.b16 %v82
  %v389 = vunpack.c.h.b16 %v82
  %v390 = vunpack.c.l.b16 %v83
  %v391 = vunpack.c.h.b16 %v83
  %v392 = vunpack.c.l.b16 %v84
  %v393 = vunpack.c.h.b16 %v84
  %v394 = vunpack.c.l.b16 %v85
  %v395 = vunpack.c.h.b16 %v85
  %v396 = vunpack.c.l.b16 %v86
  %v397 = vunpack.c.h.b16 %v86
  %v398 = vunpack.c.l.b16 %v87
  %v399 = vunpack.c.h.b16 %v87
  %v400 = vunpack.c.l.b16 %v88
  %v401 = vunpack.c.h.b16 %v88
  %v402 = vunpack.c.l.b16 %v89
  %v403 = vunpack.c.h.b16 %v89
  %v404 = vunpack.c.l.b16 %v90
  %v405 = vunpack.c.h.b16 %v90
  %v406 = vunpack.c.l.b16 %v91
  %v407 = vunpack.c.h.b16 %v91
  %v408 = vunpack.c.l.b16 %v92
  %v409 = vunpack.c.h.b16 %v92
  %v410 = vunpack.c.l.b16 %v93
  %v411 = vunpack.c.h.b16 %v93
  %v412 = vunpack.c.l.b16 %v94
  %v413 = vunpack.c.h.b16 %v94
  %v414 = vunpack.c.l.b16 %v95
  %v415 = vunpack.c.h.b16 %v95
  %v416 = vunpack.c.l.b16 %v96
  %v417 = vunpack.c.h.b16 %v96
  %v418 = vunpack.c.l.b16 %v97
  %v419 = vunpack.c.h.b16 %v97
  %v420 = vunpack.c.l.b16 %v98
  %v421 = vunpack.c.h.b16 %v98
  %v422 = vunpack.c.l.b16 %v99
  %v423 = vunpack.c.h.b16 %v99
  %v424 = vunpack.c.l.b16 %v100
  %v425 = vunpack.c.h.b16 %v100
  %v426 = vunpack.c.l.b16 %v101
  %v427 = vunpack.c.h.b16 %v101
  %v428 = vunpack.c.l.b16 %v102
  %v429 = vunpack.c.h.b16 %v102
  %v430 = vunpack.c.l.b16 %v103
  %v431 = vunpack.c.h.b16 %v103
  %v432 = vunpack.c.l.b16 %v104
  %v433 = vunpack.c.h.b16 %v104
  %v434 = vunpack.c.l.b16 %v105
  %v435 = vunpack.c.h.b16 %v105
  %v436 = vunpack.c.l.b16 %v106
  %v437 = vunpack.c.h.b16 %v106
  %v438 = vunpack.c.l.b16 %v107
  %v439 = vunpack.c.h.b16 %v107
  %v440 = vunpack.c.l.b16 %v108
  %v441 = vunpack.c.h.b16 %v108
  %v442 = vunpack.c.l.b16 %v109
  %v443 = vunpack.c.h.b16 %v109
  %v444 = vunpack.c.l.b16 %v110
  %v445 = vunpack.c.h.b16 %v110
  %v446 = vunpack.c.l.b16 %v111
  %v447 = vunpack.c.h.b16 %v111
  %v448 = vunpack.c.l.b16 %v112
  %v449 = vunpack.c.h.b16 %v112
  %v450 = vunpack.c.l.b16 %v113
  %v451 = vunpack.c.h.b16 %v113
  %v452 = vunpack.c.l.b16 %v114
  %v453 = vunpack.c.h.b16 %v114
  %v454 = vpack.c.b16 %v256, %v254
  %v455 = vpack.c.b16 %v257, %v255
  %v456 = vpack.c.b16 %v260, %v258
  %v457 = vpack.c.b16 %v261, %v259
  %v458 = vpack.c.b16 %v264, %v262
  %v459 = vpack.c.b16 %v265, %v263
  %v460 = vpack.c.b16 %v268, %v266
  %v461 = vpack.c.b16 %v269, %v267
  %v462 = vpack.c.b16 %v272, %v270
  %v463 = vpack.c.b16 %v273, %v271
  %v464 = vpack.c.b16 %v276, %v274
  %v465 = vpack.c.b16 %v277, %v275
  %v466 = vpack.c.b16 %v280, %v278
  %v467 = vpack.c.b16 %v281, %v279
  %v468 = vpack.c.b16 %v284, %v282
  %v469 = vpack.c.b16 %v285, %v283
  %v470 = vpack.c.b16 %v288, %v286
  %v471 = vpack.c.b16 %v289, %v287
  %v472 = vpack.c.b16 %v292, %v290
  %v473 = vpack.c.b16 %v293, %v291
  %v474 = vpack.c.b16 %v296, %v294
  %v475 = vpack.c.b16 %v297, %v295
  %v476 = vpack.c.b16 %v300, %v298
  %v477 = vpack.c.b16 %v301, %v299
  %v478 = vpack.c.b16 %v304, %v302
  %v479 = vpack.c.b16 %v305, %v303
  %v480 = vpack.c.b16 %v308, %v306
  %v481 = vpack.c.b16 %v309, %v307
  %v482 = vpack.c.b16 %v312, %v310
  %v483 = vpack.c.b16 %v313, %v311
  %v484 = vpack.c.b16 %v316, %v314
  %v485 = vpack.c.b16 %v317, %v315
  %v486 = vpack.c.b16 %v320, %v318
  %v487 = vpack.c.b16 %v321, %v319
  %v488 = vpack.c.b16 %v324, %v322
  %v489 = vpack.c.b16 %v325, %v323
  %v490 = vpack.c.b16 %v328, %v326
  %v491 = vpack.c.b16 %v329, %v327
  %v492 = vpack.c.b16 %v332, %v330
  %v493 = vpack.c.b16 %v333, %v331
  %v494 = vpack.c.b16 %v336, %v334
  %v495 = vpack.c.b16 %v337, %v335
  %v496 = vpack.c.b16 %v340, %v338
  %v497 = vpack.c.b16 %v341, %v339
  %v498 = vpack.c.b16 %v344, %v342
  %v499 = vpack.c.b16 %v345, %v343
  %v500 = vpack.c.b16 %v348, %v346
  %v501 = vpack.c.b16 %v349, %v347
  %v502 = vpack.c.b16 %v352, %v350
  %v503 = vpack.c.b16 %v353, %v351
  %v504 = vpack.c.b16 %v356, %v354
  %v505 = vpack.c.b16 %v357, %v355
  %v506 = vpack.c.b16 %v360, %v358
  %v507 = vpack.c.b16 %v361, %v359
  %v508 = vpack.c.b16 %v364, %v362
  %v509 = vpack.c.b16 %v365, %v363
  %v510 = vpack.c.b16 %v368, %v366
  %v511 = vpack.c.b16 %v369, %v367
  %v512 = vpack.c.b16 %v372, %v370
  %v513 = vpack.c.b16 %v373, %v371
  %v514 = vpack.c.b16 %v376, %v374
  %v515 = vpack.c.b16 %v377, %v375
  %v516 = vpack.c.b16 %v380, %v378
  %v517 = vpack.c.b16 %v381, %v379
  %v518 = vpack.c.b16 %v384, %v382
  %v519 = vpack.c.b16 %v385, %v383
  %v520 = vpack.c.b16 %v388, %v386
  %v521 = vpack.c.b16 %v389, %v387
  %v522 = vpack.c.b16 %v392, %v390
  %v523 = vpack.c.b16 %v393, %v391
  %v524 = vpack.c.b16 %v396, %v394
  %v525 = vpack.c.b16 %v397, %v395
  %v526 = vpack.c.b16 %v400, %v398
  %v527 = vpack.c.b16 %v401, %v399
  %v528 = vpack.c.b16 %v404, %v402
  %v529 = vpack.c.b16 %v405, %v403
  %v530 = vpack.c.b16 %v408, %v406
  %v531 = vpack.c.b16 %v409, %v407
  %v532 = vpack.c.b16 %v412, %v410
  %v533 = vpack.c.b16 %v413, %v411
  %v534 = vpack.c.b16 %v416, %v414
  %v535 = vpack.c.b16 %v417, %v415
  %v536 = vpack.c.b16 %v420, %v418
  %v537 = vpack.c.b16 %v421, %v419
  %v538 = vpack.c.b16 %v424, %v422
  %v539 = vpack.c.b16 %v425, %v423
  %v540 = vpack.c.b16 %v428, %v426
  %v541 = vpack.c.b16 %v429, %v427
  %v542 = vpack.c.b16 %v432, %v430
  %v543 = vpack.c.b16 %v433, %v431
  %v544 = vpack.c.b16 %v436, %v434
  %v545 = vpack.c.b16 %v437, %v435
  %v546 = vpack.c.b16 %v440, %v438
  %v547 = vpack.c.b16 %v441, %v439
  %v548 = vpack.c.b16 %v444, %v442
  %v549 = vpack.c.b16 %v445, %v443
  %v550 = vpack.c.b16 %v448, %v446
  %v551 = vpack.c.b16 %v449, %v447
  %v552 = vpack.c.b16 %v452, %v450
  %v553 = vpack.c.b16 %v453, %v451
  %v686 = vunpack.c.l.b16 %v115
  %v687 = vunpack.c.l.b16 %v116
  %v688 = vunpack.c.l.b16 %v117
  %v689 = vunpack.c.l.b16 %v118
  %v690 = vunpack.c.l.b16 %v119
  %v691 = vunpack.c.l.b16 %v120
  %v692 = vunpack.c.l.b16 %v121
  %v693 = vunpack.c.l.b16 %v122
  %v694 = vunpack.c.l.b16 %v123
  %v695 = vunpack.c.l.b16 %v124
  %v696 = vunpack.c.l.b16 %v125
  %v697 = vunpack.c.l.b16 %v126
  %v698 = vunpack.c.l.b16 %v127
  %v699 = vunpack.c.l.b16 %v128
  %v700 = vunpack.c.l.b16 %v129
  %v701 = vunpack.c.l.b16 %v130
  %v702 = vunpack.c.l.b16 %v131
  %v703 = vunpack.c.l.b16 %v132
  %v704 = vunpack.c.l.b16 %v133
  %v705 = vunpack.c.l.b16 %v134
  %v706 = vunpack.c.l.b16 %v135
  %v707 = vunpack.c.l.b16 %v136
  %v708 = vunpack.c.l.b16 %v137
  %v709 = vunpack.c.l.b16 %v138
  %v710 = vunpack.c.l.b16 %v139
  %v711 = vunpack.c.l.b16 %v140
  %v712 = vunpack.c.l.b16 %v141
  %v713 = vunpack.c.l.b16 %v142
  %v714 = vunpack.c.l.b16 %v143
  %v715 = vunpack.c.l.b16 %v144
  %v716 = vunpack.c.l.b16 %v145
  %v717 = vunpack.c.l.b16 %v146
  %v718 = vpack.c.b16 %v687, %v686
  %v719 = vpack.c.b16 %v689, %v688
  %v720 = vpack.c.b16 %v691, %v690
  %v721 = vpack.c.b16 %v693, %v692
  %v722 = vpack.c.b16 %v695, %v694
  %v723 = vpack.c.b16 %v697, %v696
  %v724 = vpack.c.b16 %v699, %v698
  %v725 = vpack.c.b16 %v701, %v700
  %v726 = vpack.c.b16 %v703, %v702
  %v727 = vpack.c.b16 %v705, %v704
  %v728 = vpack.c.b16 %v707, %v706
  %v729 = vpack.c.b16 %v709, %v708
  %v730 = vpack.c.b16 %v711, %v710
  %v731 = vpack.c.b16 %v713, %v712
  %v732 = vpack.c.b16 %v715, %v714
  %v733 = vpack.c.b16 %v717, %v716
  %750 = vmatprep.subr.bf16.mxu0 0
  %751 = vmatpush1.bf16.msra.mxu0 %v718
  %752 = vmatprep.subr.bf16.mxu0 0
  %753 = vmatpush1.bf16.msra.mxu0 %v719
  %754 = vmatprep.subr.bf16.mxu0 0
  %755 = vmatpush1.bf16.msra.mxu0 %v720
  %756 = vmatprep.subr.bf16.mxu0 0
  %757 = vmatpush1.bf16.msra.mxu0 %v721
  %758 = vmatprep.subr.bf16.mxu0 0
  %759 = vmatpush1.bf16.msra.mxu0 %v722
  %760 = vmatprep.subr.bf16.mxu0 0
  %761 = vmatpush1.bf16.msra.mxu0 %v723
  %762 = vmatprep.subr.bf16.mxu0 0
  %763 = vmatpush1.bf16.msra.mxu0 %v724
  %764 = vmatprep.subr.bf16.mxu0 0
  %765 = vmatpush1.bf16.msra.mxu0 %v725
  %766 = vmatprep.subr.bf16.mxu0 0
  %767 = vmatpush1.bf16.msra.mxu0 %v726
  %768 = vmatprep.subr.bf16.mxu0 0
  %769 = vmatpush1.bf16.msra.mxu0 %v727
  %770 = vmatprep.subr.bf16.mxu0 0
  %771 = vmatpush1.bf16.msra.mxu0 %v728
  %772 = vmatprep.subr.bf16.mxu0 0
  %773 = vmatpush1.bf16.msra.mxu0 %v729
  %774 = vmatprep.subr.bf16.mxu0 0
  %775 = vmatpush1.bf16.msra.mxu0 %v730
  %776 = vmatprep.subr.bf16.mxu0 0
  %777 = vmatpush1.bf16.msra.mxu0 %v731
  %778 = vmatprep.subr.bf16.mxu0 0
  %779 = vmatpush1.bf16.msra.mxu0 %v732
  %780 = vmatprep.subr.bf16.mxu0 0
  %781 = vmatpush1.bf16.msra.mxu0 %v733
  %782 = vmatprep.mubr.bf16.mxu0 %v455
  %783 = vmatmul.mubr.bf16.gmra.mrb[0].mxu0 %v454
  %v784 = vpop.f32.mrb[0].mxu0
  %v785 = vadd.f32 %v152, %v784
  %v786 = vpop.f32.mrb[0].mxu0
  %v787 = vpop.f32.mrb[0].mxu0
  %v788 = vadd.f32 %v152, %v787
  %v789 = vpop.f32.mrb[0].mxu0
  %790 = vmatprep.mubr.bf16.mxu0 %v457
  %791 = vmatmul.mubr.bf16.gmra.mrb[0].mxu0 %v456
  %v792 = vpop.f32.mrb[0].mxu0
  %v793 = vadd.f32 %v152, %v792
  %v794 = vpop.f32.mrb[0].mxu0
  %v795 = vpop.f32.mrb[0].mxu0
  %v796 = vadd.f32 %v152, %v795
  %v797 = vpop.f32.mrb[0].mxu0
  %798 = vmatprep.mubr.bf16.mxu0 %v459
  %799 = vmatmul.mubr.bf16.gmra.mrb[0].mxu0 %v458
  %v800 = vpop.f32.mrb[0].mxu0
  %v801 = vadd.f32 %v152, %v800
  %v802 = vpop.f32.mrb[0].mxu0
  %v803 = vpop.f32.mrb[0].mxu0
  %v804 = vadd.f32 %v152, %v803
  %v805 = vpop.f32.mrb[0].mxu0
  %806 = vmatprep.mubr.bf16.mxu0 %v461
  %807 = vmatmul.mubr.bf16.gmra.mrb[0].mxu0 %v460
  %v808 = vpop.f32.mrb[0].mxu0
  %v809 = vadd.f32 %v152, %v808
  %v810 = vpop.f32.mrb[0].mxu0
  %v811 = vpop.f32.mrb[0].mxu0
  %v812 = vadd.f32 %v152, %v811
  %v813 = vpop.f32.mrb[0].mxu0
  %814 = vmatprep.mubr.bf16.mxu0 %v463
  %815 = vmatmul.mubr.bf16.gmra.mrb[0].mxu0 %v462
  %v816 = vpop.f32.mrb[0].mxu0
  %v817 = vadd.f32 %v152, %v816
  %v818 = vpop.f32.mrb[0].mxu0
  %v819 = vpop.f32.mrb[0].mxu0
  %v820 = vadd.f32 %v152, %v819
  %v821 = vpop.f32.mrb[0].mxu0
  %822 = vmatprep.mubr.bf16.mxu0 %v465
  %823 = vmatmul.mubr.bf16.gmra.mrb[0].mxu0 %v464
  %v824 = vpop.f32.mrb[0].mxu0
  %v825 = vadd.f32 %v152, %v824
  %v826 = vpop.f32.mrb[0].mxu0
  %v827 = vpop.f32.mrb[0].mxu0
  %v828 = vadd.f32 %v152, %v827
  %v829 = vpop.f32.mrb[0].mxu0
  %830 = vmatprep.mubr.bf16.mxu0 %v467
  %831 = vmatmul.mubr.bf16.gmra.mrb[0].mxu0 %v466
  %v832 = vpop.f32.mrb[0].mxu0
  %v833 = vadd.f32 %v152, %v832
  %v834 = vpop.f32.mrb[0].mxu0
  %v835 = vpop.f32.mrb[0].mxu0
  %v836 = vadd.f32 %v152, %v835
  %v837 = vpop.f32.mrb[0].mxu0
  %838 = vmatprep.mubr.bf16.mxu0 %v469
  %839 = vmatmul.mubr.bf16.gmra.mrb[0].mxu0 %v468
  %v840 = vpop.f32.mrb[0].mxu0
  %v841 = vadd.f32 %v152, %v840
  %v842 = vpop.f32.mrb[0].mxu0
  %v843 = vpop.f32.mrb[0].mxu0
  %v844 = vadd.f32 %v152, %v843
  %v845 = vpop.f32.mrb[0].mxu0
  %846 = vmatprep.mubr.bf16.mxu0 %v471
  %847 = vmatmul.mubr.bf16.gmra.mrb[0].mxu0 %v470
  %v848 = vpop.f32.mrb[0].mxu0
  %v849 = vadd.f32 %v152, %v848
  %v850 = vpop.f32.mrb[0].mxu0
  %v851 = vpop.f32.mrb[0].mxu0
  %v852 = vadd.f32 %v152, %v851
  %v853 = vpop.f32.mrb[0].mxu0
  %854 = vmatprep.mubr.bf16.mxu0 %v473
  %855 = vmatmul.mubr.bf16.gmra.mrb[0].mxu0 %v472
  %v856 = vpop.f32.mrb[0].mxu0
  %v857 = vadd.f32 %v152, %v856
  %v858 = vpop.f32.mrb[0].mxu0
  %v859 = vpop.f32.mrb[0].mxu0
  %v860 = vadd.f32 %v152, %v859
  %v861 = vpop.f32.mrb[0].mxu0
  %862 = vmatprep.mubr.bf16.mxu0 %v475
  %863 = vmatmul.mubr.bf16.gmra.mrb[0].mxu0 %v474
  %v864 = vpop.f32.mrb[0].mxu0
  %v865 = vadd.f32 %v152, %v864
  %v866 = vpop.f32.mrb[0].mxu0
  %v867 = vpop.f32.mrb[0].mxu0
  %v868 = vadd.f32 %v152, %v867
  %v869 = vpop.f32.mrb[0].mxu0
  %870 = vmatprep.mubr.bf16.mxu0 %v477
  %871 = vmatmul.mubr.bf16.gmra.mrb[0].mxu0 %v476
  %v872 = vpop.f32.mrb[0].mxu0
  %v873 = vadd.f32 %v152, %v872
  %v874 = vpop.f32.mrb[0].mxu0
  %v875 = vpop.f32.mrb[0].mxu0
  %v876 = vadd.f32 %v152, %v875
  %v877 = vpop.f32.mrb[0].mxu0
  %878 = vmatprep.mubr.bf16.mxu0 %v479
  %879 = vmatmul.mubr.bf16.gmra.mrb[0].mxu0 %v478
  %v880 = vpop.f32.mrb[0].mxu0
  %v881 = vadd.f32 %v152, %v880
  %v882 = vpop.f32.mrb[0].mxu0
  %v883 = vpop.f32.mrb[0].mxu0
  %v884 = vadd.f32 %v152, %v883
  %v885 = vpop.f32.mrb[0].mxu0
  %886 = vmatprep.mubr.bf16.mxu0 %v481
  %887 = vmatmul.mubr.bf16.gmra.mrb[0].mxu0 %v480
  %v888 = vpop.f32.mrb[0].mxu0
  %v889 = vadd.f32 %v152, %v888
  %v890 = vpop.f32.mrb[0].mxu0
  %v891 = vpop.f32.mrb[0].mxu0
  %v892 = vadd.f32 %v152, %v891
  %v893 = vpop.f32.mrb[0].mxu0
  %894 = vmatprep.mubr.bf16.mxu0 %v483
  %895 = vmatmul.mubr.bf16.gmra.mrb[0].mxu0 %v482
  %v896 = vpop.f32.mrb[0].mxu0
  %v897 = vadd.f32 %v152, %v896
  %v898 = vpop.f32.mrb[0].mxu0
  %v899 = vpop.f32.mrb[0].mxu0
  %v900 = vadd.f32 %v152, %v899
  %v901 = vpop.f32.mrb[0].mxu0
  %902 = vmatprep.mubr.bf16.mxu0 %v485
  %903 = vmatmul.mubr.bf16.gmra.mrb[0].mxu0 %v484
  %v904 = vpop.f32.mrb[0].mxu0
  %v905 = vadd.f32 %v152, %v904
  %v906 = vpop.f32.mrb[0].mxu0
  %v907 = vpop.f32.mrb[0].mxu0
  %v908 = vadd.f32 %v152, %v907
  %v909 = vpop.f32.mrb[0].mxu0
  %910 = vmatprep.mubr.bf16.mxu0 %v487
  %911 = vmatmul.mubr.bf16.gmra.mrb[0].mxu0 %v486
  %v912 = vpop.f32.mrb[0].mxu0
  %v913 = vadd.f32 %v152, %v912
  %v914 = vpop.f32.mrb[0].mxu0
  %v915 = vpop.f32.mrb[0].mxu0
  %v916 = vadd.f32 %v152, %v915
  %v917 = vpop.f32.mrb[0].mxu0
  %918 = vmatprep.mubr.bf16.mxu0 %v489
  %919 = vmatmul.mubr.bf16.gmra.mrb[0].mxu0 %v488
  %v920 = vpop.f32.mrb[0].mxu0
  %v921 = vadd.f32 %v152, %v920
  %v922 = vpop.f32.mrb[0].mxu0
  %v923 = vpop.f32.mrb[0].mxu0
  %v924 = vadd.f32 %v152, %v923
  %v925 = vpop.f32.mrb[0].mxu0
  %926 = vmatprep.mubr.bf16.mxu0 %v491
  %927 = vmatmul.mubr.bf16.gmra.mrb[0].mxu0 %v490
  %v928 = vpop.f32.mrb[0].mxu0
  %v929 = vadd.f32 %v152, %v928
  %v930 = vpop.f32.mrb[0].mxu0
  %v931 = vpop.f32.mrb[0].mxu0
  %v932 = vadd.f32 %v152, %v931
  %v933 = vpop.f32.mrb[0].mxu0
  %934 = vmatprep.mubr.bf16.mxu0 %v493
  %935 = vmatmul.mubr.bf16.gmra.mrb[0].mxu0 %v492
  %v936 = vpop.f32.mrb[0].mxu0
  %v937 = vadd.f32 %v152, %v936
  %v938 = vpop.f32.mrb[0].mxu0
  %v939 = vpop.f32.mrb[0].mxu0
  %v940 = vadd.f32 %v152, %v939
  %v941 = vpop.f32.mrb[0].mxu0
  %942 = vmatprep.mubr.bf16.mxu0 %v495
  %943 = vmatmul.mubr.bf16.gmra.mrb[0].mxu0 %v494
  %v944 = vpop.f32.mrb[0].mxu0
  %v945 = vadd.f32 %v152, %v944
  %v946 = vpop.f32.mrb[0].mxu0
  %v947 = vpop.f32.mrb[0].mxu0
  %v948 = vadd.f32 %v152, %v947
  %v949 = vpop.f32.mrb[0].mxu0
  %950 = vmatprep.mubr.bf16.mxu0 %v497
  %951 = vmatmul.mubr.bf16.gmra.mrb[0].mxu0 %v496
  %v952 = vpop.f32.mrb[0].mxu0
  %v953 = vadd.f32 %v152, %v952
  %v954 = vpop.f32.mrb[0].mxu0
  %v955 = vpop.f32.mrb[0].mxu0
  %v956 = vadd.f32 %v152, %v955
  %v957 = vpop.f32.mrb[0].mxu0
  %958 = vmatprep.mubr.bf16.mxu0 %v499
  %959 = vmatmul.mubr.bf16.gmra.mrb[0].mxu0 %v498
  %v960 = vpop.f32.mrb[0].mxu0
  %v961 = vadd.f32 %v152, %v960
  %v962 = vpop.f32.mrb[0].mxu0
  %v963 = vpop.f32.mrb[0].mxu0
  %v964 = vadd.f32 %v152, %v963
  %v965 = vpop.f32.mrb[0].mxu0
  %966 = vmatprep.mubr.bf16.mxu0 %v501
  %967 = vmatmul.mubr.bf16.gmra.mrb[0].mxu0 %v500
  %v968 = vpop.f32.mrb[0].mxu0
  %v969 = vadd.f32 %v152, %v968
  %v970 = vpop.f32.mrb[0].mxu0
  %v971 = vpop.f32.mrb[0].mxu0
  %v972 = vadd.f32 %v152, %v971
  %v973 = vpop.f32.mrb[0].mxu0
  %974 = vmatprep.mubr.bf16.mxu0 %v503
  %975 = vmatmul.mubr.bf16.gmra.mrb[0].mxu0 %v502
  %v976 = vpop.f32.mrb[0].mxu0
  %v977 = vadd.f32 %v152, %v976
  %v978 = vpop.f32.mrb[0].mxu0
  %v979 = vpop.f32.mrb[0].mxu0
  %v980 = vadd.f32 %v152, %v979
  %v981 = vpop.f32.mrb[0].mxu0
  %982 = vmatprep.mubr.bf16.mxu0 %v505
  %983 = vmatmul.mubr.bf16.gmra.mrb[0].mxu0 %v504
  %v984 = vpop.f32.mrb[0].mxu0
  %v985 = vadd.f32 %v152, %v984
  %v986 = vpop.f32.mrb[0].mxu0
  %v987 = vpop.f32.mrb[0].mxu0
  %v988 = vadd.f32 %v152, %v987
  %v989 = vpop.f32.mrb[0].mxu0
  %990 = vmatprep.mubr.bf16.mxu0 %v507
  %991 = vmatmul.mubr.bf16.gmra.mrb[0].mxu0 %v506
  %v992 = vpop.f32.mrb[0].mxu0
  %v993 = vadd.f32 %v152, %v992
  %v994 = vpop.f32.mrb[0].mxu0
  %v995 = vpop.f32.mrb[0].mxu0
  %v996 = vadd.f32 %v152, %v995
  %v997 = vpop.f32.mrb[0].mxu0
  %998 = vmatprep.mubr.bf16.mxu0 %v509
  %999 = vmatmul.mubr.bf16.gmra.mrb[0].mxu0 %v508
  %v1000 = vpop.f32.mrb[0].mxu0
  %v1001 = vadd.f32 %v152, %v1000
  %v1002 = vpop.f32.mrb[0].mxu0
  %v1003 = vpop.f32.mrb[0].mxu0
  %v1004 = vadd.f32 %v152, %v1003
  %v1005 = vpop.f32.mrb[0].mxu0
  %1006 = vmatprep.mubr.bf16.mxu0 %v511
  %1007 = vmatmul.mubr.bf16.gmra.mrb[0].mxu0 %v510
  %v1008 = vpop.f32.mrb[0].mxu0
  %v1009 = vadd.f32 %v152, %v1008
  %v1010 = vpop.f32.mrb[0].mxu0
  %v1011 = vpop.f32.mrb[0].mxu0
  %v1012 = vadd.f32 %v152, %v1011
  %v1013 = vpop.f32.mrb[0].mxu0
  %1014 = vmatprep.mubr.bf16.mxu0 %v513
  %1015 = vmatmul.mubr.bf16.gmra.mrb[0].mxu0 %v512
  %v1016 = vpop.f32.mrb[0].mxu0
  %v1017 = vadd.f32 %v152, %v1016
  %v1018 = vpop.f32.mrb[0].mxu0
  %v1019 = vpop.f32.mrb[0].mxu0
  %v1020 = vadd.f32 %v152, %v1019
  %v1021 = vpop.f32.mrb[0].mxu0
  %1022 = vmatprep.mubr.bf16.mxu0 %v515
  %1023 = vmatmul.mubr.bf16.gmra.mrb[0].mxu0 %v514
  %v1024 = vpop.f32.mrb[0].mxu0
  %v1025 = vadd.f32 %v152, %v1024
  %v1026 = vpop.f32.mrb[0].mxu0
  %v1027 = vpop.f32.mrb[0].mxu0
  %v1028 = vadd.f32 %v152, %v1027
  %v1029 = vpop.f32.mrb[0].mxu0
  %1030 = vmatprep.mubr.bf16.mxu0 %v517
  %1031 = vmatmul.mubr.bf16.gmra.mrb[0].mxu0 %v516
  %v1032 = vpop.f32.mrb[0].mxu0
  %v1033 = vadd.f32 %v152, %v1032
  %v1034 = vpop.f32.mrb[0].mxu0
  %v1035 = vpop.f32.mrb[0].mxu0
  %v1036 = vadd.f32 %v152, %v1035
  %v1037 = vpop.f32.mrb[0].mxu0
  %1038 = vmatprep.mubr.bf16.mxu0 %v519
  %1039 = vmatmul.mubr.bf16.gmra.mrb[0].mxu0 %v518
  %v1040 = vpop.f32.mrb[0].mxu0
  %v1041 = vadd.f32 %v152, %v1040
  %v1042 = vpop.f32.mrb[0].mxu0
  %v1043 = vpop.f32.mrb[0].mxu0
  %v1044 = vadd.f32 %v152, %v1043
  %v1045 = vpop.f32.mrb[0].mxu0
  %1046 = vmatprep.mubr.bf16.mxu0 %v521
  %1047 = vmatmul.mubr.bf16.gmra.mrb[0].mxu0 %v520
  %v1048 = vpop.f32.mrb[0].mxu0
  %v1049 = vadd.f32 %v152, %v1048
  %v1050 = vpop.f32.mrb[0].mxu0
  %v1051 = vpop.f32.mrb[0].mxu0
  %v1052 = vadd.f32 %v152, %v1051
  %v1053 = vpop.f32.mrb[0].mxu0
  %1054 = vmatprep.mubr.bf16.mxu0 %v523
  %1055 = vmatmul.mubr.bf16.gmra.mrb[0].mxu0 %v522
  %v1056 = vpop.f32.mrb[0].mxu0
  %v1057 = vadd.f32 %v152, %v1056
  %v1058 = vpop.f32.mrb[0].mxu0
  %v1059 = vpop.f32.mrb[0].mxu0
  %v1060 = vadd.f32 %v152, %v1059
  %v1061 = vpop.f32.mrb[0].mxu0
  %1062 = vmatprep.mubr.bf16.mxu0 %v525
  %1063 = vmatmul.mubr.bf16.gmra.mrb[0].mxu0 %v524
  %v1064 = vpop.f32.mrb[0].mxu0
  %v1065 = vadd.f32 %v152, %v1064
  %v1066 = vpop.f32.mrb[0].mxu0
  %v1067 = vpop.f32.mrb[0].mxu0
  %v1068 = vadd.f32 %v152, %v1067
  %v1069 = vpop.f32.mrb[0].mxu0
  %1070 = vmatprep.mubr.bf16.mxu0 %v527
  %1071 = vmatmul.mubr.bf16.gmra.mrb[0].mxu0 %v526
  %v1072 = vpop.f32.mrb[0].mxu0
  %v1073 = vadd.f32 %v152, %v1072
  %v1074 = vpop.f32.mrb[0].mxu0
  %v1075 = vpop.f32.mrb[0].mxu0
  %v1076 = vadd.f32 %v152, %v1075
  %v1077 = vpop.f32.mrb[0].mxu0
  %1078 = vmatprep.mubr.bf16.mxu0 %v529
  %1079 = vmatmul.mubr.bf16.gmra.mrb[0].mxu0 %v528
  %v1080 = vpop.f32.mrb[0].mxu0
  %v1081 = vadd.f32 %v152, %v1080
  %v1082 = vpop.f32.mrb[0].mxu0
  %v1083 = vpop.f32.mrb[0].mxu0
  %v1084 = vadd.f32 %v152, %v1083
  %v1085 = vpop.f32.mrb[0].mxu0
  %1086 = vmatprep.mubr.bf16.mxu0 %v531
  %1087 = vmatmul.mubr.bf16.gmra.mrb[0].mxu0 %v530
  %v1088 = vpop.f32.mrb[0].mxu0
  %v1089 = vadd.f32 %v152, %v1088
  %v1090 = vpop.f32.mrb[0].mxu0
  %v1091 = vpop.f32.mrb[0].mxu0
  %v1092 = vadd.f32 %v152, %v1091
  %v1093 = vpop.f32.mrb[0].mxu0
  %1094 = vmatprep.mubr.bf16.mxu0 %v533
  %1095 = vmatmul.mubr.bf16.gmra.mrb[0].mxu0 %v532
  %v1096 = vpop.f32.mrb[0].mxu0
  %v1097 = vadd.f32 %v152, %v1096
  %v1098 = vpop.f32.mrb[0].mxu0
  %v1099 = vpop.f32.mrb[0].mxu0
  %v1100 = vadd.f32 %v152, %v1099
  %v1101 = vpop.f32.mrb[0].mxu0
  %1102 = vmatprep.mubr.bf16.mxu0 %v535
  %1103 = vmatmul.mubr.bf16.gmra.mrb[0].mxu0 %v534
  %v1104 = vpop.f32.mrb[0].mxu0
  %v1105 = vadd.f32 %v152, %v1104
  %v1106 = vpop.f32.mrb[0].mxu0
  %v1107 = vpop.f32.mrb[0].mxu0
  %v1108 = vadd.f32 %v152, %v1107
  %v1109 = vpop.f32.mrb[0].mxu0
  %1110 = vmatprep.mubr.bf16.mxu0 %v537
  %1111 = vmatmul.mubr.bf16.gmra.mrb[0].mxu0 %v536
  %v1112 = vpop.f32.mrb[0].mxu0
  %v1113 = vadd.f32 %v152, %v1112
  %v1114 = vpop.f32.mrb[0].mxu0
  %v1115 = vpop.f32.mrb[0].mxu0
  %v1116 = vadd.f32 %v152, %v1115
  %v1117 = vpop.f32.mrb[0].mxu0
  %1118 = vmatprep.mubr.bf16.mxu0 %v539
  %1119 = vmatmul.mubr.bf16.gmra.mrb[0].mxu0 %v538
  %v1120 = vpop.f32.mrb[0].mxu0
  %v1121 = vadd.f32 %v152, %v1120
  %v1122 = vpop.f32.mrb[0].mxu0
  %v1123 = vpop.f32.mrb[0].mxu0
  %v1124 = vadd.f32 %v152, %v1123
  %v1125 = vpop.f32.mrb[0].mxu0
  %1126 = vmatprep.mubr.bf16.mxu0 %v541
  %1127 = vmatmul.mubr.bf16.gmra.mrb[0].mxu0 %v540
  %v1128 = vpop.f32.mrb[0].mxu0
  %v1129 = vadd.f32 %v152, %v1128
  %v1130 = vpop.f32.mrb[0].mxu0
  %v1131 = vpop.f32.mrb[0].mxu0
  %v1132 = vadd.f32 %v152, %v1131
  %v1133 = vpop.f32.mrb[0].mxu0
  %1134 = vmatprep.mubr.bf16.mxu0 %v543
  %1135 = vmatmul.mubr.bf16.gmra.mrb[0].mxu0 %v542
  %v1136 = vpop.f32.mrb[0].mxu0
  %v1137 = vadd.f32 %v152, %v1136
  %v1138 = vpop.f32.mrb[0].mxu0
  %v1139 = vpop.f32.mrb[0].mxu0
  %v1140 = vadd.f32 %v152, %v1139
  %v1141 = vpop.f32.mrb[0].mxu0
  %1142 = vmatprep.mubr.bf16.mxu0 %v545
  %1143 = vmatmul.mubr.bf16.gmra.mrb[0].mxu0 %v544
  %v1144 = vpop.f32.mrb[0].mxu0
  %v1145 = vadd.f32 %v152, %v1144
  %v1146 = vpop.f32.mrb[0].mxu0
  %v1147 = vpop.f32.mrb[0].mxu0
  %v1148 = vadd.f32 %v152, %v1147
  %v1149 = vpop.f32.mrb[0].mxu0
  %1150 = vmatprep.mubr.bf16.mxu0 %v547
  %1151 = vmatmul.mubr.bf16.gmra.mrb[0].mxu0 %v546
  %v1152 = vpop.f32.mrb[0].mxu0
  %v1153 = vadd.f32 %v152, %v1152
  %v1154 = vpop.f32.mrb[0].mxu0
  %v1155 = vpop.f32.mrb[0].mxu0
  %v1156 = vadd.f32 %v152, %v1155
  %v1157 = vpop.f32.mrb[0].mxu0
  %1158 = vmatprep.mubr.bf16.mxu0 %v549
  %1159 = vmatmul.mubr.bf16.gmra.mrb[0].mxu0 %v548
  %v1160 = vpop.f32.mrb[0].mxu0
  %v1161 = vadd.f32 %v152, %v1160
  %v1162 = vpop.f32.mrb[0].mxu0
  %v1163 = vpop.f32.mrb[0].mxu0
  %v1164 = vadd.f32 %v152, %v1163
  %v1165 = vpop.f32.mrb[0].mxu0
  %1166 = vmatprep.mubr.bf16.mxu0 %v551
  %1167 = vmatmul.mubr.bf16.gmra.mrb[0].mxu0 %v550
  %v1168 = vpop.f32.mrb[0].mxu0
  %v1169 = vadd.f32 %v152, %v1168
  %v1170 = vpop.f32.mrb[0].mxu0
  %v1171 = vpop.f32.mrb[0].mxu0
  %v1172 = vadd.f32 %v152, %v1171
  %v1173 = vpop.f32.mrb[0].mxu0
  %1174 = vmatprep.mubr.bf16.mxu0 %v553
  %1175 = vmatmul.mubr.bf16.gmra.mrb[0].mxu0 %v552
  %v1176 = vpop.f32.mrb[0].mxu0
  %v1177 = vadd.f32 %v152, %v1176
  %v1178 = vpop.f32.mrb[0].mxu0
  %v1179 = vpop.f32.mrb[0].mxu0
  %v1180 = vadd.f32 %v152, %v1179
  %v1181 = vpop.f32.mrb[0].mxu0
  %1182 = vdwg.mxu0
  %v1183 = vmax.f32 %v785, 0.0
  %v1184 = vmax.f32 %v788, 0.0
  %v1185 = vmax.f32 %v793, 0.0
  %v1186 = vmax.f32 %v796, 0.0
  %v1187 = vmax.f32 %v801, 0.0
  %v1188 = vmax.f32 %v804, 0.0
  %v1189 = vmax.f32 %v809, 0.0
  %v1190 = vmax.f32 %v812, 0.0
  %v1191 = vmax.f32 %v817, 0.0
  %v1192 = vmax.f32 %v820, 0.0
  %v1193 = vmax.f32 %v825, 0.0
  %v1194 = vmax.f32 %v828, 0.0
  %v1195 = vmax.f32 %v833, 0.0
  %v1196 = vmax.f32 %v836, 0.0
  %v1197 = vmax.f32 %v841, 0.0
  %v1198 = vmax.f32 %v844, 0.0
  %v1199 = vmax.f32 %v849, 0.0
  %v1200 = vmax.f32 %v852, 0.0
  %v1201 = vmax.f32 %v857, 0.0
  %v1202 = vmax.f32 %v860, 0.0
  %v1203 = vmax.f32 %v865, 0.0
  %v1204 = vmax.f32 %v868, 0.0
  %v1205 = vmax.f32 %v873, 0.0
  %v1206 = vmax.f32 %v876, 0.0
  %v1207 = vmax.f32 %v881, 0.0
  %v1208 = vmax.f32 %v884, 0.0
  %v1209 = vmax.f32 %v889, 0.0
  %v1210 = vmax.f32 %v892, 0.0
  %v1211 = vmax.f32 %v897, 0.0
  %v1212 = vmax.f32 %v900, 0.0
  %v1213 = vmax.f32 %v905, 0.0
  %v1214 = vmax.f32 %v908, 0.0
  %v1215 = vmax.f32 %v913, 0.0
  %v1216 = vmax.f32 %v916, 0.0
  %v1217 = vmax.f32 %v921, 0.0
  %v1218 = vmax.f32 %v924, 0.0
  %v1219 = vmax.f32 %v929, 0.0
  %v1220 = vmax.f32 %v932, 0.0
  %v1221 = vmax.f32 %v937, 0.0
  %v1222 = vmax.f32 %v940, 0.0
  %v1223 = vmax.f32 %v945, 0.0
  %v1224 = vmax.f32 %v948, 0.0
  %v1225 = vmax.f32 %v953, 0.0
  %v1226 = vmax.f32 %v956, 0.0
  %v1227 = vmax.f32 %v961, 0.0
  %v1228 = vmax.f32 %v964, 0.0
  %v1229 = vmax.f32 %v969, 0.0
  %v1230 = vmax.f32 %v972, 0.0
  %v1231 = vmax.f32 %v977, 0.0
  %v1232 = vmax.f32 %v980, 0.0
  %v1233 = vmax.f32 %v985, 0.0
  %v1234 = vmax.f32 %v988, 0.0
  %v1235 = vmax.f32 %v993, 0.0
  %v1236 = vmax.f32 %v996, 0.0
  %v1237 = vmax.f32 %v1001, 0.0
  %v1238 = vmax.f32 %v1004, 0.0
  %v1239 = vmax.f32 %v1009, 0.0
  %v1240 = vmax.f32 %v1012, 0.0
  %v1241 = vmax.f32 %v1017, 0.0
  %v1242 = vmax.f32 %v1020, 0.0
  %v1243 = vmax.f32 %v1025, 0.0
  %v1244 = vmax.f32 %v1028, 0.0
  %v1245 = vmax.f32 %v1033, 0.0
  %v1246 = vmax.f32 %v1036, 0.0
  %v1247 = vmax.f32 %v1041, 0.0
  %v1248 = vmax.f32 %v1044, 0.0
  %v1249 = vmax.f32 %v1049, 0.0
  %v1250 = vmax.f32 %v1052, 0.0
  %v1251 = vmax.f32 %v1057, 0.0
  %v1252 = vmax.f32 %v1060, 0.0
  %v1253 = vmax.f32 %v1065, 0.0
  %v1254 = vmax.f32 %v1068, 0.0
  %v1255 = vmax.f32 %v1073, 0.0
  %v1256 = vmax.f32 %v1076, 0.0
  %v1257 = vmax.f32 %v1081, 0.0
  %v1258 = vmax.f32 %v1084, 0.0
  %v1259 = vmax.f32 %v1089, 0.0
  %v1260 = vmax.f32 %v1092, 0.0
  %v1261 = vmax.f32 %v1097, 0.0
  %v1262 = vmax.f32 %v1100, 0.0
  %v1263 = vmax.f32 %v1105, 0.0
  %v1264 = vmax.f32 %v1108, 0.0
  %v1265 = vmax.f32 %v1113, 0.0
  %v1266 = vmax.f32 %v1116, 0.0
  %v1267 = vmax.f32 %v1121, 0.0
  %v1268 = vmax.f32 %v1124, 0.0
  %v1269 = vmax.f32 %v1129, 0.0
  %v1270 = vmax.f32 %v1132, 0.0
  %v1271 = vmax.f32 %v1137, 0.0
  %v1272 = vmax.f32 %v1140, 0.0
  %v1273 = vmax.f32 %v1145, 0.0
  %v1274 = vmax.f32 %v1148, 0.0
  %v1275 = vmax.f32 %v1153, 0.0
  %v1276 = vmax.f32 %v1156, 0.0
  %v1277 = vmax.f32 %v1161, 0.0
  %v1278 = vmax.f32 %v1164, 0.0
  %v1279 = vmax.f32 %v1169, 0.0
  %v1280 = vmax.f32 %v1172, 0.0
  %v1281 = vmax.f32 %v1177, 0.0
  %v1282 = vmax.f32 %v1180, 0.0
  %v1283 = vpack.c.bf16 %v1184, %v1183
  %v1284 = vpack.c.bf16 %v1186, %v1185
  %v1285 = vpack.c.bf16 %v1188, %v1187
  %v1286 = vpack.c.bf16 %v1190, %v1189
  %v1287 = vpack.c.bf16 %v1192, %v1191
  %v1288 = vpack.c.bf16 %v1194, %v1193
  %v1289 = vpack.c.bf16 %v1196, %v1195
  %v1290 = vpack.c.bf16 %v1198, %v1197
  %v1291 = vpack.c.bf16 %v1200, %v1199
  %v1292 = vpack.c.bf16 %v1202, %v1201
  %v1293 = vpack.c.bf16 %v1204, %v1203
  %v1294 = vpack.c.bf16 %v1206, %v1205
  %v1295 = vpack.c.bf16 %v1208, %v1207
  %v1296 = vpack.c.bf16 %v1210, %v1209
  %v1297 = vpack.c.bf16 %v1212, %v1211
  %v1298 = vpack.c.bf16 %v1214, %v1213
  %v1299 = vpack.c.bf16 %v1216, %v1215
  %v1300 = vpack.c.bf16 %v1218, %v1217
  %v1301 = vpack.c.bf16 %v1220, %v1219
  %v1302 = vpack.c.bf16 %v1222, %v1221
  %v1303 = vpack.c.bf16 %v1224, %v1223
  %v1304 = vpack.c.bf16 %v1226, %v1225
  %v1305 = vpack.c.bf16 %v1228, %v1227
  %v1306 = vpack.c.bf16 %v1230, %v1229
  %v1307 = vpack.c.bf16 %v1232, %v1231
  %v1308 = vpack.c.bf16 %v1234, %v1233
  %v1309 = vpack.c.bf16 %v1236, %v1235
  %v1310 = vpack.c.bf16 %v1238, %v1237
  %v1311 = vpack.c.bf16 %v1240, %v1239
  %v1312 = vpack.c.bf16 %v1242, %v1241
  %v1313 = vpack.c.bf16 %v1244, %v1243
  %v1314 = vpack.c.bf16 %v1246, %v1245
  %v1315 = vpack.c.bf16 %v1248, %v1247
  %v1316 = vpack.c.bf16 %v1250, %v1249
  %v1317 = vpack.c.bf16 %v1252, %v1251
  %v1318 = vpack.c.bf16 %v1254, %v1253
  %v1319 = vpack.c.bf16 %v1256, %v1255
  %v1320 = vpack.c.bf16 %v1258, %v1257
  %v1321 = vpack.c.bf16 %v1260, %v1259
  %v1322 = vpack.c.bf16 %v1262, %v1261
  %v1323 = vpack.c.bf16 %v1264, %v1263
  %v1324 = vpack.c.bf16 %v1266, %v1265
  %v1325 = vpack.c.bf16 %v1268, %v1267
  %v1326 = vpack.c.bf16 %v1270, %v1269
  %v1327 = vpack.c.bf16 %v1272, %v1271
  %v1328 = vpack.c.bf16 %v1274, %v1273
  %v1329 = vpack.c.bf16 %v1276, %v1275
  %v1330 = vpack.c.bf16 %v1278, %v1277
  %v1331 = vpack.c.bf16 %v1280, %v1279
  %v1332 = vpack.c.bf16 %v1282, %v1281
  %v1383 = vunpack.c.l.b16 %v1283
  %v1384 = vunpack.c.h.b16 %v1283
  %v1385 = vunpack.c.l.b16 %v1284
  %v1386 = vunpack.c.h.b16 %v1284
  %v1387 = vunpack.c.l.b16 %v1285
  %v1388 = vunpack.c.h.b16 %v1285
  %v1389 = vunpack.c.l.b16 %v1286
  %v1390 = vunpack.c.h.b16 %v1286
  %v1391 = vunpack.c.l.b16 %v1287
  %v1392 = vunpack.c.h.b16 %v1287
  %v1393 = vunpack.c.l.b16 %v1288
  %v1394 = vunpack.c.h.b16 %v1288
  %v1395 = vunpack.c.l.b16 %v1289
  %v1396 = vunpack.c.h.b16 %v1289
  %v1397 = vunpack.c.l.b16 %v1290
  %v1398 = vunpack.c.h.b16 %v1290
  %v1399 = vunpack.c.l.b16 %v1291
  %v1400 = vunpack.c.h.b16 %v1291
  %v1401 = vunpack.c.l.b16 %v1292
  %v1402 = vunpack.c.h.b16 %v1292
  %v1403 = vunpack.c.l.b16 %v1293
  %v1404 = vunpack.c.h.b16 %v1293
  %v1405 = vunpack.c.l.b16 %v1294
  %v1406 = vunpack.c.h.b16 %v1294
  %v1407 = vunpack.c.l.b16 %v1295
  %v1408 = vunpack.c.h.b16 %v1295
  %v1409 = vunpack.c.l.b16 %v1296
  %v1410 = vunpack.c.h.b16 %v1296
  %v1411 = vunpack.c.l.b16 %v1297
  %v1412 = vunpack.c.h.b16 %v1297
  %v1413 = vunpack.c.l.b16 %v1298
  %v1414 = vunpack.c.h.b16 %v1298
  %v1415 = vunpack.c.l.b16 %v1299
  %v1416 = vunpack.c.h.b16 %v1299
  %v1417 = vunpack.c.l.b16 %v1300
  %v1418 = vunpack.c.h.b16 %v1300
  %v1419 = vunpack.c.l.b16 %v1301
  %v1420 = vunpack.c.h.b16 %v1301
  %v1421 = vunpack.c.l.b16 %v1302
  %v1422 = vunpack.c.h.b16 %v1302
  %v1423 = vunpack.c.l.b16 %v1303
  %v1424 = vunpack.c.h.b16 %v1303
  %v1425 = vunpack.c.l.b16 %v1304
  %v1426 = vunpack.c.h.b16 %v1304
  %v1427 = vunpack.c.l.b16 %v1305
  %v1428 = vunpack.c.h.b16 %v1305
  %v1429 = vunpack.c.l.b16 %v1306
  %v1430 = vunpack.c.h.b16 %v1306
  %v1431 = vunpack.c.l.b16 %v1307
  %v1432 = vunpack.c.h.b16 %v1307
  %v1433 = vunpack.c.l.b16 %v1308
  %v1434 = vunpack.c.h.b16 %v1308
  %v1435 = vunpack.c.l.b16 %v1309
  %v1436 = vunpack.c.h.b16 %v1309
  %v1437 = vunpack.c.l.b16 %v1310
  %v1438 = vunpack.c.h.b16 %v1310
  %v1439 = vunpack.c.l.b16 %v1311
  %v1440 = vunpack.c.h.b16 %v1311
  %v1441 = vunpack.c.l.b16 %v1312
  %v1442 = vunpack.c.h.b16 %v1312
  %v1443 = vunpack.c.l.b16 %v1313
  %v1444 = vunpack.c.h.b16 %v1313
  %v1445 = vunpack.c.l.b16 %v1314
  %v1446 = vunpack.c.h.b16 %v1314
  %v1447 = vunpack.c.l.b16 %v1315
  %v1448 = vunpack.c.h.b16 %v1315
  %v1449 = vunpack.c.l.b16 %v1316
  %v1450 = vunpack.c.h.b16 %v1316
  %v1451 = vunpack.c.l.b16 %v1317
  %v1452 = vunpack.c.h.b16 %v1317
  %v1453 = vunpack.c.l.b16 %v1318
  %v1454 = vunpack.c.h.b16 %v1318
  %v1455 = vunpack.c.l.b16 %v1319
  %v1456 = vunpack.c.h.b16 %v1319
  %v1457 = vunpack.c.l.b16 %v1320
  %v1458 = vunpack.c.h.b16 %v1320
  %v1459 = vunpack.c.l.b16 %v1321
  %v1460 = vunpack.c.h.b16 %v1321
  %v1461 = vunpack.c.l.b16 %v1322
  %v1462 = vunpack.c.h.b16 %v1322
  %v1463 = vunpack.c.l.b16 %v1323
  %v1464 = vunpack.c.h.b16 %v1323
  %v1465 = vunpack.c.l.b16 %v1324
  %v1466 = vunpack.c.h.b16 %v1324
  %v1467 = vunpack.c.l.b16 %v1325
  %v1468 = vunpack.c.h.b16 %v1325
  %v1469 = vunpack.c.l.b16 %v1326
  %v1470 = vunpack.c.h.b16 %v1326
  %v1471 = vunpack.c.l.b16 %v1327
  %v1472 = vunpack.c.h.b16 %v1327
  %v1473 = vunpack.c.l.b16 %v1328
  %v1474 = vunpack.c.h.b16 %v1328
  %v1475 = vunpack.c.l.b16 %v1329
  %v1476 = vunpack.c.h.b16 %v1329
  %v1477 = vunpack.c.l.b16 %v1330
  %v1478 = vunpack.c.h.b16 %v1330
  %v1479 = vunpack.c.l.b16 %v1331
  %v1480 = vunpack.c.h.b16 %v1331
  %v1481 = vunpack.c.l.b16 %v1332
  %v1482 = vunpack.c.h.b16 %v1332
  %v1483 = vpack.c.b16 %v1383, %v1383
  %v1484 = vpack.c.b16 %v1384, %v1384
  %v1485 = vpack.c.b16 %v1385, %v1385
  %v1486 = vpack.c.b16 %v1386, %v1386
  %v1487 = vpack.c.b16 %v1387, %v1387
  %v1488 = vpack.c.b16 %v1388, %v1388
  %v1489 = vpack.c.b16 %v1389, %v1389
  %v1490 = vpack.c.b16 %v1390, %v1390
  %v1491 = vpack.c.b16 %v1391, %v1391
  %v1492 = vpack.c.b16 %v1392, %v1392
  %v1493 = vpack.c.b16 %v1393, %v1393
  %v1494 = vpack.c.b16 %v1394, %v1394
  %v1495 = vpack.c.b16 %v1395, %v1395
  %v1496 = vpack.c.b16 %v1396, %v1396
  %v1497 = vpack.c.b16 %v1397, %v1397
  %v1498 = vpack.c.b16 %v1398, %v1398
  %v1499 = vpack.c.b16 %v1399, %v1399
  %v1500 = vpack.c.b16 %v1400, %v1400
  %v1501 = vpack.c.b16 %v1401, %v1401
  %v1502 = vpack.c.b16 %v1402, %v1402
  %v1503 = vpack.c.b16 %v1403, %v1403
  %v1504 = vpack.c.b16 %v1404, %v1404
  %v1505 = vpack.c.b16 %v1405, %v1405
  %v1506 = vpack.c.b16 %v1406, %v1406
  %v1507 = vpack.c.b16 %v1407, %v1407
  %v1508 = vpack.c.b16 %v1408, %v1408
  %v1509 = vpack.c.b16 %v1409, %v1409
  %v1510 = vpack.c.b16 %v1410, %v1410
  %v1511 = vpack.c.b16 %v1411, %v1411
  %v1512 = vpack.c.b16 %v1412, %v1412
  %v1513 = vpack.c.b16 %v1413, %v1413
  %v1514 = vpack.c.b16 %v1414, %v1414
  %v1515 = vpack.c.b16 %v1415, %v1415
  %v1516 = vpack.c.b16 %v1416, %v1416
  %v1517 = vpack.c.b16 %v1417, %v1417
  %v1518 = vpack.c.b16 %v1418, %v1418
  %v1519 = vpack.c.b16 %v1419, %v1419
  %v1520 = vpack.c.b16 %v1420, %v1420
  %v1521 = vpack.c.b16 %v1421, %v1421
  %v1522 = vpack.c.b16 %v1422, %v1422
  %v1523 = vpack.c.b16 %v1423, %v1423
  %v1524 = vpack.c.b16 %v1424, %v1424
  %v1525 = vpack.c.b16 %v1425, %v1425
  %v1526 = vpack.c.b16 %v1426, %v1426
  %v1527 = vpack.c.b16 %v1427, %v1427
  %v1528 = vpack.c.b16 %v1428, %v1428
  %v1529 = vpack.c.b16 %v1429, %v1429
  %v1530 = vpack.c.b16 %v1430, %v1430
  %v1531 = vpack.c.b16 %v1431, %v1431
  %v1532 = vpack.c.b16 %v1432, %v1432
  %v1533 = vpack.c.b16 %v1433, %v1433
  %v1534 = vpack.c.b16 %v1434, %v1434
  %v1535 = vpack.c.b16 %v1435, %v1435
  %v1536 = vpack.c.b16 %v1436, %v1436
  %v1537 = vpack.c.b16 %v1437, %v1437
  %v1538 = vpack.c.b16 %v1438, %v1438
  %v1539 = vpack.c.b16 %v1439, %v1439
  %v1540 = vpack.c.b16 %v1440, %v1440
  %v1541 = vpack.c.b16 %v1441, %v1441
  %v1542 = vpack.c.b16 %v1442, %v1442
  %v1543 = vpack.c.b16 %v1443, %v1443
  %v1544 = vpack.c.b16 %v1444, %v1444
  %v1545 = vpack.c.b16 %v1445, %v1445
  %v1546 = vpack.c.b16 %v1446, %v1446
  %v1547 = vpack.c.b16 %v1447, %v1447
  %v1548 = vpack.c.b16 %v1448, %v1448
  %v1549 = vpack.c.b16 %v1449, %v1449
  %v1550 = vpack.c.b16 %v1450, %v1450
  %v1551 = vpack.c.b16 %v1451, %v1451
  %v1552 = vpack.c.b16 %v1452, %v1452
  %v1553 = vpack.c.b16 %v1453, %v1453
  %v1554 = vpack.c.b16 %v1454, %v1454
  %v1555 = vpack.c.b16 %v1455, %v1455
  %v1556 = vpack.c.b16 %v1456, %v1456
  %v1557 = vpack.c.b16 %v1457, %v1457
  %v1558 = vpack.c.b16 %v1458, %v1458
  %v1559 = vpack.c.b16 %v1459, %v1459
  %v1560 = vpack.c.b16 %v1460, %v1460
  %v1561 = vpack.c.b16 %v1461, %v1461
  %v1562 = vpack.c.b16 %v1462, %v1462
  %v1563 = vpack.c.b16 %v1463, %v1463
  %v1564 = vpack.c.b16 %v1464, %v1464
  %v1565 = vpack.c.b16 %v1465, %v1465
  %v1566 = vpack.c.b16 %v1466, %v1466
  %v1567 = vpack.c.b16 %v1467, %v1467
  %v1568 = vpack.c.b16 %v1468, %v1468
  %v1569 = vpack.c.b16 %v1469, %v1469
  %v1570 = vpack.c.b16 %v1470, %v1470
  %v1571 = vpack.c.b16 %v1471, %v1471
  %v1572 = vpack.c.b16 %v1472, %v1472
  %v1573 = vpack.c.b16 %v1473, %v1473
  %v1574 = vpack.c.b16 %v1474, %v1474
  %v1575 = vpack.c.b16 %v1475, %v1475
  %v1576 = vpack.c.b16 %v1476, %v1476
  %v1577 = vpack.c.b16 %v1477, %v1477
  %v1578 = vpack.c.b16 %v1478, %v1478
  %v1579 = vpack.c.b16 %v1479, %v1479
  %v1580 = vpack.c.b16 %v1480, %v1480
  %v1581 = vpack.c.b16 %v1481, %v1481
  %v1582 = vpack.c.b16 %v1482, %v1482
  %vm1683 = vcmask 257024
  %1684 = vst.msk [vmem:[%s3] sm:$0xf] %vm1683, %v1483
  %1685 = vst.msk [vmem:[%s3 + $0x4] sm:$0xf] %vm1683, %v1484
  %1686 = vst.msk [vmem:[%s3 + $0x8] sm:$0xf] %vm1683, %v1485
  %1687 = vst.msk [vmem:[%s3 + $0xc] sm:$0xf] %vm1683, %v1486
  %1688 = vst.msk [vmem:[%s3 + $0x10] sm:$0xf] %vm1683, %v1487
  %1689 = vst.msk [vmem:[%s3 + $0x14] sm:$0xf] %vm1683, %v1488
  %1690 = vst.msk [vmem:[%s3 + $0x18] sm:$0xf] %vm1683, %v1489
  %1691 = vst.msk [vmem:[%s3 + $0x1c] sm:$0xf] %vm1683, %v1490
  %1692 = vst.msk [vmem:[%s3 + $0x20] sm:$0xf] %vm1683, %v1491
  %1693 = vst.msk [vmem:[%s3 + $0x24] sm:$0xf] %vm1683, %v1492
  %1694 = vst.msk [vmem:[%s3 + $0x28] sm:$0xf] %vm1683, %v1493
  %1695 = vst.msk [vmem:[%s3 + $0x2c] sm:$0xf] %vm1683, %v1494
  %1696 = vst.msk [vmem:[%s3 + $0x30] sm:$0xf] %vm1683, %v1495
  %1697 = vst.msk [vmem:[%s3 + $0x34] sm:$0xf] %vm1683, %v1496
  %1698 = vst.msk [vmem:[%s3 + $0x38] sm:$0xf] %vm1683, %v1497
  %1699 = vst.msk [vmem:[%s3 + $0x3c] sm:$0xf] %vm1683, %v1498
  %1700 = vst.msk [vmem:[%s3 + $0x40] sm:$0xf] %vm1683, %v1499
  %1701 = vst.msk [vmem:[%s3 + $0x44] sm:$0xf] %vm1683, %v1500
  %1702 = vst.msk [vmem:[%s3 + $0x48] sm:$0xf] %vm1683, %v1501
  %1703 = vst.msk [vmem:[%s3 + $0x4c] sm:$0xf] %vm1683, %v1502
  %1704 = vst.msk [vmem:[%s3 + $0x50] sm:$0xf] %vm1683, %v1503
  %1705 = vst.msk [vmem:[%s3 + $0x54] sm:$0xf] %vm1683, %v1504
  %1706 = vst.msk [vmem:[%s3 + $0x58] sm:$0xf] %vm1683, %v1505
  %1707 = vst.msk [vmem:[%s3 + $0x5c] sm:$0xf] %vm1683, %v1506
  %1708 = vst.msk [vmem:[%s3 + $0x60] sm:$0xf] %vm1683, %v1507
  %1709 = vst.msk [vmem:[%s3 + $0x64] sm:$0xf] %vm1683, %v1508
  %1710 = vst.msk [vmem:[%s3 + $0x68] sm:$0xf] %vm1683, %v1509
  %1711 = vst.msk [vmem:[%s3 + $0x6c] sm:$0xf] %vm1683, %v1510
  %1712 = vst.msk [vmem:[%s3 + $0x70] sm:$0xf] %vm1683, %v1511
  %1713 = vst.msk [vmem:[%s3 + $0x74] sm:$0xf] %vm1683, %v1512
  %1714 = vst.msk [vmem:[%s3 + $0x78] sm:$0xf] %vm1683, %v1513
  %1715 = vst.msk [vmem:[%s3 + $0x7c] sm:$0xf] %vm1683, %v1514
  %1716 = vst.msk [vmem:[%s3 + $0x80] sm:$0xf] %vm1683, %v1515
  %1717 = vst.msk [vmem:[%s3 + $0x84] sm:$0xf] %vm1683, %v1516
  %1718 = vst.msk [vmem:[%s3 + $0x88] sm:$0xf] %vm1683, %v1517
  %1719 = vst.msk [vmem:[%s3 + $0x8c] sm:$0xf] %vm1683, %v1518
  %1720 = vst.msk [vmem:[%s3 + $0x90] sm:$0xf] %vm1683, %v1519
  %1721 = vst.msk [vmem:[%s3 + $0x94] sm:$0xf] %vm1683, %v1520
  %1722 = vst.msk [vmem:[%s3 + $0x98] sm:$0xf] %vm1683, %v1521
  %1723 = vst.msk [vmem:[%s3 + $0x9c] sm:$0xf] %vm1683, %v1522
  %1724 = vst.msk [vmem:[%s3 + $0xa0] sm:$0xf] %vm1683, %v1523
  %1725 = vst.msk [vmem:[%s3 + $0xa4] sm:$0xf] %vm1683, %v1524
  %1726 = vst.msk [vmem:[%s3 + $0xa8] sm:$0xf] %vm1683, %v1525
  %1727 = vst.msk [vmem:[%s3 + $0xac] sm:$0xf] %vm1683, %v1526
  %1728 = vst.msk [vmem:[%s3 + $0xb0] sm:$0xf] %vm1683, %v1527
  %1729 = vst.msk [vmem:[%s3 + $0xb4] sm:$0xf] %vm1683, %v1528
  %1730 = vst.msk [vmem:[%s3 + $0xb8] sm:$0xf] %vm1683, %v1529
  %1731 = vst.msk [vmem:[%s3 + $0xbc] sm:$0xf] %vm1683, %v1530
  %1732 = vst.msk [vmem:[%s3 + $0xc0] sm:$0xf] %vm1683, %v1531
  %1733 = vst.msk [vmem:[%s3 + $0xc4] sm:$0xf] %vm1683, %v1532
  %1734 = vst.msk [vmem:[%s3 + $0xc8] sm:$0xf] %vm1683, %v1533
  %1735 = vst.msk [vmem:[%s3 + $0xcc] sm:$0xf] %vm1683, %v1534
  %1736 = vst.msk [vmem:[%s3 + $0xd0] sm:$0xf] %vm1683, %v1535
  %1737 = vst.msk [vmem:[%s3 + $0xd4] sm:$0xf] %vm1683, %v1536
  %1738 = vst.msk [vmem:[%s3 + $0xd8] sm:$0xf] %vm1683, %v1537
  %1739 = vst.msk [vmem:[%s3 + $0xdc] sm:$0xf] %vm1683, %v1538
  %1740 = vst.msk [vmem:[%s3 + $0xe0] sm:$0xf] %vm1683, %v1539
  %1741 = vst.msk [vmem:[%s3 + $0xe4] sm:$0xf] %vm1683, %v1540
  %1742 = vst.msk [vmem:[%s3 + $0xe8] sm:$0xf] %vm1683, %v1541
  %1743 = vst.msk [vmem:[%s3 + $0xec] sm:$0xf] %vm1683, %v1542
  %1744 = vst.msk [vmem:[%s3 + $0xf0] sm:$0xf] %vm1683, %v1543
  %1745 = vst.msk [vmem:[%s3 + $0xf4] sm:$0xf] %vm1683, %v1544
  %1746 = vst.msk [vmem:[%s3 + $0xf8] sm:$0xf] %vm1683, %v1545
  %1747 = vst.msk [vmem:[%s3 + $0xfc] sm:$0xf] %vm1683, %v1546
  %1748 = vst.msk [vmem:[%s3 + $0x100] sm:$0xf] %vm1683, %v1547
  %1749 = vst.msk [vmem:[%s3 + $0x104] sm:$0xf] %vm1683, %v1548
  %1750 = vst.msk [vmem:[%s3 + $0x108] sm:$0xf] %vm1683, %v1549
  %1751 = vst.msk [vmem:[%s3 + $0x10c] sm:$0xf] %vm1683, %v1550
  %1752 = vst.msk [vmem:[%s3 + $0x110] sm:$0xf] %vm1683, %v1551
  %1753 = vst.msk [vmem:[%s3 + $0x114] sm:$0xf] %vm1683, %v1552
  %1754 = vst.msk [vmem:[%s3 + $0x118] sm:$0xf] %vm1683, %v1553
  %1755 = vst.msk [vmem:[%s3 + $0x11c] sm:$0xf] %vm1683, %v1554
  %1756 = vst.msk [vmem:[%s3 + $0x120] sm:$0xf] %vm1683, %v1555
  %1757 = vst.msk [vmem:[%s3 + $0x124] sm:$0xf] %vm1683, %v1556
  %1758 = vst.msk [vmem:[%s3 + $0x128] sm:$0xf] %vm1683, %v1557
  %1759 = vst.msk [vmem:[%s3 + $0x12c] sm:$0xf] %vm1683, %v1558
  %1760 = vst.msk [vmem:[%s3 + $0x130] sm:$0xf] %vm1683, %v1559
  %1761 = vst.msk [vmem:[%s3 + $0x134] sm:$0xf] %vm1683, %v1560
  %1762 = vst.msk [vmem:[%s3 + $0x138] sm:$0xf] %vm1683, %v1561
  %1763 = vst.msk [vmem:[%s3 + $0x13c] sm:$0xf] %vm1683, %v1562
  %1764 = vst.msk [vmem:[%s3 + $0x140] sm:$0xf] %vm1683, %v1563
  %1765 = vst.msk [vmem:[%s3 + $0x144] sm:$0xf] %vm1683, %v1564
  %1766 = vst.msk [vmem:[%s3 + $0x148] sm:$0xf] %vm1683, %v1565
  %1767 = vst.msk [vmem:[%s3 + $0x14c] sm:$0xf] %vm1683, %v1566
  %1768 = vst.msk [vmem:[%s3 + $0x150] sm:$0xf] %vm1683, %v1567
  %1769 = vst.msk [vmem:[%s3 + $0x154] sm:$0xf] %vm1683, %v1568
  %1770 = vst.msk [vmem:[%s3 + $0x158] sm:$0xf] %vm1683, %v1569
  %1771 = vst.msk [vmem:[%s3 + $0x15c] sm:$0xf] %vm1683, %v1570
  %1772 = vst.msk [vmem:[%s3 + $0x160] sm:$0xf] %vm1683, %v1571
  %1773 = vst.msk [vmem:[%s3 + $0x164] sm:$0xf] %vm1683, %v1572
  %1774 = vst.msk [vmem:[%s3 + $0x168] sm:$0xf] %vm1683, %v1573
  %1775 = vst.msk [vmem:[%s3 + $0x16c] sm:$0xf] %vm1683, %v1574
  %1776 = vst.msk [vmem:[%s3 + $0x170] sm:$0xf] %vm1683, %v1575
  %1777 = vst.msk [vmem:[%s3 + $0x174] sm:$0xf] %vm1683, %v1576
  %1778 = vst.msk [vmem:[%s3 + $0x178] sm:$0xf] %vm1683, %v1577
  %1779 = vst.msk [vmem:[%s3 + $0x17c] sm:$0xf] %vm1683, %v1578
  %1780 = vst.msk [vmem:[%s3 + $0x180] sm:$0xf] %vm1683, %v1579
  %1781 = vst.msk [vmem:[%s3 + $0x184] sm:$0xf] %vm1683, %v1580
  %1782 = vst.msk [vmem:[%s3 + $0x188] sm:$0xf] %vm1683, %v1581
  %1783 = vst.msk [vmem:[%s3 + $0x18c] sm:$0xf] %vm1683, %v1582
  // Predicated region
  $region14: #{actor_forward.4} parent=0 // pred_check
    _
  $region15: #{actor_forward.4} parent=0 // pred_check_branch
    %1785 = sbr.rel (0) target = $region17
  $region16: #{actor_forward.4} parent=0 // pred_region
    _
  $region17: #{actor_forward.4} parent=0 // pred_fallthru
    _
  // Predicated region
  $region18: #{actor_forward.4} parent=0 // pred_check
    _
  $region19: #{actor_forward.4} parent=0 // pred_check_branch
    %1787 = sbr.rel (0) target = $region21
  $region20: #{actor_forward.4} parent=0 // pred_region
    _
  $region21: #{actor_forward.4} parent=0 // pred_fallthru
    _

// kernel: actor_forward.5
$region0: #{actor_forward.5}
  #allocation0 [shape = 'u32[]', space=smem, size = 0x4, offset = 0x4, fixed_abs, tag = 'smem constant byte address 0x4 - core index']
  #allocation1 [shape = 'u32[144,128]{1,0:T(1,128)}', space=vmem, size = 0x12000, scoped, tag = 'internal scratch']
  %s0 = inlined_call_operand.vmem [shape: bf16[162,512], index: 0, kind: input, shape index: {}]
  %s1 = inlined_call_operand.vmem [shape: bf16[512,64], index: 1, kind: input, shape index: {}]
  %s2 = inlined_call_operand.vmem [shape: f32[1,64], index: 2, kind: input, shape index: {}]
  %s3 = inlined_call_operand.vmem [shape: bf16[162,64], index: 3, kind: output, shape index: {}]
  %s4 = sld [smem:[#allocation0]]
  $region22: #{actor_forward.5} parent=0
    _
  %s6 = ssub.s32 1, %s4
  %s7 = scalar_select 0, %s6, %s4
  // Predicated region
  $region2: #{actor_forward.5} parent=0 // pred_check
    _
  $region3: #{actor_forward.5} parent=0 // pred_check_branch
    %9 = sbr.rel (0) target = $region5
  $region4: #{actor_forward.5} parent=0 // pred_region
    _
  $region5: #{actor_forward.5} parent=0 // pred_fallthru
    _
  // Predicated region
  $region6: #{actor_forward.5} parent=0 // pred_check
    _
  $region7: #{actor_forward.5} parent=0 // pred_check_branch
    %11 = sbr.rel (0) target = $region9
  $region8: #{actor_forward.5} parent=0 // pred_region
    _
  $region9: #{actor_forward.5} parent=0 // pred_fallthru
    _
  // Predicated region
  $region10: #{actor_forward.5} parent=0 // pred_check
    _
  $region11: #{actor_forward.5} parent=0 // pred_check_branch
    %13 = sbr.rel (0) target = $region13
  $region12: #{actor_forward.5} parent=0 // pred_region
    _
  $region13: #{actor_forward.5} parent=0 // pred_fallthru
    _
  %v15 = vld [vmem:[%s0] sm:$0xff]
  %v16 = vld [vmem:[%s0 + $0x8] sm:$0xff]
  %v17 = vld [vmem:[%s0 + $0x10] sm:$0xff]
  %v18 = vld [vmem:[%s0 + $0x18] sm:$0xff]
  %v19 = vld [vmem:[%s0 + $0x20] sm:$0xff]
  %v20 = vld [vmem:[%s0 + $0x28] sm:$0xff]
  %v21 = vld [vmem:[%s0 + $0x30] sm:$0xff]
  %v22 = vld [vmem:[%s0 + $0x38] sm:$0xff]
  %v23 = vld [vmem:[%s0 + $0x40] sm:$0xff]
  %v24 = vld [vmem:[%s0 + $0x48] sm:$0xff]
  %v25 = vld [vmem:[%s0 + $0x50] sm:$0xff]
  %v26 = vld [vmem:[%s0 + $0x58] sm:$0xff]
  %v27 = vld [vmem:[%s0 + $0x60] sm:$0xff]
  %v28 = vld [vmem:[%s0 + $0x68] sm:$0xff]
  %v29 = vld [vmem:[%s0 + $0x70] sm:$0xff]
  %v30 = vld [vmem:[%s0 + $0x78] sm:$0xff]
  %v31 = vld [vmem:[%s0 + $0x80] sm:$0xff]
  %v32 = vld [vmem:[%s0 + $0x88] sm:$0xff]
  %v33 = vld [vmem:[%s0 + $0x90] sm:$0xff]
  %v34 = vld [vmem:[%s0 + $0x98] sm:$0xff]
  %v35 = vld [vmem:[%s0 + $0xa0] sm:$0xff]
  %v36 = vld [vmem:[%s0 + $0xa8] sm:$0xff]
  %v37 = vld [vmem:[%s0 + $0xb0] sm:$0xff]
  %v38 = vld [vmem:[%s0 + $0xb8] sm:$0xff]
  %v39 = vld [vmem:[%s0 + $0xc0] sm:$0xff]
  %v40 = vld [vmem:[%s0 + $0xc8] sm:$0xff]
  %v41 = vld [vmem:[%s0 + $0xd0] sm:$0xff]
  %v42 = vld [vmem:[%s0 + $0xd8] sm:$0xff]
  %v43 = vld [vmem:[%s0 + $0xe0] sm:$0xff]
  %v44 = vld [vmem:[%s0 + $0xe8] sm:$0xff]
  %v45 = vld [vmem:[%s0 + $0xf0] sm:$0xff]
  %v46 = vld [vmem:[%s0 + $0xf8] sm:$0xff]
  %v47 = vld [vmem:[%s0 + $0x100] sm:$0xff]
  %v48 = vld [vmem:[%s0 + $0x108] sm:$0xff]
  %v49 = vld [vmem:[%s0 + $0x110] sm:$0xff]
  %v50 = vld [vmem:[%s0 + $0x118] sm:$0xff]
  %v51 = vld [vmem:[%s0 + $0x120] sm:$0xff]
  %v52 = vld [vmem:[%s0 + $0x128] sm:$0xff]
  %v53 = vld [vmem:[%s0 + $0x130] sm:$0xff]
  %v54 = vld [vmem:[%s0 + $0x138] sm:$0xff]
  %v55 = vld [vmem:[%s0 + $0x140] sm:$0x11]
  %v56 = vld [vmem:[%s0 + $0x148] sm:$0x11]
  %v57 = vld [vmem:[%s1] sm:$0xf]
  %v58 = vld [vmem:[%s1 + $0x4] sm:$0xf]
  %v59 = vld [vmem:[%s1 + $0x8] sm:$0xf]
  %v60 = vld [vmem:[%s1 + $0xc] sm:$0xf]
  %v61 = vld [vmem:[%s1 + $0x10] sm:$0xf]
  %v62 = vld [vmem:[%s1 + $0x14] sm:$0xf]
  %v63 = vld [vmem:[%s1 + $0x18] sm:$0xf]
  %v64 = vld [vmem:[%s1 + $0x1c] sm:$0xf]
  %v65 = vld [vmem:[%s1 + $0x20] sm:$0xf]
  %v66 = vld [vmem:[%s1 + $0x24] sm:$0xf]
  %v67 = vld [vmem:[%s1 + $0x28] sm:$0xf]
  %v68 = vld [vmem:[%s1 + $0x2c] sm:$0xf]
  %v69 = vld [vmem:[%s1 + $0x30] sm:$0xf]
  %v70 = vld [vmem:[%s1 + $0x34] sm:$0xf]
  %v71 = vld [vmem:[%s1 + $0x38] sm:$0xf]
  %v72 = vld [vmem:[%s1 + $0x3c] sm:$0xf]
  %v73 = vld [vmem:[%s1 + $0x40] sm:$0xf]
  %v74 = vld [vmem:[%s1 + $0x44] sm:$0xf]
  %v75 = vld [vmem:[%s1 + $0x48] sm:$0xf]
  %v76 = vld [vmem:[%s1 + $0x4c] sm:$0xf]
  %v77 = vld [vmem:[%s1 + $0x50] sm:$0xf]
  %v78 = vld [vmem:[%s1 + $0x54] sm:$0xf]
  %v79 = vld [vmem:[%s1 + $0x58] sm:$0xf]
  %v80 = vld [vmem:[%s1 + $0x5c] sm:$0xf]
  %v81 = vld [vmem:[%s1 + $0x60] sm:$0xf]
  %v82 = vld [vmem:[%s1 + $0x64] sm:$0xf]
  %v83 = vld [vmem:[%s1 + $0x68] sm:$0xf]
  %v84 = vld [vmem:[%s1 + $0x6c] sm:$0xf]
  %v85 = vld [vmem:[%s1 + $0x70] sm:$0xf]
  %v86 = vld [vmem:[%s1 + $0x74] sm:$0xf]
  %v87 = vld [vmem:[%s1 + $0x78] sm:$0xf]
  %v88 = vld [vmem:[%s1 + $0x7c] sm:$0xf]
  %v89 = vld [vmem:[%s1 + $0x80] sm:$0xf]
  %v90 = vld [vmem:[%s1 + $0x84] sm:$0xf]
  %v91 = vld [vmem:[%s1 + $0x88] sm:$0xf]
  %v92 = vld [vmem:[%s1 + $0x8c] sm:$0xf]
  %v93 = vld [vmem:[%s1 + $0x90] sm:$0xf]
  %v94 = vld [vmem:[%s1 + $0x94] sm:$0xf]
  %v95 = vld [vmem:[%s1 + $0x98] sm:$0xf]
  %v96 = vld [vmem:[%s1 + $0x9c] sm:$0xf]
  %v97 = vld [vmem:[%s1 + $0xa0] sm:$0xf]
  %v98 = vld [vmem:[%s1 + $0xa4] sm:$0xf]
  %v99 = vld [vmem:[%s1 + $0xa8] sm:$0xf]
  %v100 = vld [vmem:[%s1 + $0xac] sm:$0xf]
  %v101 = vld [vmem:[%s1 + $0xb0] sm:$0xf]
  %v102 = vld [vmem:[%s1 + $0xb4] sm:$0xf]
  %v103 = vld [vmem:[%s1 + $0xb8] sm:$0xf]
  %v104 = vld [vmem:[%s1 + $0xbc] sm:$0xf]
  %v105 = vld [vmem:[%s1 + $0xc0] sm:$0xf]
  %v106 = vld [vmem:[%s1 + $0xc4] sm:$0xf]
  %v107 = vld [vmem:[%s1 + $0xc8] sm:$0xf]
  %v108 = vld [vmem:[%s1 + $0xcc] sm:$0xf]
  %v109 = vld [vmem:[%s1 + $0xd0] sm:$0xf]
  %v110 = vld [vmem:[%s1 + $0xd4] sm:$0xf]
  %v111 = vld [vmem:[%s1 + $0xd8] sm:$0xf]
  %v112 = vld [vmem:[%s1 + $0xdc] sm:$0xf]
  %v113 = vld [vmem:[%s1 + $0xe0] sm:$0xf]
  %v114 = vld [vmem:[%s1 + $0xe4] sm:$0xf]
  %v115 = vld [vmem:[%s1 + $0xe8] sm:$0xf]
  %v116 = vld [vmem:[%s1 + $0xec] sm:$0xf]
  %v117 = vld [vmem:[%s1 + $0xf0] sm:$0xf]
  %v118 = vld [vmem:[%s1 + $0xf4] sm:$0xf]
  %v119 = vld [vmem:[%s1 + $0xf8] sm:$0xf]
  %v120 = vld [vmem:[%s1 + $0xfc] sm:$0xf]
  %v121 = vld [vmem:[%s2] sm:$0x1]
  %v123 = vlaneseq
  %v124 = vshrl.u32 %v123, 7
  %v125 = vsub.s32 0, %v124
  %v126 = vrot.slane %v121, %v125
  %v170 = vunpack.c.l.b16 %v15
  %v171 = vunpack.c.h.b16 %v15
  %v172 = vunpack.c.l.b16 %v16
  %v173 = vunpack.c.h.b16 %v16
  %v174 = vunpack.c.l.b16 %v17
  %v175 = vunpack.c.h.b16 %v17
  %v176 = vunpack.c.l.b16 %v18
  %v177 = vunpack.c.h.b16 %v18
  %v178 = vunpack.c.l.b16 %v19
  %v179 = vunpack.c.h.b16 %v19
  %v180 = vunpack.c.l.b16 %v20
  %v181 = vunpack.c.h.b16 %v20
  %v182 = vunpack.c.l.b16 %v21
  %v183 = vunpack.c.h.b16 %v21
  %v184 = vunpack.c.l.b16 %v22
  %v185 = vunpack.c.h.b16 %v22
  %v186 = vunpack.c.l.b16 %v23
  %v187 = vunpack.c.h.b16 %v23
  %v188 = vunpack.c.l.b16 %v24
  %v189 = vunpack.c.h.b16 %v24
  %v190 = vunpack.c.l.b16 %v25
  %v191 = vunpack.c.h.b16 %v25
  %v192 = vunpack.c.l.b16 %v26
  %v193 = vunpack.c.h.b16 %v26
  %v194 = vunpack.c.l.b16 %v27
  %v195 = vunpack.c.h.b16 %v27
  %v196 = vunpack.c.l.b16 %v28
  %v197 = vunpack.c.h.b16 %v28
  %v198 = vunpack.c.l.b16 %v29
  %v199 = vunpack.c.h.b16 %v29
  %v200 = vunpack.c.l.b16 %v30
  %v201 = vunpack.c.h.b16 %v30
  %v202 = vunpack.c.l.b16 %v31
  %v203 = vunpack.c.h.b16 %v31
  %v204 = vunpack.c.l.b16 %v32
  %v205 = vunpack.c.h.b16 %v32
  %v206 = vunpack.c.l.b16 %v33
  %v207 = vunpack.c.h.b16 %v33
  %v208 = vunpack.c.l.b16 %v34
  %v209 = vunpack.c.h.b16 %v34
  %v210 = vunpack.c.l.b16 %v35
  %v211 = vunpack.c.h.b16 %v35
  %v212 = vunpack.c.l.b16 %v36
  %v213 = vunpack.c.h.b16 %v36
  %v214 = vunpack.c.l.b16 %v37
  %v215 = vunpack.c.h.b16 %v37
  %v216 = vunpack.c.l.b16 %v38
  %v217 = vunpack.c.h.b16 %v38
  %v218 = vunpack.c.l.b16 %v39
  %v219 = vunpack.c.h.b16 %v39
  %v220 = vunpack.c.l.b16 %v40
  %v221 = vunpack.c.h.b16 %v40
  %v222 = vunpack.c.l.b16 %v41
  %v223 = vunpack.c.h.b16 %v41
  %v224 = vunpack.c.l.b16 %v42
  %v225 = vunpack.c.h.b16 %v42
  %v226 = vunpack.c.l.b16 %v43
  %v227 = vunpack.c.h.b16 %v43
  %v228 = vunpack.c.l.b16 %v44
  %v229 = vunpack.c.h.b16 %v44
  %v230 = vunpack.c.l.b16 %v45
  %v231 = vunpack.c.h.b16 %v45
  %v232 = vunpack.c.l.b16 %v46
  %v233 = vunpack.c.h.b16 %v46
  %v234 = vunpack.c.l.b16 %v47
  %v235 = vunpack.c.h.b16 %v47
  %v236 = vunpack.c.l.b16 %v48
  %v237 = vunpack.c.h.b16 %v48
  %v238 = vunpack.c.l.b16 %v49
  %v239 = vunpack.c.h.b16 %v49
  %v240 = vunpack.c.l.b16 %v50
  %v241 = vunpack.c.h.b16 %v50
  %v242 = vunpack.c.l.b16 %v51
  %v243 = vunpack.c.h.b16 %v51
  %v244 = vunpack.c.l.b16 %v52
  %v245 = vunpack.c.h.b16 %v52
  %v246 = vunpack.c.l.b16 %v53
  %v247 = vunpack.c.h.b16 %v53
  %v248 = vunpack.c.l.b16 %v54
  %v249 = vunpack.c.h.b16 %v54
  %v250 = vunpack.c.l.b16 %v55
  %v251 = vunpack.c.h.b16 %v55
  %v252 = vunpack.c.l.b16 %v56
  %v253 = vunpack.c.h.b16 %v56
  %v254 = vpack.c.b16 %v174, %v170
  %v255 = vpack.c.b16 %v175, %v171
  %v256 = vpack.c.b16 %v176, %v172
  %v257 = vpack.c.b16 %v177, %v173
  %v258 = vpack.c.b16 %v182, %v178
  %v259 = vpack.c.b16 %v183, %v179
  %v260 = vpack.c.b16 %v184, %v180
  %v261 = vpack.c.b16 %v185, %v181
  %v262 = vpack.c.b16 %v190, %v186
  %v263 = vpack.c.b16 %v191, %v187
  %v264 = vpack.c.b16 %v192, %v188
  %v265 = vpack.c.b16 %v193, %v189
  %v266 = vpack.c.b16 %v198, %v194
  %v267 = vpack.c.b16 %v199, %v195
  %v268 = vpack.c.b16 %v200, %v196
  %v269 = vpack.c.b16 %v201, %v197
  %v270 = vpack.c.b16 %v206, %v202
  %v271 = vpack.c.b16 %v207, %v203
  %v272 = vpack.c.b16 %v208, %v204
  %v273 = vpack.c.b16 %v209, %v205
  %v274 = vpack.c.b16 %v214, %v210
  %v275 = vpack.c.b16 %v215, %v211
  %v276 = vpack.c.b16 %v216, %v212
  %v277 = vpack.c.b16 %v217, %v213
  %v278 = vpack.c.b16 %v222, %v218
  %v279 = vpack.c.b16 %v223, %v219
  %v280 = vpack.c.b16 %v224, %v220
  %v281 = vpack.c.b16 %v225, %v221
  %v282 = vpack.c.b16 %v230, %v226
  %v283 = vpack.c.b16 %v231, %v227
  %v284 = vpack.c.b16 %v232, %v228
  %v285 = vpack.c.b16 %v233, %v229
  %v286 = vpack.c.b16 %v238, %v234
  %v287 = vpack.c.b16 %v239, %v235
  %v288 = vpack.c.b16 %v240, %v236
  %v289 = vpack.c.b16 %v241, %v237
  %v290 = vpack.c.b16 %v246, %v242
  %v291 = vpack.c.b16 %v247, %v243
  %v292 = vpack.c.b16 %v248, %v244
  %v293 = vpack.c.b16 %v249, %v245
  %v294 = vpack.c.b16 %v250, %v250
  %v295 = vpack.c.b16 %v251, %v251
  %v296 = vpack.c.b16 %v252, %v252
  %v297 = vpack.c.b16 %v253, %v253
  %v406 = vunpack.c.l.b16 %v57
  %v407 = vunpack.c.l.b16 %v58
  %v408 = vunpack.c.l.b16 %v59
  %v409 = vunpack.c.l.b16 %v60
  %v410 = vunpack.c.l.b16 %v61
  %v411 = vunpack.c.l.b16 %v62
  %v412 = vunpack.c.l.b16 %v63
  %v413 = vunpack.c.l.b16 %v64
  %v414 = vunpack.c.l.b16 %v65
  %v415 = vunpack.c.l.b16 %v66
  %v416 = vunpack.c.l.b16 %v67
  %v417 = vunpack.c.l.b16 %v68
  %v418 = vunpack.c.l.b16 %v69
  %v419 = vunpack.c.l.b16 %v70
  %v420 = vunpack.c.l.b16 %v71
  %v421 = vunpack.c.l.b16 %v72
  %v422 = vunpack.c.l.b16 %v73
  %v423 = vunpack.c.l.b16 %v74
  %v424 = vunpack.c.l.b16 %v75
  %v425 = vunpack.c.l.b16 %v76
  %v426 = vunpack.c.l.b16 %v77
  %v427 = vunpack.c.l.b16 %v78
  %v428 = vunpack.c.l.b16 %v79
  %v429 = vunpack.c.l.b16 %v80
  %v430 = vunpack.c.l.b16 %v81
  %v431 = vunpack.c.l.b16 %v82
  %v432 = vunpack.c.l.b16 %v83
  %v433 = vunpack.c.l.b16 %v84
  %v434 = vunpack.c.l.b16 %v85
  %v435 = vunpack.c.l.b16 %v86
  %v436 = vunpack.c.l.b16 %v87
  %v437 = vunpack.c.l.b16 %v88
  %v438 = vunpack.c.l.b16 %v89
  %v439 = vunpack.c.l.b16 %v90
  %v440 = vunpack.c.l.b16 %v91
  %v441 = vunpack.c.l.b16 %v92
  %v442 = vunpack.c.l.b16 %v93
  %v443 = vunpack.c.l.b16 %v94
  %v444 = vunpack.c.l.b16 %v95
  %v445 = vunpack.c.l.b16 %v96
  %v446 = vunpack.c.l.b16 %v97
  %v447 = vunpack.c.l.b16 %v98
  %v448 = vunpack.c.l.b16 %v99
  %v449 = vunpack.c.l.b16 %v100
  %v450 = vunpack.c.l.b16 %v101
  %v451 = vunpack.c.l.b16 %v102
  %v452 = vunpack.c.l.b16 %v103
  %v453 = vunpack.c.l.b16 %v104
  %v454 = vunpack.c.l.b16 %v105
  %v455 = vunpack.c.l.b16 %v106
  %v456 = vunpack.c.l.b16 %v107
  %v457 = vunpack.c.l.b16 %v108
  %v458 = vunpack.c.l.b16 %v109
  %v459 = vunpack.c.l.b16 %v110
  %v460 = vunpack.c.l.b16 %v111
  %v461 = vunpack.c.l.b16 %v112
  %v462 = vunpack.c.l.b16 %v113
  %v463 = vunpack.c.l.b16 %v114
  %v464 = vunpack.c.l.b16 %v115
  %v465 = vunpack.c.l.b16 %v116
  %v466 = vunpack.c.l.b16 %v117
  %v467 = vunpack.c.l.b16 %v118
  %v468 = vunpack.c.l.b16 %v119
  %v469 = vunpack.c.l.b16 %v120
  %v470 = vpack.c.b16 %v407, %v406
  %v471 = vpack.c.b16 %v409, %v408
  %v472 = vpack.c.b16 %v411, %v410
  %v473 = vpack.c.b16 %v413, %v412
  %v474 = vpack.c.b16 %v415, %v414
  %v475 = vpack.c.b16 %v417, %v416
  %v476 = vpack.c.b16 %v419, %v418
  %v477 = vpack.c.b16 %v421, %v420
  %v478 = vpack.c.b16 %v423, %v422
  %v479 = vpack.c.b16 %v425, %v424
  %v480 = vpack.c.b16 %v427, %v426
  %v481 = vpack.c.b16 %v429, %v428
  %v482 = vpack.c.b16 %v431, %v430
  %v483 = vpack.c.b16 %v433, %v432
  %v484 = vpack.c.b16 %v435, %v434
  %v485 = vpack.c.b16 %v437, %v436
  %v486 = vpack.c.b16 %v439, %v438
  %v487 = vpack.c.b16 %v441, %v440
  %v488 = vpack.c.b16 %v443, %v442
  %v489 = vpack.c.b16 %v445, %v444
  %v490 = vpack.c.b16 %v447, %v446
  %v491 = vpack.c.b16 %v449, %v448
  %v492 = vpack.c.b16 %v451, %v450
  %v493 = vpack.c.b16 %v453, %v452
  %v494 = vpack.c.b16 %v455, %v454
  %v495 = vpack.c.b16 %v457, %v456
  %v496 = vpack.c.b16 %v459, %v458
  %v497 = vpack.c.b16 %v461, %v460
  %v498 = vpack.c.b16 %v463, %v462
  %v499 = vpack.c.b16 %v465, %v464
  %v500 = vpack.c.b16 %v467, %v466
  %v501 = vpack.c.b16 %v469, %v468
  %534 = vmatprep.subr.bf16.mxu0 0
  %535 = vmatpush1.bf16.msra.mxu0 %v470
  %536 = vmatprep.subr.bf16.mxu0 0
  %537 = vmatpush1.bf16.msra.mxu0 %v471
  %538 = vmatprep.subr.bf16.mxu0 0
  %539 = vmatpush1.bf16.msra.mxu0 %v472
  %540 = vmatprep.subr.bf16.mxu0 0
  %541 = vmatpush1.bf16.msra.mxu0 %v473
  %542 = vmatprep.subr.bf16.mxu0 0
  %543 = vmatpush1.bf16.msra.mxu0 %v474
  %544 = vmatprep.subr.bf16.mxu0 0
  %545 = vmatpush1.bf16.msra.mxu0 %v475
  %546 = vmatprep.subr.bf16.mxu0 0
  %547 = vmatpush1.bf16.msra.mxu0 %v476
  %548 = vmatprep.subr.bf16.mxu0 0
  %549 = vmatpush1.bf16.msra.mxu0 %v477
  %550 = vmatprep.subr.bf16.mxu0 0
  %551 = vmatpush1.bf16.msra.mxu0 %v478
  %552 = vmatprep.subr.bf16.mxu0 0
  %553 = vmatpush1.bf16.msra.mxu0 %v479
  %554 = vmatprep.subr.bf16.mxu0 0
  %555 = vmatpush1.bf16.msra.mxu0 %v480
  %556 = vmatprep.subr.bf16.mxu0 0
  %557 = vmatpush1.bf16.msra.mxu0 %v481
  %558 = vmatprep.subr.bf16.mxu0 0
  %559 = vmatpush1.bf16.msra.mxu0 %v482
  %560 = vmatprep.subr.bf16.mxu0 0
  %561 = vmatpush1.bf16.msra.mxu0 %v483
  %562 = vmatprep.subr.bf16.mxu0 0
  %563 = vmatpush1.bf16.msra.mxu0 %v484
  %564 = vmatprep.subr.bf16.mxu0 0
  %565 = vmatpush1.bf16.msra.mxu0 %v485
  %566 = vmatprep.mubr.bf16.mxu0 %v255
  %567 = vmatmul.mubr.bf16.gmra.mrb[0].mxu0 %v254
  %v568 = vpop.f32.mrb[0].mxu0
  %v569 = vadd.f32 %v126, %v568
  %v570 = vpop.f32.mrb[0].mxu0
  %v571 = vpop.f32.mrb[0].mxu0
  %v572 = vadd.f32 %v126, %v571
  %v573 = vpop.f32.mrb[0].mxu0
  %574 = vmatprep.mubr.bf16.mxu0 %v259
  %575 = vmatmul.mubr.bf16.gmra.mrb[0].mxu0 %v258
  %v576 = vpop.f32.mrb[0].mxu0
  %v577 = vadd.f32 %v126, %v576
  %v578 = vpop.f32.mrb[0].mxu0
  %v579 = vpop.f32.mrb[0].mxu0
  %v580 = vadd.f32 %v126, %v579
  %v581 = vpop.f32.mrb[0].mxu0
  %582 = vmatprep.mubr.bf16.mxu0 %v263
  %583 = vmatmul.mubr.bf16.gmra.mrb[0].mxu0 %v262
  %v584 = vpop.f32.mrb[0].mxu0
  %v585 = vadd.f32 %v126, %v584
  %v586 = vpop.f32.mrb[0].mxu0
  %v587 = vpop.f32.mrb[0].mxu0
  %v588 = vadd.f32 %v126, %v587
  %v589 = vpop.f32.mrb[0].mxu0
  %590 = vmatprep.mubr.bf16.mxu0 %v267
  %591 = vmatmul.mubr.bf16.gmra.mrb[0].mxu0 %v266
  %v592 = vpop.f32.mrb[0].mxu0
  %v593 = vadd.f32 %v126, %v592
  %v594 = vpop.f32.mrb[0].mxu0
  %v595 = vpop.f32.mrb[0].mxu0
  %v596 = vadd.f32 %v126, %v595
  %v597 = vpop.f32.mrb[0].mxu0
  %598 = vmatprep.mubr.bf16.mxu0 %v271
  %599 = vmatmul.mubr.bf16.gmra.mrb[0].mxu0 %v270
  %v600 = vpop.f32.mrb[0].mxu0
  %v601 = vadd.f32 %v126, %v600
  %v602 = vpop.f32.mrb[0].mxu0
  %v603 = vpop.f32.mrb[0].mxu0
  %v604 = vadd.f32 %v126, %v603
  %v605 = vpop.f32.mrb[0].mxu0
  %606 = vmatprep.mubr.bf16.mxu0 %v275
  %607 = vmatmul.mubr.bf16.gmra.mrb[0].mxu0 %v274
  %v608 = vpop.f32.mrb[0].mxu0
  %v609 = vadd.f32 %v126, %v608
  %v610 = vpop.f32.mrb[0].mxu0
  %v611 = vpop.f32.mrb[0].mxu0
  %v612 = vadd.f32 %v126, %v611
  %v613 = vpop.f32.mrb[0].mxu0
  %614 = vmatprep.mubr.bf16.mxu0 %v279
  %615 = vmatmul.mubr.bf16.gmra.mrb[0].mxu0 %v278
  %v616 = vpop.f32.mrb[0].mxu0
  %v617 = vadd.f32 %v126, %v616
  %v618 = vpop.f32.mrb[0].mxu0
  %v619 = vpop.f32.mrb[0].mxu0
  %v620 = vadd.f32 %v126, %v619
  %v621 = vpop.f32.mrb[0].mxu0
  %622 = vmatprep.mubr.bf16.mxu0 %v283
  %623 = vmatmul.mubr.bf16.gmra.mrb[0].mxu0 %v282
  %v624 = vpop.f32.mrb[0].mxu0
  %v625 = vadd.f32 %v126, %v624
  %v626 = vpop.f32.mrb[0].mxu0
  %v627 = vpop.f32.mrb[0].mxu0
  %v628 = vadd.f32 %v126, %v627
  %v629 = vpop.f32.mrb[0].mxu0
  %630 = vmatprep.mubr.bf16.mxu0 %v287
  %631 = vmatmul.mubr.bf16.gmra.mrb[0].mxu0 %v286
  %v632 = vpop.f32.mrb[0].mxu0
  %v633 = vadd.f32 %v126, %v632
  %v634 = vpop.f32.mrb[0].mxu0
  %v635 = vpop.f32.mrb[0].mxu0
  %v636 = vadd.f32 %v126, %v635
  %v637 = vpop.f32.mrb[0].mxu0
  %638 = vmatprep.mubr.bf16.mxu0 %v291
  %639 = vmatmul.mubr.bf16.gmra.mrb[0].mxu0 %v290
  %v640 = vpop.f32.mrb[0].mxu0
  %v641 = vadd.f32 %v126, %v640
  %v642 = vpop.f32.mrb[0].mxu0
  %v643 = vpop.f32.mrb[0].mxu0
  %v644 = vadd.f32 %v126, %v643
  %v645 = vpop.f32.mrb[0].mxu0
  %646 = vmatprep.mubr.bf16.mxu0 %v295
  %647 = vmatmul.mubr.bf16.gmra.mrb[0].mxu0 %v294
  %v648 = vpop.f32.mrb[0].mxu0
  %v649 = vadd.f32 %v126, %v648
  %v650 = vpop.f32.mrb[0].mxu0
  %v651 = vpop.f32.mrb[0].mxu0
  %v652 = vpop.f32.mrb[0].mxu0
  %653 = vdwg.mxu0
  %654 = vmatprep.subr.bf16.mxu0 0
  %655 = vmatpush1.bf16.msra.mxu0 %v486
  %656 = vmatprep.subr.bf16.mxu0 0
  %657 = vmatpush1.bf16.msra.mxu0 %v487
  %658 = vmatprep.subr.bf16.mxu0 0
  %659 = vmatpush1.bf16.msra.mxu0 %v488
  %660 = vmatprep.subr.bf16.mxu0 0
  %661 = vmatpush1.bf16.msra.mxu0 %v489
  %662 = vmatprep.subr.bf16.mxu0 0
  %663 = vmatpush1.bf16.msra.mxu0 %v490
  %664 = vmatprep.subr.bf16.mxu0 0
  %665 = vmatpush1.bf16.msra.mxu0 %v491
  %666 = vmatprep.subr.bf16.mxu0 0
  %667 = vmatpush1.bf16.msra.mxu0 %v492
  %668 = vmatprep.subr.bf16.mxu0 0
  %669 = vmatpush1.bf16.msra.mxu0 %v493
  %670 = vmatprep.subr.bf16.mxu0 0
  %671 = vmatpush1.bf16.msra.mxu0 %v494
  %672 = vmatprep.subr.bf16.mxu0 0
  %673 = vmatpush1.bf16.msra.mxu0 %v495
  %674 = vmatprep.subr.bf16.mxu0 0
  %675 = vmatpush1.bf16.msra.mxu0 %v496
  %676 = vmatprep.subr.bf16.mxu0 0
  %677 = vmatpush1.bf16.msra.mxu0 %v497
  %678 = vmatprep.subr.bf16.mxu0 0
  %679 = vmatpush1.bf16.msra.mxu0 %v498
  %680 = vmatprep.subr.bf16.mxu0 0
  %681 = vmatpush1.bf16.msra.mxu0 %v499
  %682 = vmatprep.subr.bf16.mxu0 0
  %683 = vmatpush1.bf16.msra.mxu0 %v500
  %684 = vmatprep.subr.bf16.mxu0 0
  %685 = vmatpush1.bf16.msra.mxu0 %v501
  %686 = vmatprep.mubr.bf16.mxu0 %v257
  %687 = vmatmul.mubr.bf16.gmra.mrb[0].mxu0 %v256
  %v688 = vpop.f32.mrb[0].mxu0
  %v689 = vadd.f32 %v569, %v688
  %v690 = vpop.f32.mrb[0].mxu0
  %v691 = vpop.f32.mrb[0].mxu0
  %v692 = vadd.f32 %v572, %v691
  %v693 = vpop.f32.mrb[0].mxu0
  %694 = vmatprep.mubr.bf16.mxu0 %v261
  %695 = vmatmul.mubr.bf16.gmra.mrb[0].mxu0 %v260
  %v696 = vpop.f32.mrb[0].mxu0
  %v697 = vadd.f32 %v577, %v696
  %v698 = vpop.f32.mrb[0].mxu0
  %v699 = vpop.f32.mrb[0].mxu0
  %v700 = vadd.f32 %v580, %v699
  %v701 = vpop.f32.mrb[0].mxu0
  %702 = vmatprep.mubr.bf16.mxu0 %v265
  %703 = vmatmul.mubr.bf16.gmra.mrb[0].mxu0 %v264
  %v704 = vpop.f32.mrb[0].mxu0
  %v705 = vadd.f32 %v585, %v704
  %v706 = vpop.f32.mrb[0].mxu0
  %v707 = vpop.f32.mrb[0].mxu0
  %v708 = vadd.f32 %v588, %v707
  %v709 = vpop.f32.mrb[0].mxu0
  %710 = vmatprep.mubr.bf16.mxu0 %v269
  %711 = vmatmul.mubr.bf16.gmra.mrb[0].mxu0 %v268
  %v712 = vpop.f32.mrb[0].mxu0
  %v713 = vadd.f32 %v593, %v712
  %v714 = vpop.f32.mrb[0].mxu0
  %v715 = vpop.f32.mrb[0].mxu0
  %v716 = vadd.f32 %v596, %v715
  %v717 = vpop.f32.mrb[0].mxu0
  %718 = vmatprep.mubr.bf16.mxu0 %v273
  %719 = vmatmul.mubr.bf16.gmra.mrb[0].mxu0 %v272
  %v720 = vpop.f32.mrb[0].mxu0
  %v721 = vadd.f32 %v601, %v720
  %v722 = vpop.f32.mrb[0].mxu0
  %v723 = vpop.f32.mrb[0].mxu0
  %v724 = vadd.f32 %v604, %v723
  %v725 = vpop.f32.mrb[0].mxu0
  %726 = vmatprep.mubr.bf16.mxu0 %v277
  %727 = vmatmul.mubr.bf16.gmra.mrb[0].mxu0 %v276
  %v728 = vpop.f32.mrb[0].mxu0
  %v729 = vadd.f32 %v609, %v728
  %v730 = vpop.f32.mrb[0].mxu0
  %v731 = vpop.f32.mrb[0].mxu0
  %v732 = vadd.f32 %v612, %v731
  %v733 = vpop.f32.mrb[0].mxu0
  %734 = vmatprep.mubr.bf16.mxu0 %v281
  %735 = vmatmul.mubr.bf16.gmra.mrb[0].mxu0 %v280
  %v736 = vpop.f32.mrb[0].mxu0
  %v737 = vadd.f32 %v617, %v736
  %v738 = vpop.f32.mrb[0].mxu0
  %v739 = vpop.f32.mrb[0].mxu0
  %v740 = vadd.f32 %v620, %v739
  %v741 = vpop.f32.mrb[0].mxu0
  %742 = vmatprep.mubr.bf16.mxu0 %v285
  %743 = vmatmul.mubr.bf16.gmra.mrb[0].mxu0 %v284
  %v744 = vpop.f32.mrb[0].mxu0
  %v745 = vadd.f32 %v625, %v744
  %v746 = vpop.f32.mrb[0].mxu0
  %v747 = vpop.f32.mrb[0].mxu0
  %v748 = vadd.f32 %v628, %v747
  %v749 = vpop.f32.mrb[0].mxu0
  %750 = vmatprep.mubr.bf16.mxu0 %v289
  %751 = vmatmul.mubr.bf16.gmra.mrb[0].mxu0 %v288
  %v752 = vpop.f32.mrb[0].mxu0
  %v753 = vadd.f32 %v633, %v752
  %v754 = vpop.f32.mrb[0].mxu0
  %v755 = vpop.f32.mrb[0].mxu0
  %v756 = vadd.f32 %v636, %v755
  %v757 = vpop.f32.mrb[0].mxu0
  %758 = vmatprep.mubr.bf16.mxu0 %v293
  %759 = vmatmul.mubr.bf16.gmra.mrb[0].mxu0 %v292
  %v760 = vpop.f32.mrb[0].mxu0
  %v761 = vadd.f32 %v641, %v760
  %v762 = vpop.f32.mrb[0].mxu0
  %v763 = vpop.f32.mrb[0].mxu0
  %v764 = vadd.f32 %v644, %v763
  %v765 = vpop.f32.mrb[0].mxu0
  %766 = vmatprep.mubr.bf16.mxu0 %v297
  %767 = vmatmul.mubr.bf16.gmra.mrb[0].mxu0 %v296
  %v768 = vpop.f32.mrb[0].mxu0
  %v769 = vadd.f32 %v649, %v768
  %v770 = vpop.f32.mrb[0].mxu0
  %v771 = vpop.f32.mrb[0].mxu0
  %v772 = vpop.f32.mrb[0].mxu0
  %773 = vdwg.mxu0
  %v774 = vmax.f32 %v689, 0.0
  %v775 = vmax.f32 %v692, 0.0
  %v776 = vmax.f32 %v697, 0.0
  %v777 = vmax.f32 %v700, 0.0
  %v778 = vmax.f32 %v705, 0.0
  %v779 = vmax.f32 %v708, 0.0
  %v780 = vmax.f32 %v713, 0.0
  %v781 = vmax.f32 %v716, 0.0
  %v782 = vmax.f32 %v721, 0.0
  %v783 = vmax.f32 %v724, 0.0
  %v784 = vmax.f32 %v729, 0.0
  %v785 = vmax.f32 %v732, 0.0
  %v786 = vmax.f32 %v737, 0.0
  %v787 = vmax.f32 %v740, 0.0
  %v788 = vmax.f32 %v745, 0.0
  %v789 = vmax.f32 %v748, 0.0
  %v790 = vmax.f32 %v753, 0.0
  %v791 = vmax.f32 %v756, 0.0
  %v792 = vmax.f32 %v761, 0.0
  %v793 = vmax.f32 %v764, 0.0
  %v794 = vmax.f32 %v769, 0.0
  %v795 = vpack.c.bf16 %v775, %v774
  %v796 = vpack.c.bf16 %v777, %v776
  %v797 = vpack.c.bf16 %v779, %v778
  %v798 = vpack.c.bf16 %v781, %v780
  %v799 = vpack.c.bf16 %v783, %v782
  %v800 = vpack.c.bf16 %v785, %v784
  %v801 = vpack.c.bf16 %v787, %v786
  %v802 = vpack.c.bf16 %v789, %v788
  %v803 = vpack.c.bf16 %v791, %v790
  %v804 = vpack.c.bf16 %v793, %v792
  %v805 = vpack.c.bf16 %v794, %v794
  %v817 = vunpack.c.l.b16 %v795
  %v818 = vunpack.c.h.b16 %v795
  %v819 = vunpack.c.l.b16 %v796
  %v820 = vunpack.c.h.b16 %v796
  %v821 = vunpack.c.l.b16 %v797
  %v822 = vunpack.c.h.b16 %v797
  %v823 = vunpack.c.l.b16 %v798
  %v824 = vunpack.c.h.b16 %v798
  %v825 = vunpack.c.l.b16 %v799
  %v826 = vunpack.c.h.b16 %v799
  %v827 = vunpack.c.l.b16 %v800
  %v828 = vunpack.c.h.b16 %v800
  %v829 = vunpack.c.l.b16 %v801
  %v830 = vunpack.c.h.b16 %v801
  %v831 = vunpack.c.l.b16 %v802
  %v832 = vunpack.c.h.b16 %v802
  %v833 = vunpack.c.l.b16 %v803
  %v834 = vunpack.c.h.b16 %v803
  %v835 = vunpack.c.l.b16 %v804
  %v836 = vunpack.c.h.b16 %v804
  %v837 = vunpack.c.l.b16 %v805
  %v838 = vpack.c.b16 %v817, %v817
  %v839 = vpack.c.b16 %v818, %v818
  %v840 = vpack.c.b16 %v819, %v819
  %v841 = vpack.c.b16 %v820, %v820
  %v842 = vpack.c.b16 %v821, %v821
  %v843 = vpack.c.b16 %v822, %v822
  %v844 = vpack.c.b16 %v823, %v823
  %v845 = vpack.c.b16 %v824, %v824
  %v846 = vpack.c.b16 %v825, %v825
  %v847 = vpack.c.b16 %v826, %v826
  %v848 = vpack.c.b16 %v827, %v827
  %v849 = vpack.c.b16 %v828, %v828
  %v850 = vpack.c.b16 %v829, %v829
  %v851 = vpack.c.b16 %v830, %v830
  %v852 = vpack.c.b16 %v831, %v831
  %v853 = vpack.c.b16 %v832, %v832
  %v854 = vpack.c.b16 %v833, %v833
  %v855 = vpack.c.b16 %v834, %v834
  %v856 = vpack.c.b16 %v835, %v835
  %v857 = vpack.c.b16 %v836, %v836
  %v858 = vpack.c.b16 %v837, %v837
  %vm880 = vcmask 519168
  %881 = vst.msk [vmem:[%s3] sm:$0xf] %vm880, %v838
  %882 = vst.msk [vmem:[%s3 + $0x4] sm:$0xf] %vm880, %v839
  %883 = vst.msk [vmem:[%s3 + $0x8] sm:$0xf] %vm880, %v840
  %884 = vst.msk [vmem:[%s3 + $0xc] sm:$0xf] %vm880, %v841
  %885 = vst.msk [vmem:[%s3 + $0x10] sm:$0xf] %vm880, %v842
  %886 = vst.msk [vmem:[%s3 + $0x14] sm:$0xf] %vm880, %v843
  %887 = vst.msk [vmem:[%s3 + $0x18] sm:$0xf] %vm880, %v844
  %888 = vst.msk [vmem:[%s3 + $0x1c] sm:$0xf] %vm880, %v845
  %889 = vst.msk [vmem:[%s3 + $0x20] sm:$0xf] %vm880, %v846
  %890 = vst.msk [vmem:[%s3 + $0x24] sm:$0xf] %vm880, %v847
  %891 = vst.msk [vmem:[%s3 + $0x28] sm:$0xf] %vm880, %v848
  %892 = vst.msk [vmem:[%s3 + $0x2c] sm:$0xf] %vm880, %v849
  %893 = vst.msk [vmem:[%s3 + $0x30] sm:$0xf] %vm880, %v850
  %894 = vst.msk [vmem:[%s3 + $0x34] sm:$0xf] %vm880, %v851
  %895 = vst.msk [vmem:[%s3 + $0x38] sm:$0xf] %vm880, %v852
  %896 = vst.msk [vmem:[%s3 + $0x3c] sm:$0xf] %vm880, %v853
  %897 = vst.msk [vmem:[%s3 + $0x40] sm:$0xf] %vm880, %v854
  %898 = vst.msk [vmem:[%s3 + $0x44] sm:$0xf] %vm880, %v855
  %899 = vst.msk [vmem:[%s3 + $0x48] sm:$0xf] %vm880, %v856
  %900 = vst.msk [vmem:[%s3 + $0x4c] sm:$0xf] %vm880, %v857
  %vm901 = vcmask 516096
  %902 = vst.msk [vmem:[%s3 + $0x50] sm:$0x1] %vm901, %v858
  // Predicated region
  $region14: #{actor_forward.5} parent=0 // pred_check
    _
  $region15: #{actor_forward.5} parent=0 // pred_check_branch
    %904 = sbr.rel (0) target = $region17
  $region16: #{actor_forward.5} parent=0 // pred_region
    _
  $region17: #{actor_forward.5} parent=0 // pred_fallthru
    _
  // Predicated region
  $region18: #{actor_forward.5} parent=0 // pred_check
    _
  $region19: #{actor_forward.5} parent=0 // pred_check_branch
    %906 = sbr.rel (0) target = $region21
  $region20: #{actor_forward.5} parent=0 // pred_region
    _
  $region21: #{actor_forward.5} parent=0 // pred_fallthru
    _

// kernel: actor_forward.6
$region0: #{actor_forward.6}
  #allocation0 [shape = 'u32[]', space=smem, size = 0x4, offset = 0x4, fixed_abs, tag = 'smem constant byte address 0x4 - core index']
  #allocation1 [shape = 'u32[144,128]{1,0:T(1,128)}', space=vmem, size = 0x12000, scoped, tag = 'internal scratch']
  %s0 = inlined_call_operand.vmem [shape: bf16[98,576], index: 0, kind: input, shape index: {}]
  %s1 = inlined_call_operand.vmem [shape: bf16[576,64], index: 1, kind: input, shape index: {}]
  %s2 = inlined_call_operand.vmem [shape: f32[1,64], index: 2, kind: input, shape index: {}]
  %s3 = inlined_call_operand.vmem [shape: bf16[98,64], index: 3, kind: output, shape index: {}]
  %s4 = sld [smem:[#allocation0]]
  $region22: #{actor_forward.6} parent=0
    _
  %s6 = ssub.s32 1, %s4
  %s7 = scalar_select 0, %s6, %s4
  // Predicated region
  $region2: #{actor_forward.6} parent=0 // pred_check
    _
  $region3: #{actor_forward.6} parent=0 // pred_check_branch
    %9 = sbr.rel (0) target = $region5
  $region4: #{actor_forward.6} parent=0 // pred_region
    _
  $region5: #{actor_forward.6} parent=0 // pred_fallthru
    _
  // Predicated region
  $region6: #{actor_forward.6} parent=0 // pred_check
    _
  $region7: #{actor_forward.6} parent=0 // pred_check_branch
    %11 = sbr.rel (0) target = $region9
  $region8: #{actor_forward.6} parent=0 // pred_region
    _
  $region9: #{actor_forward.6} parent=0 // pred_fallthru
    _
  // Predicated region
  $region10: #{actor_forward.6} parent=0 // pred_check
    _
  $region11: #{actor_forward.6} parent=0 // pred_check_branch
    %13 = sbr.rel (0) target = $region13
  $region12: #{actor_forward.6} parent=0 // pred_region
    _
  $region13: #{actor_forward.6} parent=0 // pred_fallthru
    _
  %v15 = vld [vmem:[%s0] sm:$0xff]
  %v16 = vld [vmem:[%s0 + $0x8] sm:$0xff]
  %v17 = vld [vmem:[%s0 + $0x10] sm:$0xf]
  %v18 = vld [vmem:[%s0 + $0x14] sm:$0xff]
  %v19 = vld [vmem:[%s0 + $0x1c] sm:$0xff]
  %v20 = vld [vmem:[%s0 + $0x24] sm:$0xf]
  %v21 = vld [vmem:[%s0 + $0x28] sm:$0xff]
  %v22 = vld [vmem:[%s0 + $0x30] sm:$0xff]
  %v23 = vld [vmem:[%s0 + $0x38] sm:$0xf]
  %v24 = vld [vmem:[%s0 + $0x3c] sm:$0xff]
  %v25 = vld [vmem:[%s0 + $0x44] sm:$0xff]
  %v26 = vld [vmem:[%s0 + $0x4c] sm:$0xf]
  %v27 = vld [vmem:[%s0 + $0x50] sm:$0xff]
  %v28 = vld [vmem:[%s0 + $0x58] sm:$0xff]
  %v29 = vld [vmem:[%s0 + $0x60] sm:$0xf]
  %v30 = vld [vmem:[%s0 + $0x64] sm:$0xff]
  %v31 = vld [vmem:[%s0 + $0x6c] sm:$0xff]
  %v32 = vld [vmem:[%s0 + $0x74] sm:$0xf]
  %v33 = vld [vmem:[%s0 + $0x78] sm:$0xff]
  %v34 = vld [vmem:[%s0 + $0x80] sm:$0xff]
  %v35 = vld [vmem:[%s0 + $0x88] sm:$0xf]
  %v36 = vld [vmem:[%s0 + $0x8c] sm:$0xff]
  %v37 = vld [vmem:[%s0 + $0x94] sm:$0xff]
  %v38 = vld [vmem:[%s0 + $0x9c] sm:$0xf]
  %v39 = vld [vmem:[%s0 + $0xa0] sm:$0xff]
  %v40 = vld [vmem:[%s0 + $0xa8] sm:$0xff]
  %v41 = vld [vmem:[%s0 + $0xb0] sm:$0xf]
  %v42 = vld [vmem:[%s0 + $0xb4] sm:$0xff]
  %v43 = vld [vmem:[%s0 + $0xbc] sm:$0xff]
  %v44 = vld [vmem:[%s0 + $0xc4] sm:$0xf]
  %v45 = vld [vmem:[%s0 + $0xc8] sm:$0xff]
  %v46 = vld [vmem:[%s0 + $0xd0] sm:$0xff]
  %v47 = vld [vmem:[%s0 + $0xd8] sm:$0xf]
  %v48 = vld [vmem:[%s0 + $0xdc] sm:$0xff]
  %v49 = vld [vmem:[%s0 + $0xe4] sm:$0xff]
  %v50 = vld [vmem:[%s0 + $0xec] sm:$0xf]
  %v51 = vld [vmem:[%s0 + $0xf0] sm:$0x11]
  %v52 = vld [vmem:[%s0 + $0xf8] sm:$0x11]
  %v53 = vld [vmem:[%s0 + $0x100] sm:$0x1]
  %v54 = vld [vmem:[%s1] sm:$0xf]
  %v55 = vld [vmem:[%s1 + $0x4] sm:$0xf]
  %v56 = vld [vmem:[%s1 + $0x8] sm:$0xf]
  %v57 = vld [vmem:[%s1 + $0xc] sm:$0xf]
  %v58 = vld [vmem:[%s1 + $0x10] sm:$0xf]
  %v59 = vld [vmem:[%s1 + $0x14] sm:$0xf]
  %v60 = vld [vmem:[%s1 + $0x18] sm:$0xf]
  %v61 = vld [vmem:[%s1 + $0x1c] sm:$0xf]
  %v62 = vld [vmem:[%s1 + $0x20] sm:$0xf]
  %v63 = vld [vmem:[%s1 + $0x24] sm:$0xf]
  %v64 = vld [vmem:[%s1 + $0x28] sm:$0xf]
  %v65 = vld [vmem:[%s1 + $0x2c] sm:$0xf]
  %v66 = vld [vmem:[%s1 + $0x30] sm:$0xf]
  %v67 = vld [vmem:[%s1 + $0x34] sm:$0xf]
  %v68 = vld [vmem:[%s1 + $0x38] sm:$0xf]
  %v69 = vld [vmem:[%s1 + $0x3c] sm:$0xf]
  %v70 = vld [vmem:[%s1 + $0x40] sm:$0xf]
  %v71 = vld [vmem:[%s1 + $0x44] sm:$0xf]
  %v72 = vld [vmem:[%s1 + $0x48] sm:$0xf]
  %v73 = vld [vmem:[%s1 + $0x4c] sm:$0xf]
  %v74 = vld [vmem:[%s1 + $0x50] sm:$0xf]
  %v75 = vld [vmem:[%s1 + $0x54] sm:$0xf]
  %v76 = vld [vmem:[%s1 + $0x58] sm:$0xf]
  %v77 = vld [vmem:[%s1 + $0x5c] sm:$0xf]
  %v78 = vld [vmem:[%s1 + $0x60] sm:$0xf]
  %v79 = vld [vmem:[%s1 + $0x64] sm:$0xf]
  %v80 = vld [vmem:[%s1 + $0x68] sm:$0xf]
  %v81 = vld [vmem:[%s1 + $0x6c] sm:$0xf]
  %v82 = vld [vmem:[%s1 + $0x70] sm:$0xf]
  %v83 = vld [vmem:[%s1 + $0x74] sm:$0xf]
  %v84 = vld [vmem:[%s1 + $0x78] sm:$0xf]
  %v85 = vld [vmem:[%s1 + $0x7c] sm:$0xf]
  %v86 = vld [vmem:[%s1 + $0x80] sm:$0xf]
  %v87 = vld [vmem:[%s1 + $0x84] sm:$0xf]
  %v88 = vld [vmem:[%s1 + $0x88] sm:$0xf]
  %v89 = vld [vmem:[%s1 + $0x8c] sm:$0xf]
  %v90 = vld [vmem:[%s1 + $0x90] sm:$0xf]
  %v91 = vld [vmem:[%s1 + $0x94] sm:$0xf]
  %v92 = vld [vmem:[%s1 + $0x98] sm:$0xf]
  %v93 = vld [vmem:[%s1 + $0x9c] sm:$0xf]
  %v94 = vld [vmem:[%s1 + $0xa0] sm:$0xf]
  %v95 = vld [vmem:[%s1 + $0xa4] sm:$0xf]
  %v96 = vld [vmem:[%s1 + $0xa8] sm:$0xf]
  %v97 = vld [vmem:[%s1 + $0xac] sm:$0xf]
  %v98 = vld [vmem:[%s1 + $0xb0] sm:$0xf]
  %v99 = vld [vmem:[%s1 + $0xb4] sm:$0xf]
  %v100 = vld [vmem:[%s1 + $0xb8] sm:$0xf]
  %v101 = vld [vmem:[%s1 + $0xbc] sm:$0xf]
  %v102 = vld [vmem:[%s1 + $0xc0] sm:$0xf]
  %v103 = vld [vmem:[%s1 + $0xc4] sm:$0xf]
  %v104 = vld [vmem:[%s1 + $0xc8] sm:$0xf]
  %v105 = vld [vmem:[%s1 + $0xcc] sm:$0xf]
  %v106 = vld [vmem:[%s1 + $0xd0] sm:$0xf]
  %v107 = vld [vmem:[%s1 + $0xd4] sm:$0xf]
  %v108 = vld [vmem:[%s1 + $0xd8] sm:$0xf]
  %v109 = vld [vmem:[%s1 + $0xdc] sm:$0xf]
  %v110 = vld [vmem:[%s1 + $0xe0] sm:$0xf]
  %v111 = vld [vmem:[%s1 + $0xe4] sm:$0xf]
  %v112 = vld [vmem:[%s1 + $0xe8] sm:$0xf]
  %v113 = vld [vmem:[%s1 + $0xec] sm:$0xf]
  %v114 = vld [vmem:[%s1 + $0xf0] sm:$0xf]
  %v115 = vld [vmem:[%s1 + $0xf4] sm:$0xf]
  %v116 = vld [vmem:[%s1 + $0xf8] sm:$0xf]
  %v117 = vld [vmem:[%s1 + $0xfc] sm:$0xf]
  %v118 = vld [vmem:[%s1 + $0x100] sm:$0xf]
  %v119 = vld [vmem:[%s1 + $0x104] sm:$0xf]
  %v120 = vld [vmem:[%s1 + $0x108] sm:$0xf]
  %v121 = vld [vmem:[%s1 + $0x10c] sm:$0xf]
  %v122 = vld [vmem:[%s1 + $0x110] sm:$0xf]
  %v123 = vld [vmem:[%s1 + $0x114] sm:$0xf]
  %v124 = vld [vmem:[%s1 + $0x118] sm:$0xf]
  %v125 = vld [vmem:[%s1 + $0x11c] sm:$0xf]
  %v126 = vld [vmem:[%s2] sm:$0x1]
  %v128 = vlaneseq
  %v129 = vshrl.u32 %v128, 7
  %v130 = vsub.s32 0, %v129
  %v131 = vrot.slane %v126, %v130
  %v172 = vunpack.c.l.b16 %v15
  %v173 = vunpack.c.h.b16 %v15
  %v174 = vunpack.c.l.b16 %v16
  %v175 = vunpack.c.h.b16 %v16
  %v176 = vunpack.c.l.b16 %v17
  %v177 = vunpack.c.l.b16 %v18
  %v178 = vunpack.c.h.b16 %v18
  %v179 = vunpack.c.l.b16 %v19
  %v180 = vunpack.c.h.b16 %v19
  %v181 = vunpack.c.l.b16 %v20
  %v182 = vunpack.c.l.b16 %v21
  %v183 = vunpack.c.h.b16 %v21
  %v184 = vunpack.c.l.b16 %v22
  %v185 = vunpack.c.h.b16 %v22
  %v186 = vunpack.c.l.b16 %v23
  %v187 = vunpack.c.l.b16 %v24
  %v188 = vunpack.c.h.b16 %v24
  %v189 = vunpack.c.l.b16 %v25
  %v190 = vunpack.c.h.b16 %v25
  %v191 = vunpack.c.l.b16 %v26
  %v192 = vunpack.c.l.b16 %v27
  %v193 = vunpack.c.h.b16 %v27
  %v194 = vunpack.c.l.b16 %v28
  %v195 = vunpack.c.h.b16 %v28
  %v196 = vunpack.c.l.b16 %v29
  %v197 = vunpack.c.l.b16 %v30
  %v198 = vunpack.c.h.b16 %v30
  %v199 = vunpack.c.l.b16 %v31
  %v200 = vunpack.c.h.b16 %v31
  %v201 = vunpack.c.l.b16 %v32
  %v202 = vunpack.c.l.b16 %v33
  %v203 = vunpack.c.h.b16 %v33
  %v204 = vunpack.c.l.b16 %v34
  %v205 = vunpack.c.h.b16 %v34
  %v206 = vunpack.c.l.b16 %v35
  %v207 = vunpack.c.l.b16 %v36
  %v208 = vunpack.c.h.b16 %v36
  %v209 = vunpack.c.l.b16 %v37
  %v210 = vunpack.c.h.b16 %v37
  %v211 = vunpack.c.l.b16 %v38
  %v212 = vunpack.c.l.b16 %v39
  %v213 = vunpack.c.h.b16 %v39
  %v214 = vunpack.c.l.b16 %v40
  %v215 = vunpack.c.h.b16 %v40
  %v216 = vunpack.c.l.b16 %v41
  %v217 = vunpack.c.l.b16 %v42
  %v218 = vunpack.c.h.b16 %v42
  %v219 = vunpack.c.l.b16 %v43
  %v220 = vunpack.c.h.b16 %v43
  %v221 = vunpack.c.l.b16 %v44
  %v222 = vunpack.c.l.b16 %v45
  %v223 = vunpack.c.h.b16 %v45
  %v224 = vunpack.c.l.b16 %v46
  %v225 = vunpack.c.h.b16 %v46
  %v226 = vunpack.c.l.b16 %v47
  %v227 = vunpack.c.l.b16 %v48
  %v228 = vunpack.c.h.b16 %v48
  %v229 = vunpack.c.l.b16 %v49
  %v230 = vunpack.c.h.b16 %v49
  %v231 = vunpack.c.l.b16 %v50
  %v232 = vunpack.c.l.b16 %v51
  %v233 = vunpack.c.h.b16 %v51
  %v234 = vunpack.c.l.b16 %v52
  %v235 = vunpack.c.h.b16 %v52
  %v236 = vunpack.c.l.b16 %v53
  %v237 = vpack.c.b16 %v177, %v172
  %v238 = vpack.c.b16 %v178, %v173
  %v239 = vpack.c.b16 %v179, %v174
  %v240 = vpack.c.b16 %v180, %v175
  %v241 = vpack.c.b16 %v181, %v176
  %v242 = vpack.c.b16 %v187, %v182
  %v243 = vpack.c.b16 %v188, %v183
  %v244 = vpack.c.b16 %v189, %v184
  %v245 = vpack.c.b16 %v190, %v185
  %v246 = vpack.c.b16 %v191, %v186
  %v247 = vpack.c.b16 %v197, %v192
  %v248 = vpack.c.b16 %v198, %v193
  %v249 = vpack.c.b16 %v199, %v194
  %v250 = vpack.c.b16 %v200, %v195
  %v251 = vpack.c.b16 %v201, %v196
  %v252 = vpack.c.b16 %v207, %v202
  %v253 = vpack.c.b16 %v208, %v203
  %v254 = vpack.c.b16 %v209, %v204
  %v255 = vpack.c.b16 %v210, %v205
  %v256 = vpack.c.b16 %v211, %v206
  %v257 = vpack.c.b16 %v217, %v212
  %v258 = vpack.c.b16 %v218, %v213
  %v259 = vpack.c.b16 %v219, %v214
  %v260 = vpack.c.b16 %v220, %v215
  %v261 = vpack.c.b16 %v221, %v216
  %v262 = vpack.c.b16 %v227, %v222
  %v263 = vpack.c.b16 %v228, %v223
  %v264 = vpack.c.b16 %v229, %v224
  %v265 = vpack.c.b16 %v230, %v225
  %v266 = vpack.c.b16 %v231, %v226
  %v267 = vpack.c.b16 %v232, %v232
  %v268 = vpack.c.b16 %v233, %v233
  %v269 = vpack.c.b16 %v234, %v234
  %v270 = vpack.c.b16 %v235, %v235
  %v271 = vpack.c.b16 %v236, %v236
  %v372 = vunpack.c.l.b16 %v54
  %v373 = vunpack.c.l.b16 %v55
  %v374 = vunpack.c.l.b16 %v56
  %v375 = vunpack.c.l.b16 %v57
  %v376 = vunpack.c.l.b16 %v58
  %v377 = vunpack.c.l.b16 %v59
  %v378 = vunpack.c.l.b16 %v60
  %v379 = vunpack.c.l.b16 %v61
  %v380 = vunpack.c.l.b16 %v62
  %v381 = vunpack.c.l.b16 %v63
  %v382 = vunpack.c.l.b16 %v64
  %v383 = vunpack.c.l.b16 %v65
  %v384 = vunpack.c.l.b16 %v66
  %v385 = vunpack.c.l.b16 %v67
  %v386 = vunpack.c.l.b16 %v68
  %v387 = vunpack.c.l.b16 %v69
  %v388 = vunpack.c.l.b16 %v70
  %v389 = vunpack.c.l.b16 %v71
  %v390 = vunpack.c.l.b16 %v72
  %v391 = vunpack.c.l.b16 %v73
  %v392 = vunpack.c.l.b16 %v74
  %v393 = vunpack.c.l.b16 %v75
  %v394 = vunpack.c.l.b16 %v76
  %v395 = vunpack.c.l.b16 %v77
  %v396 = vunpack.c.l.b16 %v78
  %v397 = vunpack.c.l.b16 %v79
  %v398 = vunpack.c.l.b16 %v80
  %v399 = vunpack.c.l.b16 %v81
  %v400 = vunpack.c.l.b16 %v82
  %v401 = vunpack.c.l.b16 %v83
  %v402 = vunpack.c.l.b16 %v84
  %v403 = vunpack.c.l.b16 %v85
  %v404 = vunpack.c.l.b16 %v86
  %v405 = vunpack.c.l.b16 %v87
  %v406 = vunpack.c.l.b16 %v88
  %v407 = vunpack.c.l.b16 %v89
  %v408 = vunpack.c.l.b16 %v90
  %v409 = vunpack.c.l.b16 %v91
  %v410 = vunpack.c.l.b16 %v92
  %v411 = vunpack.c.l.b16 %v93
  %v412 = vunpack.c.l.b16 %v94
  %v413 = vunpack.c.l.b16 %v95
  %v414 = vunpack.c.l.b16 %v96
  %v415 = vunpack.c.l.b16 %v97
  %v416 = vunpack.c.l.b16 %v98
  %v417 = vunpack.c.l.b16 %v99
  %v418 = vunpack.c.l.b16 %v100
  %v419 = vunpack.c.l.b16 %v101
  %v420 = vunpack.c.l.b16 %v102
  %v421 = vunpack.c.l.b16 %v103
  %v422 = vunpack.c.l.b16 %v104
  %v423 = vunpack.c.l.b16 %v105
  %v424 = vunpack.c.l.b16 %v106
  %v425 = vunpack.c.l.b16 %v107
  %v426 = vunpack.c.l.b16 %v108
  %v427 = vunpack.c.l.b16 %v109
  %v428 = vunpack.c.l.b16 %v110
  %v429 = vunpack.c.l.b16 %v111
  %v430 = vunpack.c.l.b16 %v112
  %v431 = vunpack.c.l.b16 %v113
  %v432 = vunpack.c.l.b16 %v114
  %v433 = vunpack.c.l.b16 %v115
  %v434 = vunpack.c.l.b16 %v116
  %v435 = vunpack.c.l.b16 %v117
  %v436 = vunpack.c.l.b16 %v118
  %v437 = vunpack.c.l.b16 %v119
  %v438 = vunpack.c.l.b16 %v120
  %v439 = vunpack.c.l.b16 %v121
  %v440 = vunpack.c.l.b16 %v122
  %v441 = vunpack.c.l.b16 %v123
  %v442 = vunpack.c.l.b16 %v124
  %v443 = vunpack.c.l.b16 %v125
  %v444 = vpack.c.b16 %v373, %v372
  %v445 = vpack.c.b16 %v375, %v374
  %v446 = vpack.c.b16 %v377, %v376
  %v447 = vpack.c.b16 %v379, %v378
  %v448 = vpack.c.b16 %v381, %v380
  %v449 = vpack.c.b16 %v383, %v382
  %v450 = vpack.c.b16 %v385, %v384
  %v451 = vpack.c.b16 %v387, %v386
  %v452 = vpack.c.b16 %v389, %v388
  %v453 = vpack.c.b16 %v391, %v390
  %v454 = vpack.c.b16 %v393, %v392
  %v455 = vpack.c.b16 %v395, %v394
  %v456 = vpack.c.b16 %v397, %v396
  %v457 = vpack.c.b16 %v399, %v398
  %v458 = vpack.c.b16 %v401, %v400
  %v459 = vpack.c.b16 %v403, %v402
  %v460 = vpack.c.b16 %v405, %v404
  %v461 = vpack.c.b16 %v407, %v406
  %v462 = vpack.c.b16 %v409, %v408
  %v463 = vpack.c.b16 %v411, %v410
  %v464 = vpack.c.b16 %v413, %v412
  %v465 = vpack.c.b16 %v415, %v414
  %v466 = vpack.c.b16 %v417, %v416
  %v467 = vpack.c.b16 %v419, %v418
  %v468 = vpack.c.b16 %v421, %v420
  %v469 = vpack.c.b16 %v423, %v422
  %v470 = vpack.c.b16 %v425, %v424
  %v471 = vpack.c.b16 %v427, %v426
  %v472 = vpack.c.b16 %v429, %v428
  %v473 = vpack.c.b16 %v431, %v430
  %v474 = vpack.c.b16 %v433, %v432
  %v475 = vpack.c.b16 %v435, %v434
  %v476 = vpack.c.b16 %v437, %v436
  %v477 = vpack.c.b16 %v439, %v438
  %v478 = vpack.c.b16 %v441, %v440
  %v479 = vpack.c.b16 %v443, %v442
  %vm516 = vcmask 523264
  %v518 = vsel %vm516, %v241, 0
  %v521 = vsel %vm516, %v246, 0
  %v524 = vsel %vm516, %v251, 0
  %v527 = vsel %vm516, %v256, 0
  %v530 = vsel %vm516, %v261, 0
  %v533 = vsel %vm516, %v266, 0
  %v536 = vsel %vm516, %v271, 0
  %538 = vmatprep.subr.bf16.mxu0 0
  %539 = vmatpush1.bf16.msra.mxu0 %v444
  %540 = vmatprep.subr.bf16.mxu0 0
  %541 = vmatpush1.bf16.msra.mxu0 %v445
  %542 = vmatprep.subr.bf16.mxu0 0
  %543 = vmatpush1.bf16.msra.mxu0 %v446
  %544 = vmatprep.subr.bf16.mxu0 0
  %545 = vmatpush1.bf16.msra.mxu0 %v447
  %546 = vmatprep.subr.bf16.mxu0 0
  %547 = vmatpush1.bf16.msra.mxu0 %v448
  %548 = vmatprep.subr.bf16.mxu0 0
  %549 = vmatpush1.bf16.msra.mxu0 %v449
  %550 = vmatprep.subr.bf16.mxu0 0
  %551 = vmatpush1.bf16.msra.mxu0 %v450
  %552 = vmatprep.subr.bf16.mxu0 0
  %553 = vmatpush1.bf16.msra.mxu0 %v451
  %554 = vmatprep.subr.bf16.mxu0 0
  %555 = vmatpush1.bf16.msra.mxu0 %v452
  %556 = vmatprep.subr.bf16.mxu0 0
  %557 = vmatpush1.bf16.msra.mxu0 %v453
  %558 = vmatprep.subr.bf16.mxu0 0
  %559 = vmatpush1.bf16.msra.mxu0 %v454
  %560 = vmatprep.subr.bf16.mxu0 0
  %561 = vmatpush1.bf16.msra.mxu0 %v455
  %562 = vmatprep.subr.bf16.mxu0 0
  %563 = vmatpush1.bf16.msra.mxu0 %v456
  %564 = vmatprep.subr.bf16.mxu0 0
  %565 = vmatpush1.bf16.msra.mxu0 %v457
  %566 = vmatprep.subr.bf16.mxu0 0
  %567 = vmatpush1.bf16.msra.mxu0 %v458
  %568 = vmatprep.subr.bf16.mxu0 0
  %569 = vmatpush1.bf16.msra.mxu0 %v459
  %570 = vmatprep.mubr.bf16.mxu0 %v238
  %571 = vmatmul.mubr.bf16.gmra.mrb[0].mxu0 %v237
  %v572 = vpop.f32.mrb[0].mxu0
  %v573 = vadd.f32 %v131, %v572
  %v574 = vpop.f32.mrb[0].mxu0
  %v575 = vpop.f32.mrb[0].mxu0
  %v576 = vadd.f32 %v131, %v575
  %v577 = vpop.f32.mrb[0].mxu0
  %578 = vmatprep.mubr.bf16.mxu0 %v243
  %579 = vmatmul.mubr.bf16.gmra.mrb[0].mxu0 %v242
  %v580 = vpop.f32.mrb[0].mxu0
  %v581 = vadd.f32 %v131, %v580
  %v582 = vpop.f32.mrb[0].mxu0
  %v583 = vpop.f32.mrb[0].mxu0
  %v584 = vadd.f32 %v131, %v583
  %v585 = vpop.f32.mrb[0].mxu0
  %586 = vmatprep.mubr.bf16.mxu0 %v248
  %587 = vmatmul.mubr.bf16.gmra.mrb[0].mxu0 %v247
  %v588 = vpop.f32.mrb[0].mxu0
  %v589 = vadd.f32 %v131, %v588
  %v590 = vpop.f32.mrb[0].mxu0
  %v591 = vpop.f32.mrb[0].mxu0
  %v592 = vadd.f32 %v131, %v591
  %v593 = vpop.f32.mrb[0].mxu0
  %594 = vmatprep.mubr.bf16.mxu0 %v253
  %595 = vmatmul.mubr.bf16.gmra.mrb[0].mxu0 %v252
  %v596 = vpop.f32.mrb[0].mxu0
  %v597 = vadd.f32 %v131, %v596
  %v598 = vpop.f32.mrb[0].mxu0
  %v599 = vpop.f32.mrb[0].mxu0
  %v600 = vadd.f32 %v131, %v599
  %v601 = vpop.f32.mrb[0].mxu0
  %602 = vmatprep.mubr.bf16.mxu0 %v258
  %603 = vmatmul.mubr.bf16.gmra.mrb[0].mxu0 %v257
  %v604 = vpop.f32.mrb[0].mxu0
  %v605 = vadd.f32 %v131, %v604
  %v606 = vpop.f32.mrb[0].mxu0
  %v607 = vpop.f32.mrb[0].mxu0
  %v608 = vadd.f32 %v131, %v607
  %v609 = vpop.f32.mrb[0].mxu0
  %610 = vmatprep.mubr.bf16.mxu0 %v263
  %611 = vmatmul.mubr.bf16.gmra.mrb[0].mxu0 %v262
  %v612 = vpop.f32.mrb[0].mxu0
  %v613 = vadd.f32 %v131, %v612
  %v614 = vpop.f32.mrb[0].mxu0
  %v615 = vpop.f32.mrb[0].mxu0
  %v616 = vadd.f32 %v131, %v615
  %v617 = vpop.f32.mrb[0].mxu0
  %618 = vmatprep.mubr.bf16.mxu0 %v268
  %619 = vmatmul.mubr.bf16.gmra.mrb[0].mxu0 %v267
  %v620 = vpop.f32.mrb[0].mxu0
  %v621 = vadd.f32 %v131, %v620
  %v622 = vpop.f32.mrb[0].mxu0
  %v623 = vpop.f32.mrb[0].mxu0
  %v624 = vpop.f32.mrb[0].mxu0
  %625 = vdwg.mxu0
  %626 = vmatprep.subr.bf16.mxu0 0
  %627 = vmatpush1.bf16.msra.mxu0 %v460
  %628 = vmatprep.subr.bf16.mxu0 0
  %629 = vmatpush1.bf16.msra.mxu0 %v461
  %630 = vmatprep.subr.bf16.mxu0 0
  %631 = vmatpush1.bf16.msra.mxu0 %v462
  %632 = vmatprep.subr.bf16.mxu0 0
  %633 = vmatpush1.bf16.msra.mxu0 %v463
  %634 = vmatprep.subr.bf16.mxu0 0
  %635 = vmatpush1.bf16.msra.mxu0 %v464
  %636 = vmatprep.subr.bf16.mxu0 0
  %637 = vmatpush1.bf16.msra.mxu0 %v465
  %638 = vmatprep.subr.bf16.mxu0 0
  %639 = vmatpush1.bf16.msra.mxu0 %v466
  %640 = vmatprep.subr.bf16.mxu0 0
  %641 = vmatpush1.bf16.msra.mxu0 %v467
  %642 = vmatprep.subr.bf16.mxu0 0
  %643 = vmatpush1.bf16.msra.mxu0 %v468
  %644 = vmatprep.subr.bf16.mxu0 0
  %645 = vmatpush1.bf16.msra.mxu0 %v469
  %646 = vmatprep.subr.bf16.mxu0 0
  %647 = vmatpush1.bf16.msra.mxu0 %v470
  %648 = vmatprep.subr.bf16.mxu0 0
  %649 = vmatpush1.bf16.msra.mxu0 %v471
  %650 = vmatprep.subr.bf16.mxu0 0
  %651 = vmatpush1.bf16.msra.mxu0 %v472
  %652 = vmatprep.subr.bf16.mxu0 0
  %653 = vmatpush1.bf16.msra.mxu0 %v473
  %654 = vmatprep.subr.bf16.mxu0 0
  %655 = vmatpush1.bf16.msra.mxu0 %v474
  %656 = vmatprep.subr.bf16.mxu0 0
  %657 = vmatpush1.bf16.msra.mxu0 %v475
  %658 = vmatprep.mubr.bf16.mxu0 %v240
  %659 = vmatmul.mubr.bf16.gmra.mrb[0].mxu0 %v239
  %v660 = vpop.f32.mrb[0].mxu0
  %v661 = vadd.f32 %v573, %v660
  %v662 = vpop.f32.mrb[0].mxu0
  %v663 = vpop.f32.mrb[0].mxu0
  %v664 = vadd.f32 %v576, %v663
  %v665 = vpop.f32.mrb[0].mxu0
  %666 = vmatprep.mubr.bf16.mxu0 %v245
  %667 = vmatmul.mubr.bf16.gmra.mrb[0].mxu0 %v244
  %v668 = vpop.f32.mrb[0].mxu0
  %v669 = vadd.f32 %v581, %v668
  %v670 = vpop.f32.mrb[0].mxu0
  %v671 = vpop.f32.mrb[0].mxu0
  %v672 = vadd.f32 %v584, %v671
  %v673 = vpop.f32.mrb[0].mxu0
  %674 = vmatprep.mubr.bf16.mxu0 %v250
  %675 = vmatmul.mubr.bf16.gmra.mrb[0].mxu0 %v249
  %v676 = vpop.f32.mrb[0].mxu0
  %v677 = vadd.f32 %v589, %v676
  %v678 = vpop.f32.mrb[0].mxu0
  %v679 = vpop.f32.mrb[0].mxu0
  %v680 = vadd.f32 %v592, %v679
  %v681 = vpop.f32.mrb[0].mxu0
  %682 = vmatprep.mubr.bf16.mxu0 %v255
  %683 = vmatmul.mubr.bf16.gmra.mrb[0].mxu0 %v254
  %v684 = vpop.f32.mrb[0].mxu0
  %v685 = vadd.f32 %v597, %v684
  %v686 = vpop.f32.mrb[0].mxu0
  %v687 = vpop.f32.mrb[0].mxu0
  %v688 = vadd.f32 %v600, %v687
  %v689 = vpop.f32.mrb[0].mxu0
  %690 = vmatprep.mubr.bf16.mxu0 %v260
  %691 = vmatmul.mubr.bf16.gmra.mrb[0].mxu0 %v259
  %v692 = vpop.f32.mrb[0].mxu0
  %v693 = vadd.f32 %v605, %v692
  %v694 = vpop.f32.mrb[0].mxu0
  %v695 = vpop.f32.mrb[0].mxu0
  %v696 = vadd.f32 %v608, %v695
  %v697 = vpop.f32.mrb[0].mxu0
  %698 = vmatprep.mubr.bf16.mxu0 %v265
  %699 = vmatmul.mubr.bf16.gmra.mrb[0].mxu0 %v264
  %v700 = vpop.f32.mrb[0].mxu0
  %v701 = vadd.f32 %v613, %v700
  %v702 = vpop.f32.mrb[0].mxu0
  %v703 = vpop.f32.mrb[0].mxu0
  %v704 = vadd.f32 %v616, %v703
  %v705 = vpop.f32.mrb[0].mxu0
  %706 = vmatprep.mubr.bf16.mxu0 %v270
  %707 = vmatmul.mubr.bf16.gmra.mrb[0].mxu0 %v269
  %v708 = vpop.f32.mrb[0].mxu0
  %v709 = vadd.f32 %v621, %v708
  %v710 = vpop.f32.mrb[0].mxu0
  %v711 = vpop.f32.mrb[0].mxu0
  %v712 = vpop.f32.mrb[0].mxu0
  %713 = vdwg.mxu0
  %714 = vmatprep.subr.bf16.mxu0 0
  %715 = vmatpush1.bf16.msra.mxu0 %v476
  %716 = vmatprep.subr.bf16.mxu0 0
  %717 = vmatpush1.bf16.msra.mxu0 %v477
  %718 = vmatprep.subr.bf16.mxu0 0
  %719 = vmatpush1.bf16.msra.mxu0 %v478
  %720 = vmatprep.subr.bf16.mxu0 0
  %721 = vmatpush1.bf16.msra.mxu0 %v479
  %722 = vmatprep.subr.bf16.mxu0 0
  %723 = vmatpush1.bf16.msra.mxu0 0
  %724 = vmatprep.subr.bf16.mxu0 0
  %725 = vmatpush1.bf16.msra.mxu0 0
  %726 = vmatprep.subr.bf16.mxu0 0
  %727 = vmatpush1.bf16.msra.mxu0 0
  %728 = vmatprep.subr.bf16.mxu0 0
  %729 = vmatpush1.bf16.msra.mxu0 0
  %730 = vmatprep.subr.bf16.mxu0 0
  %731 = vmatpush1.bf16.msra.mxu0 0
  %732 = vmatprep.subr.bf16.mxu0 0
  %733 = vmatpush1.bf16.msra.mxu0 0
  %734 = vmatprep.subr.bf16.mxu0 0
  %735 = vmatpush1.bf16.msra.mxu0 0
  %736 = vmatprep.subr.bf16.mxu0 0
  %737 = vmatpush1.bf16.msra.mxu0 0
  %738 = vmatprep.subr.bf16.mxu0 0
  %739 = vmatpush1.bf16.msra.mxu0 0
  %740 = vmatprep.subr.bf16.mxu0 0
  %741 = vmatpush1.bf16.msra.mxu0 0
  %742 = vmatprep.subr.bf16.mxu0 0
  %743 = vmatpush1.bf16.msra.mxu0 0
  %744 = vmatprep.subr.bf16.mxu0 0
  %745 = vmatpush1.bf16.msra.mxu0 0
  %746 = vmatprep.mubr.bf16.mxu0 0
  %747 = vmatmul.mubr.bf16.gmra.mrb[0].mxu0 %v518
  %v748 = vpop.f32.mrb[0].mxu0
  %v749 = vadd.f32 %v661, %v748
  %v750 = vpop.f32.mrb[0].mxu0
  %v751 = vpop.f32.mrb[0].mxu0
  %v752 = vadd.f32 %v664, %v751
  %v753 = vpop.f32.mrb[0].mxu0
  %754 = vmatprep.mubr.bf16.mxu0 0
  %755 = vmatmul.mubr.bf16.gmra.mrb[0].mxu0 %v521
  %v756 = vpop.f32.mrb[0].mxu0
  %v757 = vadd.f32 %v669, %v756
  %v758 = vpop.f32.mrb[0].mxu0
  %v759 = vpop.f32.mrb[0].mxu0
  %v760 = vadd.f32 %v672, %v759
  %v761 = vpop.f32.mrb[0].mxu0
  %762 = vmatprep.mubr.bf16.mxu0 0
  %763 = vmatmul.mubr.bf16.gmra.mrb[0].mxu0 %v524
  %v764 = vpop.f32.mrb[0].mxu0
  %v765 = vadd.f32 %v677, %v764
  %v766 = vpop.f32.mrb[0].mxu0
  %v767 = vpop.f32.mrb[0].mxu0
  %v768 = vadd.f32 %v680, %v767
  %v769 = vpop.f32.mrb[0].mxu0
  %770 = vmatprep.mubr.bf16.mxu0 0
  %771 = vmatmul.mubr.bf16.gmra.mrb[0].mxu0 %v527
  %v772 = vpop.f32.mrb[0].mxu0
  %v773 = vadd.f32 %v685, %v772
  %v774 = vpop.f32.mrb[0].mxu0
  %v775 = vpop.f32.mrb[0].mxu0
  %v776 = vadd.f32 %v688, %v775
  %v777 = vpop.f32.mrb[0].mxu0
  %778 = vmatprep.mubr.bf16.mxu0 0
  %779 = vmatmul.mubr.bf16.gmra.mrb[0].mxu0 %v530
  %v780 = vpop.f32.mrb[0].mxu0
  %v781 = vadd.f32 %v693, %v780
  %v782 = vpop.f32.mrb[0].mxu0
  %v783 = vpop.f32.mrb[0].mxu0
  %v784 = vadd.f32 %v696, %v783
  %v785 = vpop.f32.mrb[0].mxu0
  %786 = vmatprep.mubr.bf16.mxu0 0
  %787 = vmatmul.mubr.bf16.gmra.mrb[0].mxu0 %v533
  %v788 = vpop.f32.mrb[0].mxu0
  %v789 = vadd.f32 %v701, %v788
  %v790 = vpop.f32.mrb[0].mxu0
  %v791 = vpop.f32.mrb[0].mxu0
  %v792 = vadd.f32 %v704, %v791
  %v793 = vpop.f32.mrb[0].mxu0
  %794 = vmatprep.mubr.bf16.mxu0 0
  %795 = vmatmul.mubr.bf16.gmra.mrb[0].mxu0 %v536
  %v796 = vpop.f32.mrb[0].mxu0
  %v797 = vadd.f32 %v709, %v796
  %v798 = vpop.f32.mrb[0].mxu0
  %v799 = vpop.f32.mrb[0].mxu0
  %v800 = vpop.f32.mrb[0].mxu0
  %801 = vdwg.mxu0
  %v802 = vmax.f32 %v749, 0.0
  %v803 = vmax.f32 %v752, 0.0
  %v804 = vmax.f32 %v757, 0.0
  %v805 = vmax.f32 %v760, 0.0
  %v806 = vmax.f32 %v765, 0.0
  %v807 = vmax.f32 %v768, 0.0
  %v808 = vmax.f32 %v773, 0.0
  %v809 = vmax.f32 %v776, 0.0
  %v810 = vmax.f32 %v781, 0.0
  %v811 = vmax.f32 %v784, 0.0
  %v812 = vmax.f32 %v789, 0.0
  %v813 = vmax.f32 %v792, 0.0
  %v814 = vmax.f32 %v797, 0.0
  %v815 = vpack.c.bf16 %v803, %v802
  %v816 = vpack.c.bf16 %v805, %v804
  %v817 = vpack.c.bf16 %v807, %v806
  %v818 = vpack.c.bf16 %v809, %v808
  %v819 = vpack.c.bf16 %v811, %v810
  %v820 = vpack.c.bf16 %v813, %v812
  %v821 = vpack.c.bf16 %v814, %v814
  %v829 = vunpack.c.l.b16 %v815
  %v830 = vunpack.c.h.b16 %v815
  %v831 = vunpack.c.l.b16 %v816
  %v832 = vunpack.c.h.b16 %v816
  %v833 = vunpack.c.l.b16 %v817
  %v834 = vunpack.c.h.b16 %v817
  %v835 = vunpack.c.l.b16 %v818
  %v836 = vunpack.c.h.b16 %v818
  %v837 = vunpack.c.l.b16 %v819
  %v838 = vunpack.c.h.b16 %v819
  %v839 = vunpack.c.l.b16 %v820
  %v840 = vunpack.c.h.b16 %v820
  %v841 = vunpack.c.l.b16 %v821
  %v842 = vpack.c.b16 %v829, %v829
  %v843 = vpack.c.b16 %v830, %v830
  %v844 = vpack.c.b16 %v831, %v831
  %v845 = vpack.c.b16 %v832, %v832
  %v846 = vpack.c.b16 %v833, %v833
  %v847 = vpack.c.b16 %v834, %v834
  %v848 = vpack.c.b16 %v835, %v835
  %v849 = vpack.c.b16 %v836, %v836
  %v850 = vpack.c.b16 %v837, %v837
  %v851 = vpack.c.b16 %v838, %v838
  %v852 = vpack.c.b16 %v839, %v839
  %v853 = vpack.c.b16 %v840, %v840
  %v854 = vpack.c.b16 %v841, %v841
  %vm868 = vcmask 519168
  %869 = vst.msk [vmem:[%s3] sm:$0xf] %vm868, %v842
  %870 = vst.msk [vmem:[%s3 + $0x4] sm:$0xf] %vm868, %v843
  %871 = vst.msk [vmem:[%s3 + $0x8] sm:$0xf] %vm868, %v844
  %872 = vst.msk [vmem:[%s3 + $0xc] sm:$0xf] %vm868, %v845
  %873 = vst.msk [vmem:[%s3 + $0x10] sm:$0xf] %vm868, %v846
  %874 = vst.msk [vmem:[%s3 + $0x14] sm:$0xf] %vm868, %v847
  %875 = vst.msk [vmem:[%s3 + $0x18] sm:$0xf] %vm868, %v848
  %876 = vst.msk [vmem:[%s3 + $0x1c] sm:$0xf] %vm868, %v849
  %877 = vst.msk [vmem:[%s3 + $0x20] sm:$0xf] %vm868, %v850
  %878 = vst.msk [vmem:[%s3 + $0x24] sm:$0xf] %vm868, %v851
  %879 = vst.msk [vmem:[%s3 + $0x28] sm:$0xf] %vm868, %v852
  %880 = vst.msk [vmem:[%s3 + $0x2c] sm:$0xf] %vm868, %v853
  %vm881 = vcmask 516096
  %882 = vst.msk [vmem:[%s3 + $0x30] sm:$0x1] %vm881, %v854
  // Predicated region
  $region14: #{actor_forward.6} parent=0 // pred_check
    _
  $region15: #{actor_forward.6} parent=0 // pred_check_branch
    %884 = sbr.rel (0) target = $region17
  $region16: #{actor_forward.6} parent=0 // pred_region
    _
  $region17: #{actor_forward.6} parent=0 // pred_fallthru
    _
  // Predicated region
  $region18: #{actor_forward.6} parent=0 // pred_check
    _
  $region19: #{actor_forward.6} parent=0 // pred_check_branch
    %886 = sbr.rel (0) target = $region21
  $region20: #{actor_forward.6} parent=0 // pred_region
    _
  $region21: #{actor_forward.6} parent=0 // pred_fallthru
    _

// kernel: actor_forward.7
$region0: #{actor_forward.7}
  #allocation0 [shape = 'u32[]', space=smem, size = 0x4, offset = 0x4, fixed_abs, tag = 'smem constant byte address 0x4 - core index']
  #allocation1 [shape = 'u32[144,128]{1,0:T(1,128)}', space=vmem, size = 0x12000, scoped, tag = 'internal scratch']
  %s0 = inlined_call_operand.vmem [shape: bf16[2,3136], index: 0, kind: input, shape index: {}]
  %s1 = inlined_call_operand.vmem [shape: bf16[3136,32], index: 1, kind: input, shape index: {}]
  %s2 = inlined_call_operand.vmem [shape: f32[1,32], index: 2, kind: input, shape index: {}]
  %s3 = inlined_call_operand.vmem [shape: bf16[32,32], index: 3, kind: input, shape index: {}]
  %s4 = inlined_call_operand.vmem [shape: f32[1,32], index: 4, kind: input, shape index: {}]
  %s5 = inlined_call_operand.vmem [shape: bf16[32,12], index: 5, kind: input, shape index: {}]
  %s6 = inlined_call_operand.vmem [shape: f32[1,12], index: 6, kind: input, shape index: {}]
  %s7 = inlined_call_operand.vmem [shape: f32[2,6], index: 7, kind: input, shape index: {}]
  %s8 = inlined_call_operand.vmem [shape: f32[2,128], index: 8, kind: output, shape index: {}]
  %s9 = sld [smem:[#allocation0]]
  $region42: #{actor_forward.7} parent=0
    _
  %s11 = ssub.s32 1, %s9
  %s12 = scalar_select 0, %s11, %s9
  // Predicated region
  $region2: #{actor_forward.7} parent=0 // pred_check
    _
  $region3: #{actor_forward.7} parent=0 // pred_check_branch
    %14 = sbr.rel (0) target = $region5
  $region4: #{actor_forward.7} parent=0 // pred_region
    _
  $region5: #{actor_forward.7} parent=0 // pred_fallthru
    _
  // Predicated region
  $region6: #{actor_forward.7} parent=0 // pred_check
    _
  $region7: #{actor_forward.7} parent=0 // pred_check_branch
    %16 = sbr.rel (0) target = $region9
  $region8: #{actor_forward.7} parent=0 // pred_region
    _
  $region9: #{actor_forward.7} parent=0 // pred_fallthru
    _
  // Predicated region
  $region10: #{actor_forward.7} parent=0 // pred_check
    _
  $region11: #{actor_forward.7} parent=0 // pred_check_branch
    %18 = sbr.rel (0) target = $region13
  $region12: #{actor_forward.7} parent=0 // pred_region
    _
  $region13: #{actor_forward.7} parent=0 // pred_fallthru
    _
  // Predicated region
  $region14: #{actor_forward.7} parent=0 // pred_check
    _
  $region15: #{actor_forward.7} parent=0 // pred_check_branch
    %20 = sbr.rel (0) target = $region17
  $region16: #{actor_forward.7} parent=0 // pred_region
    _
  $region17: #{actor_forward.7} parent=0 // pred_fallthru
    _
  // Predicated region
  $region18: #{actor_forward.7} parent=0 // pred_check
    _
  $region19: #{actor_forward.7} parent=0 // pred_check_branch
    %22 = sbr.rel (0) target = $region21
  $region20: #{actor_forward.7} parent=0 // pred_region
    _
  $region21: #{actor_forward.7} parent=0 // pred_fallthru
    _
  // Predicated region
  $region22: #{actor_forward.7} parent=0 // pred_check
    _
  $region23: #{actor_forward.7} parent=0 // pred_check_branch
    %24 = sbr.rel (0) target = $region25
  $region24: #{actor_forward.7} parent=0 // pred_region
    _
  $region25: #{actor_forward.7} parent=0 // pred_fallthru
    _
  // Predicated region
  $region26: #{actor_forward.7} parent=0 // pred_check
    _
  $region27: #{actor_forward.7} parent=0 // pred_check_branch
    %26 = sbr.rel (0) target = $region29
  $region28: #{actor_forward.7} parent=0 // pred_region
    _
  $region29: #{actor_forward.7} parent=0 // pred_fallthru
    _
  // Predicated region
  $region30: #{actor_forward.7} parent=0 // pred_check
    _
  $region31: #{actor_forward.7} parent=0 // pred_check_branch
    %28 = sbr.rel (0) target = $region33
  $region32: #{actor_forward.7} parent=0 // pred_region
    _
  $region33: #{actor_forward.7} parent=0 // pred_fallthru
    _
  %v30 = vld [vmem:[%s0] sm:$0xff]
  %v31 = vld [vmem:[%s0 + $0x8] sm:$0xff]
  %v32 = vld [vmem:[%s0 + $0x10] sm:$0xff]
  %v33 = vld [vmem:[%s0 + $0x18] sm:$0x1]
  %v34 = vld [vmem:[%s1] sm:$0xf]
  %v35 = vld [vmem:[%s1 + $0x4] sm:$0xf]
  %v36 = vld [vmem:[%s1 + $0x8] sm:$0xf]
  %v37 = vld [vmem:[%s1 + $0xc] sm:$0xf]
  %v38 = vld [vmem:[%s1 + $0x10] sm:$0xf]
  %v39 = vld [vmem:[%s1 + $0x14] sm:$0xf]
  %v40 = vld [vmem:[%s1 + $0x18] sm:$0xf]
  %v41 = vld [vmem:[%s1 + $0x1c] sm:$0xf]
  %v42 = vld [vmem:[%s1 + $0x20] sm:$0xf]
  %v43 = vld [vmem:[%s1 + $0x24] sm:$0xf]
  %v44 = vld [vmem:[%s1 + $0x28] sm:$0xf]
  %v45 = vld [vmem:[%s1 + $0x2c] sm:$0xf]
  %v46 = vld [vmem:[%s1 + $0x30] sm:$0xf]
  %v47 = vld [vmem:[%s1 + $0x34] sm:$0xf]
  %v48 = vld [vmem:[%s1 + $0x38] sm:$0xf]
  %v49 = vld [vmem:[%s1 + $0x3c] sm:$0xf]
  %v50 = vld [vmem:[%s1 + $0x40] sm:$0xf]
  %v51 = vld [vmem:[%s1 + $0x44] sm:$0xf]
  %v52 = vld [vmem:[%s1 + $0x48] sm:$0xf]
  %v53 = vld [vmem:[%s1 + $0x4c] sm:$0xf]
  %v54 = vld [vmem:[%s1 + $0x50] sm:$0xf]
  %v55 = vld [vmem:[%s1 + $0x54] sm:$0xf]
  %v56 = vld [vmem:[%s1 + $0x58] sm:$0xf]
  %v57 = vld [vmem:[%s1 + $0x5c] sm:$0xf]
  %v58 = vld [vmem:[%s1 + $0x60] sm:$0xf]
  %v59 = vld [vmem:[%s1 + $0x64] sm:$0xf]
  %v60 = vld [vmem:[%s1 + $0x68] sm:$0xf]
  %v61 = vld [vmem:[%s1 + $0x6c] sm:$0xf]
  %v62 = vld [vmem:[%s1 + $0x70] sm:$0xf]
  %v63 = vld [vmem:[%s1 + $0x74] sm:$0xf]
  %v64 = vld [vmem:[%s1 + $0x78] sm:$0xf]
  %v65 = vld [vmem:[%s1 + $0x7c] sm:$0xf]
  %v66 = vld [vmem:[%s1 + $0x80] sm:$0xf]
  %v67 = vld [vmem:[%s1 + $0x84] sm:$0xf]
  %v68 = vld [vmem:[%s1 + $0x88] sm:$0xf]
  %v69 = vld [vmem:[%s1 + $0x8c] sm:$0xf]
  %v70 = vld [vmem:[%s1 + $0x90] sm:$0xf]
  %v71 = vld [vmem:[%s1 + $0x94] sm:$0xf]
  %v72 = vld [vmem:[%s1 + $0x98] sm:$0xf]
  %v73 = vld [vmem:[%s1 + $0x9c] sm:$0xf]
  %v74 = vld [vmem:[%s1 + $0xa0] sm:$0xf]
  %v75 = vld [vmem:[%s1 + $0xa4] sm:$0xf]
  %v76 = vld [vmem:[%s1 + $0xa8] sm:$0xf]
  %v77 = vld [vmem:[%s1 + $0xac] sm:$0xf]
  %v78 = vld [vmem:[%s1 + $0xb0] sm:$0xf]
  %v79 = vld [vmem:[%s1 + $0xb4] sm:$0xf]
  %v80 = vld [vmem:[%s1 + $0xb8] sm:$0xf]
  %v81 = vld [vmem:[%s1 + $0xbc] sm:$0xf]
  %v82 = vld [vmem:[%s1 + $0xc0] sm:$0xf]
  %v83 = vld [vmem:[%s1 + $0xc4] sm:$0xf]
  %v84 = vld [vmem:[%s1 + $0xc8] sm:$0xf]
  %v85 = vld [vmem:[%s1 + $0xcc] sm:$0xf]
  %v86 = vld [vmem:[%s1 + $0xd0] sm:$0xf]
  %v87 = vld [vmem:[%s1 + $0xd4] sm:$0xf]
  %v88 = vld [vmem:[%s1 + $0xd8] sm:$0xf]
  %v89 = vld [vmem:[%s1 + $0xdc] sm:$0xf]
  %v90 = vld [vmem:[%s1 + $0xe0] sm:$0xf]
  %v91 = vld [vmem:[%s1 + $0xe4] sm:$0xf]
  %v92 = vld [vmem:[%s1 + $0xe8] sm:$0xf]
  %v93 = vld [vmem:[%s1 + $0xec] sm:$0xf]
  %v94 = vld [vmem:[%s1 + $0xf0] sm:$0xf]
  %v95 = vld [vmem:[%s1 + $0xf4] sm:$0xf]
  %v96 = vld [vmem:[%s1 + $0xf8] sm:$0xf]
  %v97 = vld [vmem:[%s1 + $0xfc] sm:$0xf]
  %v98 = vld [vmem:[%s1 + $0x100] sm:$0xf]
  %v99 = vld [vmem:[%s1 + $0x104] sm:$0xf]
  %v100 = vld [vmem:[%s1 + $0x108] sm:$0xf]
  %v101 = vld [vmem:[%s1 + $0x10c] sm:$0xf]
  %v102 = vld [vmem:[%s1 + $0x110] sm:$0xf]
  %v103 = vld [vmem:[%s1 + $0x114] sm:$0xf]
  %v104 = vld [vmem:[%s1 + $0x118] sm:$0xf]
  %v105 = vld [vmem:[%s1 + $0x11c] sm:$0xf]
  %v106 = vld [vmem:[%s1 + $0x120] sm:$0xf]
  %v107 = vld [vmem:[%s1 + $0x124] sm:$0xf]
  %v108 = vld [vmem:[%s1 + $0x128] sm:$0xf]
  %v109 = vld [vmem:[%s1 + $0x12c] sm:$0xf]
  %v110 = vld [vmem:[%s1 + $0x130] sm:$0xf]
  %v111 = vld [vmem:[%s1 + $0x134] sm:$0xf]
  %v112 = vld [vmem:[%s1 + $0x138] sm:$0xf]
  %v113 = vld [vmem:[%s1 + $0x13c] sm:$0xf]
  %v114 = vld [vmem:[%s1 + $0x140] sm:$0xf]
  %v115 = vld [vmem:[%s1 + $0x144] sm:$0xf]
  %v116 = vld [vmem:[%s1 + $0x148] sm:$0xf]
  %v117 = vld [vmem:[%s1 + $0x14c] sm:$0xf]
  %v118 = vld [vmem:[%s1 + $0x150] sm:$0xf]
  %v119 = vld [vmem:[%s1 + $0x154] sm:$0xf]
  %v120 = vld [vmem:[%s1 + $0x158] sm:$0xf]
  %v121 = vld [vmem:[%s1 + $0x15c] sm:$0xf]
  %v122 = vld [vmem:[%s1 + $0x160] sm:$0xf]
  %v123 = vld [vmem:[%s1 + $0x164] sm:$0xf]
  %v124 = vld [vmem:[%s1 + $0x168] sm:$0xf]
  %v125 = vld [vmem:[%s1 + $0x16c] sm:$0xf]
  %v126 = vld [vmem:[%s1 + $0x170] sm:$0xf]
  %v127 = vld [vmem:[%s1 + $0x174] sm:$0xf]
  %v128 = vld [vmem:[%s1 + $0x178] sm:$0xf]
  %v129 = vld [vmem:[%s1 + $0x17c] sm:$0xf]
  %v130 = vld [vmem:[%s1 + $0x180] sm:$0xf]
  %v131 = vld [vmem:[%s1 + $0x184] sm:$0xf]
  %v132 = vld [vmem:[%s1 + $0x188] sm:$0xf]
  %v133 = vld [vmem:[%s1 + $0x18c] sm:$0xf]
  %v134 = vld [vmem:[%s1 + $0x190] sm:$0xf]
  %v135 = vld [vmem:[%s1 + $0x194] sm:$0xf]
  %v136 = vld [vmem:[%s1 + $0x198] sm:$0xf]
  %v137 = vld [vmem:[%s1 + $0x19c] sm:$0xf]
  %v138 = vld [vmem:[%s1 + $0x1a0] sm:$0xf]
  %v139 = vld [vmem:[%s1 + $0x1a4] sm:$0xf]
  %v140 = vld [vmem:[%s1 + $0x1a8] sm:$0xf]
  %v141 = vld [vmem:[%s1 + $0x1ac] sm:$0xf]
  %v142 = vld [vmem:[%s1 + $0x1b0] sm:$0xf]
  %v143 = vld [vmem:[%s1 + $0x1b4] sm:$0xf]
  %v144 = vld [vmem:[%s1 + $0x1b8] sm:$0xf]
  %v145 = vld [vmem:[%s1 + $0x1bc] sm:$0xf]
  %v146 = vld [vmem:[%s1 + $0x1c0] sm:$0xf]
  %v147 = vld [vmem:[%s1 + $0x1c4] sm:$0xf]
  %v148 = vld [vmem:[%s1 + $0x1c8] sm:$0xf]
  %v149 = vld [vmem:[%s1 + $0x1cc] sm:$0xf]
  %v150 = vld [vmem:[%s1 + $0x1d0] sm:$0xf]
  %v151 = vld [vmem:[%s1 + $0x1d4] sm:$0xf]
  %v152 = vld [vmem:[%s1 + $0x1d8] sm:$0xf]
  %v153 = vld [vmem:[%s1 + $0x1dc] sm:$0xf]
  %v154 = vld [vmem:[%s1 + $0x1e0] sm:$0xf]
  %v155 = vld [vmem:[%s1 + $0x1e4] sm:$0xf]
  %v156 = vld [vmem:[%s1 + $0x1e8] sm:$0xf]
  %v157 = vld [vmem:[%s1 + $0x1ec] sm:$0xf]
  %v158 = vld [vmem:[%s1 + $0x1f0] sm:$0xf]
  %v159 = vld [vmem:[%s1 + $0x1f4] sm:$0xf]
  %v160 = vld [vmem:[%s1 + $0x1f8] sm:$0xf]
  %v161 = vld [vmem:[%s1 + $0x1fc] sm:$0xf]
  %v162 = vld [vmem:[%s1 + $0x200] sm:$0xf]
  %v163 = vld [vmem:[%s1 + $0x204] sm:$0xf]
  %v164 = vld [vmem:[%s1 + $0x208] sm:$0xf]
  %v165 = vld [vmem:[%s1 + $0x20c] sm:$0xf]
  %v166 = vld [vmem:[%s1 + $0x210] sm:$0xf]
  %v167 = vld [vmem:[%s1 + $0x214] sm:$0xf]
  %v168 = vld [vmem:[%s1 + $0x218] sm:$0xf]
  %v169 = vld [vmem:[%s1 + $0x21c] sm:$0xf]
  %v170 = vld [vmem:[%s1 + $0x220] sm:$0xf]
  %v171 = vld [vmem:[%s1 + $0x224] sm:$0xf]
  %v172 = vld [vmem:[%s1 + $0x228] sm:$0xf]
  %v173 = vld [vmem:[%s1 + $0x22c] sm:$0xf]
  %v174 = vld [vmem:[%s1 + $0x230] sm:$0xf]
  %v175 = vld [vmem:[%s1 + $0x234] sm:$0xf]
  %v176 = vld [vmem:[%s1 + $0x238] sm:$0xf]
  %v177 = vld [vmem:[%s1 + $0x23c] sm:$0xf]
  %v178 = vld [vmem:[%s1 + $0x240] sm:$0xf]
  %v179 = vld [vmem:[%s1 + $0x244] sm:$0xf]
  %v180 = vld [vmem:[%s1 + $0x248] sm:$0xf]
  %v181 = vld [vmem:[%s1 + $0x24c] sm:$0xf]
  %v182 = vld [vmem:[%s1 + $0x250] sm:$0xf]
  %v183 = vld [vmem:[%s1 + $0x254] sm:$0xf]
  %v184 = vld [vmem:[%s1 + $0x258] sm:$0xf]
  %v185 = vld [vmem:[%s1 + $0x25c] sm:$0xf]
  %v186 = vld [vmem:[%s1 + $0x260] sm:$0xf]
  %v187 = vld [vmem:[%s1 + $0x264] sm:$0xf]
  %v188 = vld [vmem:[%s1 + $0x268] sm:$0xf]
  %v189 = vld [vmem:[%s1 + $0x26c] sm:$0xf]
  %v190 = vld [vmem:[%s1 + $0x270] sm:$0xf]
  %v191 = vld [vmem:[%s1 + $0x274] sm:$0xf]
  %v192 = vld [vmem:[%s1 + $0x278] sm:$0xf]
  %v193 = vld [vmem:[%s1 + $0x27c] sm:$0xf]
  %v194 = vld [vmem:[%s1 + $0x280] sm:$0xf]
  %v195 = vld [vmem:[%s1 + $0x284] sm:$0xf]
  %v196 = vld [vmem:[%s1 + $0x288] sm:$0xf]
  %v197 = vld [vmem:[%s1 + $0x28c] sm:$0xf]
  %v198 = vld [vmem:[%s1 + $0x290] sm:$0xf]
  %v199 = vld [vmem:[%s1 + $0x294] sm:$0xf]
  %v200 = vld [vmem:[%s1 + $0x298] sm:$0xf]
  %v201 = vld [vmem:[%s1 + $0x29c] sm:$0xf]
  %v202 = vld [vmem:[%s1 + $0x2a0] sm:$0xf]
  %v203 = vld [vmem:[%s1 + $0x2a4] sm:$0xf]
  %v204 = vld [vmem:[%s1 + $0x2a8] sm:$0xf]
  %v205 = vld [vmem:[%s1 + $0x2ac] sm:$0xf]
  %v206 = vld [vmem:[%s1 + $0x2b0] sm:$0xf]
  %v207 = vld [vmem:[%s1 + $0x2b4] sm:$0xf]
  %v208 = vld [vmem:[%s1 + $0x2b8] sm:$0xf]
  %v209 = vld [vmem:[%s1 + $0x2bc] sm:$0xf]
  %v210 = vld [vmem:[%s1 + $0x2c0] sm:$0xf]
  %v211 = vld [vmem:[%s1 + $0x2c4] sm:$0xf]
  %v212 = vld [vmem:[%s1 + $0x2c8] sm:$0xf]
  %v213 = vld [vmem:[%s1 + $0x2cc] sm:$0xf]
  %v214 = vld [vmem:[%s1 + $0x2d0] sm:$0xf]
  %v215 = vld [vmem:[%s1 + $0x2d4] sm:$0xf]
  %v216 = vld [vmem:[%s1 + $0x2d8] sm:$0xf]
  %v217 = vld [vmem:[%s1 + $0x2dc] sm:$0xf]
  %v218 = vld [vmem:[%s1 + $0x2e0] sm:$0xf]
  %v219 = vld [vmem:[%s1 + $0x2e4] sm:$0xf]
  %v220 = vld [vmem:[%s1 + $0x2e8] sm:$0xf]
  %v221 = vld [vmem:[%s1 + $0x2ec] sm:$0xf]
  %v222 = vld [vmem:[%s1 + $0x2f0] sm:$0xf]
  %v223 = vld [vmem:[%s1 + $0x2f4] sm:$0xf]
  %v224 = vld [vmem:[%s1 + $0x2f8] sm:$0xf]
  %v225 = vld [vmem:[%s1 + $0x2fc] sm:$0xf]
  %v226 = vld [vmem:[%s1 + $0x300] sm:$0xf]
  %v227 = vld [vmem:[%s1 + $0x304] sm:$0xf]
  %v228 = vld [vmem:[%s1 + $0x308] sm:$0xf]
  %v229 = vld [vmem:[%s1 + $0x30c] sm:$0xf]
  %v230 = vld [vmem:[%s1 + $0x310] sm:$0xf]
  %v231 = vld [vmem:[%s1 + $0x314] sm:$0xf]
  %v232 = vld [vmem:[%s1 + $0x318] sm:$0xf]
  %v233 = vld [vmem:[%s1 + $0x31c] sm:$0xf]
  %v234 = vld [vmem:[%s1 + $0x320] sm:$0xf]
  %v235 = vld [vmem:[%s1 + $0x324] sm:$0xf]
  %v236 = vld [vmem:[%s1 + $0x328] sm:$0xf]
  %v237 = vld [vmem:[%s1 + $0x32c] sm:$0xf]
  %v238 = vld [vmem:[%s1 + $0x330] sm:$0xf]
  %v239 = vld [vmem:[%s1 + $0x334] sm:$0xf]
  %v240 = vld [vmem:[%s1 + $0x338] sm:$0xf]
  %v241 = vld [vmem:[%s1 + $0x33c] sm:$0xf]
  %v242 = vld [vmem:[%s1 + $0x340] sm:$0xf]
  %v243 = vld [vmem:[%s1 + $0x344] sm:$0xf]
  %v244 = vld [vmem:[%s1 + $0x348] sm:$0xf]
  %v245 = vld [vmem:[%s1 + $0x34c] sm:$0xf]
  %v246 = vld [vmem:[%s1 + $0x350] sm:$0xf]
  %v247 = vld [vmem:[%s1 + $0x354] sm:$0xf]
  %v248 = vld [vmem:[%s1 + $0x358] sm:$0xf]
  %v249 = vld [vmem:[%s1 + $0x35c] sm:$0xf]
  %v250 = vld [vmem:[%s1 + $0x360] sm:$0xf]
  %v251 = vld [vmem:[%s1 + $0x364] sm:$0xf]
  %v252 = vld [vmem:[%s1 + $0x368] sm:$0xf]
  %v253 = vld [vmem:[%s1 + $0x36c] sm:$0xf]
  %v254 = vld [vmem:[%s1 + $0x370] sm:$0xf]
  %v255 = vld [vmem:[%s1 + $0x374] sm:$0xf]
  %v256 = vld [vmem:[%s1 + $0x378] sm:$0xf]
  %v257 = vld [vmem:[%s1 + $0x37c] sm:$0xf]
  %v258 = vld [vmem:[%s1 + $0x380] sm:$0xf]
  %v259 = vld [vmem:[%s1 + $0x384] sm:$0xf]
  %v260 = vld [vmem:[%s1 + $0x388] sm:$0xf]
  %v261 = vld [vmem:[%s1 + $0x38c] sm:$0xf]
  %v262 = vld [vmem:[%s1 + $0x390] sm:$0xf]
  %v263 = vld [vmem:[%s1 + $0x394] sm:$0xf]
  %v264 = vld [vmem:[%s1 + $0x398] sm:$0xf]
  %v265 = vld [vmem:[%s1 + $0x39c] sm:$0xf]
  %v266 = vld [vmem:[%s1 + $0x3a0] sm:$0xf]
  %v267 = vld [vmem:[%s1 + $0x3a4] sm:$0xf]
  %v268 = vld [vmem:[%s1 + $0x3a8] sm:$0xf]
  %v269 = vld [vmem:[%s1 + $0x3ac] sm:$0xf]
  %v270 = vld [vmem:[%s1 + $0x3b0] sm:$0xf]
  %v271 = vld [vmem:[%s1 + $0x3b4] sm:$0xf]
  %v272 = vld [vmem:[%s1 + $0x3b8] sm:$0xf]
  %v273 = vld [vmem:[%s1 + $0x3bc] sm:$0xf]
  %v274 = vld [vmem:[%s1 + $0x3c0] sm:$0xf]
  %v275 = vld [vmem:[%s1 + $0x3c4] sm:$0xf]
  %v276 = vld [vmem:[%s1 + $0x3c8] sm:$0xf]
  %v277 = vld [vmem:[%s1 + $0x3cc] sm:$0xf]
  %v278 = vld [vmem:[%s1 + $0x3d0] sm:$0xf]
  %v279 = vld [vmem:[%s1 + $0x3d4] sm:$0xf]
  %v280 = vld [vmem:[%s1 + $0x3d8] sm:$0xf]
  %v281 = vld [vmem:[%s1 + $0x3dc] sm:$0xf]
  %v282 = vld [vmem:[%s1 + $0x3e0] sm:$0xf]
  %v283 = vld [vmem:[%s1 + $0x3e4] sm:$0xf]
  %v284 = vld [vmem:[%s1 + $0x3e8] sm:$0xf]
  %v285 = vld [vmem:[%s1 + $0x3ec] sm:$0xf]
  %v286 = vld [vmem:[%s1 + $0x3f0] sm:$0xf]
  %v287 = vld [vmem:[%s1 + $0x3f4] sm:$0xf]
  %v288 = vld [vmem:[%s1 + $0x3f8] sm:$0xf]
  %v289 = vld [vmem:[%s1 + $0x3fc] sm:$0xf]
  %v290 = vld [vmem:[%s1 + $0x400] sm:$0xf]
  %v291 = vld [vmem:[%s1 + $0x404] sm:$0xf]
  %v292 = vld [vmem:[%s1 + $0x408] sm:$0xf]
  %v293 = vld [vmem:[%s1 + $0x40c] sm:$0xf]
  %v294 = vld [vmem:[%s1 + $0x410] sm:$0xf]
  %v295 = vld [vmem:[%s1 + $0x414] sm:$0xf]
  %v296 = vld [vmem:[%s1 + $0x418] sm:$0xf]
  %v297 = vld [vmem:[%s1 + $0x41c] sm:$0xf]
  %v298 = vld [vmem:[%s1 + $0x420] sm:$0xf]
  %v299 = vld [vmem:[%s1 + $0x424] sm:$0xf]
  %v300 = vld [vmem:[%s1 + $0x428] sm:$0xf]
  %v301 = vld [vmem:[%s1 + $0x42c] sm:$0xf]
  %v302 = vld [vmem:[%s1 + $0x430] sm:$0xf]
  %v303 = vld [vmem:[%s1 + $0x434] sm:$0xf]
  %v304 = vld [vmem:[%s1 + $0x438] sm:$0xf]
  %v305 = vld [vmem:[%s1 + $0x43c] sm:$0xf]
  %v306 = vld [vmem:[%s1 + $0x440] sm:$0xf]
  %v307 = vld [vmem:[%s1 + $0x444] sm:$0xf]
  %v308 = vld [vmem:[%s1 + $0x448] sm:$0xf]
  %v309 = vld [vmem:[%s1 + $0x44c] sm:$0xf]
  %v310 = vld [vmem:[%s1 + $0x450] sm:$0xf]
  %v311 = vld [vmem:[%s1 + $0x454] sm:$0xf]
  %v312 = vld [vmem:[%s1 + $0x458] sm:$0xf]
  %v313 = vld [vmem:[%s1 + $0x45c] sm:$0xf]
  %v314 = vld [vmem:[%s1 + $0x460] sm:$0xf]
  %v315 = vld [vmem:[%s1 + $0x464] sm:$0xf]
  %v316 = vld [vmem:[%s1 + $0x468] sm:$0xf]
  %v317 = vld [vmem:[%s1 + $0x46c] sm:$0xf]
  %v318 = vld [vmem:[%s1 + $0x470] sm:$0xf]
  %v319 = vld [vmem:[%s1 + $0x474] sm:$0xf]
  %v320 = vld [vmem:[%s1 + $0x478] sm:$0xf]
  %v321 = vld [vmem:[%s1 + $0x47c] sm:$0xf]
  %v322 = vld [vmem:[%s1 + $0x480] sm:$0xf]
  %v323 = vld [vmem:[%s1 + $0x484] sm:$0xf]
  %v324 = vld [vmem:[%s1 + $0x488] sm:$0xf]
  %v325 = vld [vmem:[%s1 + $0x48c] sm:$0xf]
  %v326 = vld [vmem:[%s1 + $0x490] sm:$0xf]
  %v327 = vld [vmem:[%s1 + $0x494] sm:$0xf]
  %v328 = vld [vmem:[%s1 + $0x498] sm:$0xf]
  %v329 = vld [vmem:[%s1 + $0x49c] sm:$0xf]
  %v330 = vld [vmem:[%s1 + $0x4a0] sm:$0xf]
  %v331 = vld [vmem:[%s1 + $0x4a4] sm:$0xf]
  %v332 = vld [vmem:[%s1 + $0x4a8] sm:$0xf]
  %v333 = vld [vmem:[%s1 + $0x4ac] sm:$0xf]
  %v334 = vld [vmem:[%s1 + $0x4b0] sm:$0xf]
  %v335 = vld [vmem:[%s1 + $0x4b4] sm:$0xf]
  %v336 = vld [vmem:[%s1 + $0x4b8] sm:$0xf]
  %v337 = vld [vmem:[%s1 + $0x4bc] sm:$0xf]
  %v338 = vld [vmem:[%s1 + $0x4c0] sm:$0xf]
  %v339 = vld [vmem:[%s1 + $0x4c4] sm:$0xf]
  %v340 = vld [vmem:[%s1 + $0x4c8] sm:$0xf]
  %v341 = vld [vmem:[%s1 + $0x4cc] sm:$0xf]
  %v342 = vld [vmem:[%s1 + $0x4d0] sm:$0xf]
  %v343 = vld [vmem:[%s1 + $0x4d4] sm:$0xf]
  %v344 = vld [vmem:[%s1 + $0x4d8] sm:$0xf]
  %v345 = vld [vmem:[%s1 + $0x4dc] sm:$0xf]
  %v346 = vld [vmem:[%s1 + $0x4e0] sm:$0xf]
  %v347 = vld [vmem:[%s1 + $0x4e4] sm:$0xf]
  %v348 = vld [vmem:[%s1 + $0x4e8] sm:$0xf]
  %v349 = vld [vmem:[%s1 + $0x4ec] sm:$0xf]
  %v350 = vld [vmem:[%s1 + $0x4f0] sm:$0xf]
  %v351 = vld [vmem:[%s1 + $0x4f4] sm:$0xf]
  %v352 = vld [vmem:[%s1 + $0x4f8] sm:$0xf]
  %v353 = vld [vmem:[%s1 + $0x4fc] sm:$0xf]
  %v354 = vld [vmem:[%s1 + $0x500] sm:$0xf]
  %v355 = vld [vmem:[%s1 + $0x504] sm:$0xf]
  %v356 = vld [vmem:[%s1 + $0x508] sm:$0xf]
  %v357 = vld [vmem:[%s1 + $0x50c] sm:$0xf]
  %v358 = vld [vmem:[%s1 + $0x510] sm:$0xf]
  %v359 = vld [vmem:[%s1 + $0x514] sm:$0xf]
  %v360 = vld [vmem:[%s1 + $0x518] sm:$0xf]
  %v361 = vld [vmem:[%s1 + $0x51c] sm:$0xf]
  %v362 = vld [vmem:[%s1 + $0x520] sm:$0xf]
  %v363 = vld [vmem:[%s1 + $0x524] sm:$0xf]
  %v364 = vld [vmem:[%s1 + $0x528] sm:$0xf]
  %v365 = vld [vmem:[%s1 + $0x52c] sm:$0xf]
  %v366 = vld [vmem:[%s1 + $0x530] sm:$0xf]
  %v367 = vld [vmem:[%s1 + $0x534] sm:$0xf]
  %v368 = vld [vmem:[%s1 + $0x538] sm:$0xf]
  %v369 = vld [vmem:[%s1 + $0x53c] sm:$0xf]
  %v370 = vld [vmem:[%s1 + $0x540] sm:$0xf]
  %v371 = vld [vmem:[%s1 + $0x544] sm:$0xf]
  %v372 = vld [vmem:[%s1 + $0x548] sm:$0xf]
  %v373 = vld [vmem:[%s1 + $0x54c] sm:$0xf]
  %v374 = vld [vmem:[%s1 + $0x550] sm:$0xf]
  %v375 = vld [vmem:[%s1 + $0x554] sm:$0xf]
  %v376 = vld [vmem:[%s1 + $0x558] sm:$0xf]
  %v377 = vld [vmem:[%s1 + $0x55c] sm:$0xf]
  %v378 = vld [vmem:[%s1 + $0x560] sm:$0xf]
  %v379 = vld [vmem:[%s1 + $0x564] sm:$0xf]
  %v380 = vld [vmem:[%s1 + $0x568] sm:$0xf]
  %v381 = vld [vmem:[%s1 + $0x56c] sm:$0xf]
  %v382 = vld [vmem:[%s1 + $0x570] sm:$0xf]
  %v383 = vld [vmem:[%s1 + $0x574] sm:$0xf]
  %v384 = vld [vmem:[%s1 + $0x578] sm:$0xf]
  %v385 = vld [vmem:[%s1 + $0x57c] sm:$0xf]
  %v386 = vld [vmem:[%s1 + $0x580] sm:$0xf]
  %v387 = vld [vmem:[%s1 + $0x584] sm:$0xf]
  %v388 = vld [vmem:[%s1 + $0x588] sm:$0xf]
  %v389 = vld [vmem:[%s1 + $0x58c] sm:$0xf]
  %v390 = vld [vmem:[%s1 + $0x590] sm:$0xf]
  %v391 = vld [vmem:[%s1 + $0x594] sm:$0xf]
  %v392 = vld [vmem:[%s1 + $0x598] sm:$0xf]
  %v393 = vld [vmem:[%s1 + $0x59c] sm:$0xf]
  %v394 = vld [vmem:[%s1 + $0x5a0] sm:$0xf]
  %v395 = vld [vmem:[%s1 + $0x5a4] sm:$0xf]
  %v396 = vld [vmem:[%s1 + $0x5a8] sm:$0xf]
  %v397 = vld [vmem:[%s1 + $0x5ac] sm:$0xf]
  %v398 = vld [vmem:[%s1 + $0x5b0] sm:$0xf]
  %v399 = vld [vmem:[%s1 + $0x5b4] sm:$0xf]
  %v400 = vld [vmem:[%s1 + $0x5b8] sm:$0xf]
  %v401 = vld [vmem:[%s1 + $0x5bc] sm:$0xf]
  %v402 = vld [vmem:[%s1 + $0x5c0] sm:$0xf]
  %v403 = vld [vmem:[%s1 + $0x5c4] sm:$0xf]
  %v404 = vld [vmem:[%s1 + $0x5c8] sm:$0xf]
  %v405 = vld [vmem:[%s1 + $0x5cc] sm:$0xf]
  %v406 = vld [vmem:[%s1 + $0x5d0] sm:$0xf]
  %v407 = vld [vmem:[%s1 + $0x5d4] sm:$0xf]
  %v408 = vld [vmem:[%s1 + $0x5d8] sm:$0xf]
  %v409 = vld [vmem:[%s1 + $0x5dc] sm:$0xf]
  %v410 = vld [vmem:[%s1 + $0x5e0] sm:$0xf]
  %v411 = vld [vmem:[%s1 + $0x5e4] sm:$0xf]
  %v412 = vld [vmem:[%s1 + $0x5e8] sm:$0xf]
  %v413 = vld [vmem:[%s1 + $0x5ec] sm:$0xf]
  %v414 = vld [vmem:[%s1 + $0x5f0] sm:$0xf]
  %v415 = vld [vmem:[%s1 + $0x5f4] sm:$0xf]
  %v416 = vld [vmem:[%s1 + $0x5f8] sm:$0xf]
  %v417 = vld [vmem:[%s1 + $0x5fc] sm:$0xf]
  %v418 = vld [vmem:[%s1 + $0x600] sm:$0xf]
  %v419 = vld [vmem:[%s1 + $0x604] sm:$0xf]
  %v420 = vld [vmem:[%s1 + $0x608] sm:$0xf]
  %v421 = vld [vmem:[%s1 + $0x60c] sm:$0xf]
  %v422 = vld [vmem:[%s1 + $0x610] sm:$0xf]
  %v423 = vld [vmem:[%s1 + $0x614] sm:$0xf]
  %v424 = vld [vmem:[%s1 + $0x618] sm:$0xf]
  %v425 = vld [vmem:[%s1 + $0x61c] sm:$0xf]
  %v426 = vld [vmem:[%s2] sm:$0x1]
  %v428 = vlaneseq
  %v429 = vshrl.u32 %v428, 7
  %v430 = vsub.s32 0, %v429
  %v431 = vrot.slane %v426, %v430
  %v437 = vcombine.high %v30, %v30
  %v439 = vunpack.c.l.s4 1966171168
  %v440 = vunpack.c.0.s8 %v439
  %v441 = vlaneseq
  %v442 = vshrl.u32 %v441, 7
  %v443 = vsub.s32 %v440, %v442
  %v444 = vrot.slane %v30, %v443
  %v446 = vunpack.c.l.s4 1966171168
  %v447 = vunpack.c.0.s8 %v446
  %v448 = vlaneseq
  %v449 = vshrl.u32 %v448, 7
  %v450 = vsub.s32 %v447, %v449
  %v451 = vrot.slane %v437, %v450
  %v452 = vcombine.high %v444, %v444
  %v453 = vcombine.high %v451, %v451
  %v455 = vunpack.c.l.s4 1966171168
  %v456 = vunpack.c.0.s8 %v455
  %v457 = vlaneseq
  %v458 = vshrl.u32 %v457, 7
  %v459 = vsub.s32 %v456, %v458
  %v460 = vrot.slane %v444, %v459
  %v462 = vunpack.c.l.s4 1966171168
  %v463 = vunpack.c.0.s8 %v462
  %v464 = vlaneseq
  %v465 = vshrl.u32 %v464, 7
  %v466 = vsub.s32 %v463, %v465
  %v467 = vrot.slane %v451, %v466
  %v469 = vunpack.c.l.s4 1966171168
  %v470 = vunpack.c.0.s8 %v469
  %v471 = vlaneseq
  %v472 = vshrl.u32 %v471, 7
  %v473 = vsub.s32 %v470, %v472
  %v474 = vrot.slane %v452, %v473
  %v476 = vunpack.c.l.s4 1966171168
  %v477 = vunpack.c.0.s8 %v476
  %v478 = vlaneseq
  %v479 = vshrl.u32 %v478, 7
  %v480 = vsub.s32 %v477, %v479
  %v481 = vrot.slane %v453, %v480
  %v482 = vcombine.high %v460, %v460
  %v483 = vcombine.high %v467, %v467
  %v484 = vcombine.high %v474, %v474
  %v485 = vcombine.high %v481, %v481
  %v486 = vcombine.high %v31, %v31
  %v488 = vunpack.c.l.s4 1966171168
  %v489 = vunpack.c.0.s8 %v488
  %v490 = vlaneseq
  %v491 = vshrl.u32 %v490, 7
  %v492 = vsub.s32 %v489, %v491
  %v493 = vrot.slane %v31, %v492
  %v495 = vunpack.c.l.s4 1966171168
  %v496 = vunpack.c.0.s8 %v495
  %v497 = vlaneseq
  %v498 = vshrl.u32 %v497, 7
  %v499 = vsub.s32 %v496, %v498
  %v500 = vrot.slane %v486, %v499
  %v501 = vcombine.high %v493, %v493
  %v502 = vcombine.high %v500, %v500
  %v504 = vunpack.c.l.s4 1966171168
  %v505 = vunpack.c.0.s8 %v504
  %v506 = vlaneseq
  %v507 = vshrl.u32 %v506, 7
  %v508 = vsub.s32 %v505, %v507
  %v509 = vrot.slane %v493, %v508
  %v511 = vunpack.c.l.s4 1966171168
  %v512 = vunpack.c.0.s8 %v511
  %v513 = vlaneseq
  %v514 = vshrl.u32 %v513, 7
  %v515 = vsub.s32 %v512, %v514
  %v516 = vrot.slane %v500, %v515
  %v518 = vunpack.c.l.s4 1966171168
  %v519 = vunpack.c.0.s8 %v518
  %v520 = vlaneseq
  %v521 = vshrl.u32 %v520, 7
  %v522 = vsub.s32 %v519, %v521
  %v523 = vrot.slane %v501, %v522
  %v525 = vunpack.c.l.s4 1966171168
  %v526 = vunpack.c.0.s8 %v525
  %v527 = vlaneseq
  %v528 = vshrl.u32 %v527, 7
  %v529 = vsub.s32 %v526, %v528
  %v530 = vrot.slane %v502, %v529
  %v531 = vcombine.high %v509, %v509
  %v532 = vcombine.high %v516, %v516
  %v533 = vcombine.high %v523, %v523
  %v534 = vcombine.high %v530, %v530
  %v535 = vcombine.high %v32, %v32
  %v537 = vunpack.c.l.s4 1966171168
  %v538 = vunpack.c.0.s8 %v537
  %v539 = vlaneseq
  %v540 = vshrl.u32 %v539, 7
  %v541 = vsub.s32 %v538, %v540
  %v542 = vrot.slane %v32, %v541
  %v544 = vunpack.c.l.s4 1966171168
  %v545 = vunpack.c.0.s8 %v544
  %v546 = vlaneseq
  %v547 = vshrl.u32 %v546, 7
  %v548 = vsub.s32 %v545, %v547
  %v549 = vrot.slane %v535, %v548
  %v550 = vcombine.high %v542, %v542
  %v551 = vcombine.high %v549, %v549
  %v553 = vunpack.c.l.s4 1966171168
  %v554 = vunpack.c.0.s8 %v553
  %v555 = vlaneseq
  %v556 = vshrl.u32 %v555, 7
  %v557 = vsub.s32 %v554, %v556
  %v558 = vrot.slane %v542, %v557
  %v560 = vunpack.c.l.s4 1966171168
  %v561 = vunpack.c.0.s8 %v560
  %v562 = vlaneseq
  %v563 = vshrl.u32 %v562, 7
  %v564 = vsub.s32 %v561, %v563
  %v565 = vrot.slane %v549, %v564
  %v567 = vunpack.c.l.s4 1966171168
  %v568 = vunpack.c.0.s8 %v567
  %v569 = vlaneseq
  %v570 = vshrl.u32 %v569, 7
  %v571 = vsub.s32 %v568, %v570
  %v572 = vrot.slane %v550, %v571
  %v574 = vunpack.c.l.s4 1966171168
  %v575 = vunpack.c.0.s8 %v574
  %v576 = vlaneseq
  %v577 = vshrl.u32 %v576, 7
  %v578 = vsub.s32 %v575, %v577
  %v579 = vrot.slane %v551, %v578
  %v580 = vcombine.high %v558, %v558
  %v581 = vcombine.high %v565, %v565
  %v582 = vcombine.high %v572, %v572
  %v583 = vcombine.high %v579, %v579
  %v585 = vunpack.c.l.s4 1966171168
  %v586 = vunpack.c.0.s8 %v585
  %v587 = vlaneseq
  %v588 = vshrl.u32 %v587, 7
  %v589 = vsub.s32 %v586, %v588
  %v590 = vrot.slane %v33, %v589
  %v592 = vunpack.c.l.s4 1966171168
  %v593 = vunpack.c.0.s8 %v592
  %v594 = vlaneseq
  %v595 = vshrl.u32 %v594, 7
  %v596 = vsub.s32 %v593, %v595
  %v597 = vrot.slane %v590, %v596
  %v1014 = vunpack.c.l.b16 %v34
  %v1015 = vunpack.c.l.b16 %v35
  %v1016 = vunpack.c.l.b16 %v36
  %v1017 = vunpack.c.l.b16 %v37
  %v1018 = vunpack.c.l.b16 %v38
  %v1019 = vunpack.c.l.b16 %v39
  %v1020 = vunpack.c.l.b16 %v40
  %v1021 = vunpack.c.l.b16 %v41
  %v1022 = vunpack.c.l.b16 %v42
  %v1023 = vunpack.c.l.b16 %v43
  %v1024 = vunpack.c.l.b16 %v44
  %v1025 = vunpack.c.l.b16 %v45
  %v1026 = vunpack.c.l.b16 %v46
  %v1027 = vunpack.c.l.b16 %v47
  %v1028 = vunpack.c.l.b16 %v48
  %v1029 = vunpack.c.l.b16 %v49
  %v1030 = vunpack.c.l.b16 %v50
  %v1031 = vunpack.c.l.b16 %v51
  %v1032 = vunpack.c.l.b16 %v52
  %v1033 = vunpack.c.l.b16 %v53
  %v1034 = vunpack.c.l.b16 %v54
  %v1035 = vunpack.c.l.b16 %v55
  %v1036 = vunpack.c.l.b16 %v56
  %v1037 = vunpack.c.l.b16 %v57
  %v1038 = vunpack.c.l.b16 %v58
  %v1039 = vunpack.c.l.b16 %v59
  %v1040 = vunpack.c.l.b16 %v60
  %v1041 = vunpack.c.l.b16 %v61
  %v1042 = vunpack.c.l.b16 %v62
  %v1043 = vunpack.c.l.b16 %v63
  %v1044 = vunpack.c.l.b16 %v64
  %v1045 = vunpack.c.l.b16 %v65
  %v1046 = vunpack.c.l.b16 %v66
  %v1047 = vunpack.c.l.b16 %v67
  %v1048 = vunpack.c.l.b16 %v68
  %v1049 = vunpack.c.l.b16 %v69
  %v1050 = vunpack.c.l.b16 %v70
  %v1051 = vunpack.c.l.b16 %v71
  %v1052 = vunpack.c.l.b16 %v72
  %v1053 = vunpack.c.l.b16 %v73
  %v1054 = vunpack.c.l.b16 %v74
  %v1055 = vunpack.c.l.b16 %v75
  %v1056 = vunpack.c.l.b16 %v76
  %v1057 = vunpack.c.l.b16 %v77
  %v1058 = vunpack.c.l.b16 %v78
  %v1059 = vunpack.c.l.b16 %v79
  %v1060 = vunpack.c.l.b16 %v80
  %v1061 = vunpack.c.l.b16 %v81
  %v1062 = vunpack.c.l.b16 %v82
  %v1063 = vunpack.c.l.b16 %v83
  %v1064 = vunpack.c.l.b16 %v84
  %v1065 = vunpack.c.l.b16 %v85
  %v1066 = vunpack.c.l.b16 %v86
  %v1067 = vunpack.c.l.b16 %v87
  %v1068 = vunpack.c.l.b16 %v88
  %v1069 = vunpack.c.l.b16 %v89
  %v1070 = vunpack.c.l.b16 %v90
  %v1071 = vunpack.c.l.b16 %v91
  %v1072 = vunpack.c.l.b16 %v92
  %v1073 = vunpack.c.l.b16 %v93
  %v1074 = vunpack.c.l.b16 %v94
  %v1075 = vunpack.c.l.b16 %v95
  %v1076 = vunpack.c.l.b16 %v96
  %v1077 = vunpack.c.l.b16 %v97
  %v1078 = vunpack.c.l.b16 %v98
  %v1079 = vunpack.c.l.b16 %v99
  %v1080 = vunpack.c.l.b16 %v100
  %v1081 = vunpack.c.l.b16 %v101
  %v1082 = vunpack.c.l.b16 %v102
  %v1083 = vunpack.c.l.b16 %v103
  %v1084 = vunpack.c.l.b16 %v104
  %v1085 = vunpack.c.l.b16 %v105
  %v1086 = vunpack.c.l.b16 %v106
  %v1087 = vunpack.c.l.b16 %v107
  %v1088 = vunpack.c.l.b16 %v108
  %v1089 = vunpack.c.l.b16 %v109
  %v1090 = vunpack.c.l.b16 %v110
  %v1091 = vunpack.c.l.b16 %v111
  %v1092 = vunpack.c.l.b16 %v112
  %v1093 = vunpack.c.l.b16 %v113
  %v1094 = vunpack.c.l.b16 %v114
  %v1095 = vunpack.c.l.b16 %v115
  %v1096 = vunpack.c.l.b16 %v116
  %v1097 = vunpack.c.l.b16 %v117
  %v1098 = vunpack.c.l.b16 %v118
  %v1099 = vunpack.c.l.b16 %v119
  %v1100 = vunpack.c.l.b16 %v120
  %v1101 = vunpack.c.l.b16 %v121
  %v1102 = vunpack.c.l.b16 %v122
  %v1103 = vunpack.c.l.b16 %v123
  %v1104 = vunpack.c.l.b16 %v124
  %v1105 = vunpack.c.l.b16 %v125
  %v1106 = vunpack.c.l.b16 %v126
  %v1107 = vunpack.c.l.b16 %v127
  %v1108 = vunpack.c.l.b16 %v128
  %v1109 = vunpack.c.l.b16 %v129
  %v1110 = vunpack.c.l.b16 %v130
  %v1111 = vunpack.c.l.b16 %v131
  %v1112 = vunpack.c.l.b16 %v132
  %v1113 = vunpack.c.l.b16 %v133
  %v1114 = vunpack.c.l.b16 %v134
  %v1115 = vunpack.c.l.b16 %v135
  %v1116 = vunpack.c.l.b16 %v136
  %v1117 = vunpack.c.l.b16 %v137
  %v1118 = vunpack.c.l.b16 %v138
  %v1119 = vunpack.c.l.b16 %v139
  %v1120 = vunpack.c.l.b16 %v140
  %v1121 = vunpack.c.l.b16 %v141
  %v1122 = vunpack.c.l.b16 %v142
  %v1123 = vunpack.c.l.b16 %v143
  %v1124 = vunpack.c.l.b16 %v144
  %v1125 = vunpack.c.l.b16 %v145
  %v1126 = vunpack.c.l.b16 %v146
  %v1127 = vunpack.c.l.b16 %v147
  %v1128 = vunpack.c.l.b16 %v148
  %v1129 = vunpack.c.l.b16 %v149
  %v1130 = vunpack.c.l.b16 %v150
  %v1131 = vunpack.c.l.b16 %v151
  %v1132 = vunpack.c.l.b16 %v152
  %v1133 = vunpack.c.l.b16 %v153
  %v1134 = vunpack.c.l.b16 %v154
  %v1135 = vunpack.c.l.b16 %v155
  %v1136 = vunpack.c.l.b16 %v156
  %v1137 = vunpack.c.l.b16 %v157
  %v1138 = vunpack.c.l.b16 %v158
  %v1139 = vunpack.c.l.b16 %v159
  %v1140 = vunpack.c.l.b16 %v160
  %v1141 = vunpack.c.l.b16 %v161
  %v1142 = vunpack.c.l.b16 %v162
  %v1143 = vunpack.c.l.b16 %v163
  %v1144 = vunpack.c.l.b16 %v164
  %v1145 = vunpack.c.l.b16 %v165
  %v1146 = vunpack.c.l.b16 %v166
  %v1147 = vunpack.c.l.b16 %v167
  %v1148 = vunpack.c.l.b16 %v168
  %v1149 = vunpack.c.l.b16 %v169
  %v1150 = vunpack.c.l.b16 %v170
  %v1151 = vunpack.c.l.b16 %v171
  %v1152 = vunpack.c.l.b16 %v172
  %v1153 = vunpack.c.l.b16 %v173
  %v1154 = vunpack.c.l.b16 %v174
  %v1155 = vunpack.c.l.b16 %v175
  %v1156 = vunpack.c.l.b16 %v176
  %v1157 = vunpack.c.l.b16 %v177
  %v1158 = vunpack.c.l.b16 %v178
  %v1159 = vunpack.c.l.b16 %v179
  %v1160 = vunpack.c.l.b16 %v180
  %v1161 = vunpack.c.l.b16 %v181
  %v1162 = vunpack.c.l.b16 %v182
  %v1163 = vunpack.c.l.b16 %v183
  %v1164 = vunpack.c.l.b16 %v184
  %v1165 = vunpack.c.l.b16 %v185
  %v1166 = vunpack.c.l.b16 %v186
  %v1167 = vunpack.c.l.b16 %v187
  %v1168 = vunpack.c.l.b16 %v188
  %v1169 = vunpack.c.l.b16 %v189
  %v1170 = vunpack.c.l.b16 %v190
  %v1171 = vunpack.c.l.b16 %v191
  %v1172 = vunpack.c.l.b16 %v192
  %v1173 = vunpack.c.l.b16 %v193
  %v1174 = vunpack.c.l.b16 %v194
  %v1175 = vunpack.c.l.b16 %v195
  %v1176 = vunpack.c.l.b16 %v196
  %v1177 = vunpack.c.l.b16 %v197
  %v1178 = vunpack.c.l.b16 %v198
  %v1179 = vunpack.c.l.b16 %v199
  %v1180 = vunpack.c.l.b16 %v200
  %v1181 = vunpack.c.l.b16 %v201
  %v1182 = vunpack.c.l.b16 %v202
  %v1183 = vunpack.c.l.b16 %v203
  %v1184 = vunpack.c.l.b16 %v204
  %v1185 = vunpack.c.l.b16 %v205
  %v1186 = vunpack.c.l.b16 %v206
  %v1187 = vunpack.c.l.b16 %v207
  %v1188 = vunpack.c.l.b16 %v208
  %v1189 = vunpack.c.l.b16 %v209
  %v1190 = vunpack.c.l.b16 %v210
  %v1191 = vunpack.c.l.b16 %v211
  %v1192 = vunpack.c.l.b16 %v212
  %v1193 = vunpack.c.l.b16 %v213
  %v1194 = vunpack.c.l.b16 %v214
  %v1195 = vunpack.c.l.b16 %v215
  %v1196 = vunpack.c.l.b16 %v216
  %v1197 = vunpack.c.l.b16 %v217
  %v1198 = vunpack.c.l.b16 %v218
  %v1199 = vunpack.c.l.b16 %v219
  %v1200 = vunpack.c.l.b16 %v220
  %v1201 = vunpack.c.l.b16 %v221
  %v1202 = vunpack.c.l.b16 %v222
  %v1203 = vunpack.c.l.b16 %v223
  %v1204 = vunpack.c.l.b16 %v224
  %v1205 = vunpack.c.l.b16 %v225
  %v1206 = vunpack.c.l.b16 %v226
  %v1207 = vunpack.c.l.b16 %v227
  %v1208 = vunpack.c.l.b16 %v228
  %v1209 = vunpack.c.l.b16 %v229
  %v1210 = vunpack.c.l.b16 %v230
  %v1211 = vunpack.c.l.b16 %v231
  %v1212 = vunpack.c.l.b16 %v232
  %v1213 = vunpack.c.l.b16 %v233
  %v1214 = vunpack.c.l.b16 %v234
  %v1215 = vunpack.c.l.b16 %v235
  %v1216 = vunpack.c.l.b16 %v236
  %v1217 = vunpack.c.l.b16 %v237
  %v1218 = vunpack.c.l.b16 %v238
  %v1219 = vunpack.c.l.b16 %v239
  %v1220 = vunpack.c.l.b16 %v240
  %v1221 = vunpack.c.l.b16 %v241
  %v1222 = vunpack.c.l.b16 %v242
  %v1223 = vunpack.c.l.b16 %v243
  %v1224 = vunpack.c.l.b16 %v244
  %v1225 = vunpack.c.l.b16 %v245
  %v1226 = vunpack.c.l.b16 %v246
  %v1227 = vunpack.c.l.b16 %v247
  %v1228 = vunpack.c.l.b16 %v248
  %v1229 = vunpack.c.l.b16 %v249
  %v1230 = vunpack.c.l.b16 %v250
  %v1231 = vunpack.c.l.b16 %v251
  %v1232 = vunpack.c.l.b16 %v252
  %v1233 = vunpack.c.l.b16 %v253
  %v1234 = vunpack.c.l.b16 %v254
  %v1235 = vunpack.c.l.b16 %v255
  %v1236 = vunpack.c.l.b16 %v256
  %v1237 = vunpack.c.l.b16 %v257
  %v1238 = vunpack.c.l.b16 %v258
  %v1239 = vunpack.c.l.b16 %v259
  %v1240 = vunpack.c.l.b16 %v260
  %v1241 = vunpack.c.l.b16 %v261
  %v1242 = vunpack.c.l.b16 %v262
  %v1243 = vunpack.c.l.b16 %v263
  %v1244 = vunpack.c.l.b16 %v264
  %v1245 = vunpack.c.l.b16 %v265
  %v1246 = vunpack.c.l.b16 %v266
  %v1247 = vunpack.c.l.b16 %v267
  %v1248 = vunpack.c.l.b16 %v268
  %v1249 = vunpack.c.l.b16 %v269
  %v1250 = vunpack.c.l.b16 %v270
  %v1251 = vunpack.c.l.b16 %v271
  %v1252 = vunpack.c.l.b16 %v272
  %v1253 = vunpack.c.l.b16 %v273
  %v1254 = vunpack.c.l.b16 %v274
  %v1255 = vunpack.c.l.b16 %v275
  %v1256 = vunpack.c.l.b16 %v276
  %v1257 = vunpack.c.l.b16 %v277
  %v1258 = vunpack.c.l.b16 %v278
  %v1259 = vunpack.c.l.b16 %v279
  %v1260 = vunpack.c.l.b16 %v280
  %v1261 = vunpack.c.l.b16 %v281
  %v1262 = vunpack.c.l.b16 %v282
  %v1263 = vunpack.c.l.b16 %v283
  %v1264 = vunpack.c.l.b16 %v284
  %v1265 = vunpack.c.l.b16 %v285
  %v1266 = vunpack.c.l.b16 %v286
  %v1267 = vunpack.c.l.b16 %v287
  %v1268 = vunpack.c.l.b16 %v288
  %v1269 = vunpack.c.l.b16 %v289
  %v1270 = vunpack.c.l.b16 %v290
  %v1271 = vunpack.c.l.b16 %v291
  %v1272 = vunpack.c.l.b16 %v292
  %v1273 = vunpack.c.l.b16 %v293
  %v1274 = vunpack.c.l.b16 %v294
  %v1275 = vunpack.c.l.b16 %v295
  %v1276 = vunpack.c.l.b16 %v296
  %v1277 = vunpack.c.l.b16 %v297
  %v1278 = vunpack.c.l.b16 %v298
  %v1279 = vunpack.c.l.b16 %v299
  %v1280 = vunpack.c.l.b16 %v300
  %v1281 = vunpack.c.l.b16 %v301
  %v1282 = vunpack.c.l.b16 %v302
  %v1283 = vunpack.c.l.b16 %v303
  %v1284 = vunpack.c.l.b16 %v304
  %v1285 = vunpack.c.l.b16 %v305
  %v1286 = vunpack.c.l.b16 %v306
  %v1287 = vunpack.c.l.b16 %v307
  %v1288 = vunpack.c.l.b16 %v308
  %v1289 = vunpack.c.l.b16 %v309
  %v1290 = vunpack.c.l.b16 %v310
  %v1291 = vunpack.c.l.b16 %v311
  %v1292 = vunpack.c.l.b16 %v312
  %v1293 = vunpack.c.l.b16 %v313
  %v1294 = vunpack.c.l.b16 %v314
  %v1295 = vunpack.c.l.b16 %v315
  %v1296 = vunpack.c.l.b16 %v316
  %v1297 = vunpack.c.l.b16 %v317
  %v1298 = vunpack.c.l.b16 %v318
  %v1299 = vunpack.c.l.b16 %v319
  %v1300 = vunpack.c.l.b16 %v320
  %v1301 = vunpack.c.l.b16 %v321
  %v1302 = vunpack.c.l.b16 %v322
  %v1303 = vunpack.c.l.b16 %v323
  %v1304 = vunpack.c.l.b16 %v324
  %v1305 = vunpack.c.l.b16 %v325
  %v1306 = vunpack.c.l.b16 %v326
  %v1307 = vunpack.c.l.b16 %v327
  %v1308 = vunpack.c.l.b16 %v328
  %v1309 = vunpack.c.l.b16 %v329
  %v1310 = vunpack.c.l.b16 %v330
  %v1311 = vunpack.c.l.b16 %v331
  %v1312 = vunpack.c.l.b16 %v332
  %v1313 = vunpack.c.l.b16 %v333
  %v1314 = vunpack.c.l.b16 %v334
  %v1315 = vunpack.c.l.b16 %v335
  %v1316 = vunpack.c.l.b16 %v336
  %v1317 = vunpack.c.l.b16 %v337
  %v1318 = vunpack.c.l.b16 %v338
  %v1319 = vunpack.c.l.b16 %v339
  %v1320 = vunpack.c.l.b16 %v340
  %v1321 = vunpack.c.l.b16 %v341
  %v1322 = vunpack.c.l.b16 %v342
  %v1323 = vunpack.c.l.b16 %v343
  %v1324 = vunpack.c.l.b16 %v344
  %v1325 = vunpack.c.l.b16 %v345
  %v1326 = vunpack.c.l.b16 %v346
  %v1327 = vunpack.c.l.b16 %v347
  %v1328 = vunpack.c.l.b16 %v348
  %v1329 = vunpack.c.l.b16 %v349
  %v1330 = vunpack.c.l.b16 %v350
  %v1331 = vunpack.c.l.b16 %v351
  %v1332 = vunpack.c.l.b16 %v352
  %v1333 = vunpack.c.l.b16 %v353
  %v1334 = vunpack.c.l.b16 %v354
  %v1335 = vunpack.c.l.b16 %v355
  %v1336 = vunpack.c.l.b16 %v356
  %v1337 = vunpack.c.l.b16 %v357
  %v1338 = vunpack.c.l.b16 %v358
  %v1339 = vunpack.c.l.b16 %v359
  %v1340 = vunpack.c.l.b16 %v360
  %v1341 = vunpack.c.l.b16 %v361
  %v1342 = vunpack.c.l.b16 %v362
  %v1343 = vunpack.c.l.b16 %v363
  %v1344 = vunpack.c.l.b16 %v364
  %v1345 = vunpack.c.l.b16 %v365
  %v1346 = vunpack.c.l.b16 %v366
  %v1347 = vunpack.c.l.b16 %v367
  %v1348 = vunpack.c.l.b16 %v368
  %v1349 = vunpack.c.l.b16 %v369
  %v1350 = vunpack.c.l.b16 %v370
  %v1351 = vunpack.c.l.b16 %v371
  %v1352 = vunpack.c.l.b16 %v372
  %v1353 = vunpack.c.l.b16 %v373
  %v1354 = vunpack.c.l.b16 %v374
  %v1355 = vunpack.c.l.b16 %v375
  %v1356 = vunpack.c.l.b16 %v376
  %v1357 = vunpack.c.l.b16 %v377
  %v1358 = vunpack.c.l.b16 %v378
  %v1359 = vunpack.c.l.b16 %v379
  %v1360 = vunpack.c.l.b16 %v380
  %v1361 = vunpack.c.l.b16 %v381
  %v1362 = vunpack.c.l.b16 %v382
  %v1363 = vunpack.c.l.b16 %v383
  %v1364 = vunpack.c.l.b16 %v384
  %v1365 = vunpack.c.l.b16 %v385
  %v1366 = vunpack.c.l.b16 %v386
  %v1367 = vunpack.c.l.b16 %v387
  %v1368 = vunpack.c.l.b16 %v388
  %v1369 = vunpack.c.l.b16 %v389
  %v1370 = vunpack.c.l.b16 %v390
  %v1371 = vunpack.c.l.b16 %v391
  %v1372 = vunpack.c.l.b16 %v392
  %v1373 = vunpack.c.l.b16 %v393
  %v1374 = vunpack.c.l.b16 %v394
  %v1375 = vunpack.c.l.b16 %v395
  %v1376 = vunpack.c.l.b16 %v396
  %v1377 = vunpack.c.l.b16 %v397
  %v1378 = vunpack.c.l.b16 %v398
  %v1379 = vunpack.c.l.b16 %v399
  %v1380 = vunpack.c.l.b16 %v400
  %v1381 = vunpack.c.l.b16 %v401
  %v1382 = vunpack.c.l.b16 %v402
  %v1383 = vunpack.c.l.b16 %v403
  %v1384 = vunpack.c.l.b16 %v404
  %v1385 = vunpack.c.l.b16 %v405
  %v1386 = vunpack.c.l.b16 %v406
  %v1387 = vunpack.c.l.b16 %v407
  %v1388 = vunpack.c.l.b16 %v408
  %v1389 = vunpack.c.l.b16 %v409
  %v1390 = vunpack.c.l.b16 %v410
  %v1391 = vunpack.c.l.b16 %v411
  %v1392 = vunpack.c.l.b16 %v412
  %v1393 = vunpack.c.l.b16 %v413
  %v1394 = vunpack.c.l.b16 %v414
  %v1395 = vunpack.c.l.b16 %v415
  %v1396 = vunpack.c.l.b16 %v416
  %v1397 = vunpack.c.l.b16 %v417
  %v1398 = vunpack.c.l.b16 %v418
  %v1399 = vunpack.c.l.b16 %v419
  %v1400 = vunpack.c.l.b16 %v420
  %v1401 = vunpack.c.l.b16 %v421
  %v1402 = vunpack.c.l.b16 %v422
  %v1403 = vunpack.c.l.b16 %v423
  %v1404 = vunpack.c.l.b16 %v424
  %v1405 = vunpack.c.l.b16 %v425
  %v1406 = vpack.c.b16 %v1015, %v1014
  %v1407 = vpack.c.b16 %v1017, %v1016
  %v1408 = vpack.c.b16 %v1019, %v1018
  %v1409 = vpack.c.b16 %v1021, %v1020
  %v1410 = vpack.c.b16 %v1023, %v1022
  %v1411 = vpack.c.b16 %v1025, %v1024
  %v1412 = vpack.c.b16 %v1027, %v1026
  %v1413 = vpack.c.b16 %v1029, %v1028
  %v1414 = vpack.c.b16 %v1031, %v1030
  %v1415 = vpack.c.b16 %v1033, %v1032
  %v1416 = vpack.c.b16 %v1035, %v1034
  %v1417 = vpack.c.b16 %v1037, %v1036
  %v1418 = vpack.c.b16 %v1039, %v1038
  %v1419 = vpack.c.b16 %v1041, %v1040
  %v1420 = vpack.c.b16 %v1043, %v1042
  %v1421 = vpack.c.b16 %v1045, %v1044
  %v1422 = vpack.c.b16 %v1047, %v1046
  %v1423 = vpack.c.b16 %v1049, %v1048
  %v1424 = vpack.c.b16 %v1051, %v1050
  %v1425 = vpack.c.b16 %v1053, %v1052
  %v1426 = vpack.c.b16 %v1055, %v1054
  %v1427 = vpack.c.b16 %v1057, %v1056
  %v1428 = vpack.c.b16 %v1059, %v1058
  %v1429 = vpack.c.b16 %v1061, %v1060
  %v1430 = vpack.c.b16 %v1063, %v1062
  %v1431 = vpack.c.b16 %v1065, %v1064
  %v1432 = vpack.c.b16 %v1067, %v1066
  %v1433 = vpack.c.b16 %v1069, %v1068
  %v1434 = vpack.c.b16 %v1071, %v1070
  %v1435 = vpack.c.b16 %v1073, %v1072
  %v1436 = vpack.c.b16 %v1075, %v1074
  %v1437 = vpack.c.b16 %v1077, %v1076
  %v1438 = vpack.c.b16 %v1079, %v1078
  %v1439 = vpack.c.b16 %v1081, %v1080
  %v1440 = vpack.c.b16 %v1083, %v1082
  %v1441 = vpack.c.b16 %v1085, %v1084
  %v1442 = vpack.c.b16 %v1087, %v1086
  %v1443 = vpack.c.b16 %v1089, %v1088
  %v1444 = vpack.c.b16 %v1091, %v1090
  %v1445 = vpack.c.b16 %v1093, %v1092
  %v1446 = vpack.c.b16 %v1095, %v1094
  %v1447 = vpack.c.b16 %v1097, %v1096
  %v1448 = vpack.c.b16 %v1099, %v1098
  %v1449 = vpack.c.b16 %v1101, %v1100
  %v1450 = vpack.c.b16 %v1103, %v1102
  %v1451 = vpack.c.b16 %v1105, %v1104
  %v1452 = vpack.c.b16 %v1107, %v1106
  %v1453 = vpack.c.b16 %v1109, %v1108
  %v1454 = vpack.c.b16 %v1111, %v1110
  %v1455 = vpack.c.b16 %v1113, %v1112
  %v1456 = vpack.c.b16 %v1115, %v1114
  %v1457 = vpack.c.b16 %v1117, %v1116
  %v1458 = vpack.c.b16 %v1119, %v1118
  %v1459 = vpack.c.b16 %v1121, %v1120
  %v1460 = vpack.c.b16 %v1123, %v1122
  %v1461 = vpack.c.b16 %v1125, %v1124
  %v1462 = vpack.c.b16 %v1127, %v1126
  %v1463 = vpack.c.b16 %v1129, %v1128
  %v1464 = vpack.c.b16 %v1131, %v1130
  %v1465 = vpack.c.b16 %v1133, %v1132
  %v1466 = vpack.c.b16 %v1135, %v1134
  %v1467 = vpack.c.b16 %v1137, %v1136
  %v1468 = vpack.c.b16 %v1139, %v1138
  %v1469 = vpack.c.b16 %v1141, %v1140
  %v1470 = vpack.c.b16 %v1143, %v1142
  %v1471 = vpack.c.b16 %v1145, %v1144
  %v1472 = vpack.c.b16 %v1147, %v1146
  %v1473 = vpack.c.b16 %v1149, %v1148
  %v1474 = vpack.c.b16 %v1151, %v1150
  %v1475 = vpack.c.b16 %v1153, %v1152
  %v1476 = vpack.c.b16 %v1155, %v1154
  %v1477 = vpack.c.b16 %v1157, %v1156
  %v1478 = vpack.c.b16 %v1159, %v1158
  %v1479 = vpack.c.b16 %v1161, %v1160
  %v1480 = vpack.c.b16 %v1163, %v1162
  %v1481 = vpack.c.b16 %v1165, %v1164
  %v1482 = vpack.c.b16 %v1167, %v1166
  %v1483 = vpack.c.b16 %v1169, %v1168
  %v1484 = vpack.c.b16 %v1171, %v1170
  %v1485 = vpack.c.b16 %v1173, %v1172
  %v1486 = vpack.c.b16 %v1175, %v1174
  %v1487 = vpack.c.b16 %v1177, %v1176
  %v1488 = vpack.c.b16 %v1179, %v1178
  %v1489 = vpack.c.b16 %v1181, %v1180
  %v1490 = vpack.c.b16 %v1183, %v1182
  %v1491 = vpack.c.b16 %v1185, %v1184
  %v1492 = vpack.c.b16 %v1187, %v1186
  %v1493 = vpack.c.b16 %v1189, %v1188
  %v1494 = vpack.c.b16 %v1191, %v1190
  %v1495 = vpack.c.b16 %v1193, %v1192
  %v1496 = vpack.c.b16 %v1195, %v1194
  %v1497 = vpack.c.b16 %v1197, %v1196
  %v1498 = vpack.c.b16 %v1199, %v1198
  %v1499 = vpack.c.b16 %v1201, %v1200
  %v1500 = vpack.c.b16 %v1203, %v1202
  %v1501 = vpack.c.b16 %v1205, %v1204
  %v1502 = vpack.c.b16 %v1207, %v1206
  %v1503 = vpack.c.b16 %v1209, %v1208
  %v1504 = vpack.c.b16 %v1211, %v1210
  %v1505 = vpack.c.b16 %v1213, %v1212
  %v1506 = vpack.c.b16 %v1215, %v1214
  %v1507 = vpack.c.b16 %v1217, %v1216
  %v1508 = vpack.c.b16 %v1219, %v1218
  %v1509 = vpack.c.b16 %v1221, %v1220
  %v1510 = vpack.c.b16 %v1223, %v1222
  %v1511 = vpack.c.b16 %v1225, %v1224
  %v1512 = vpack.c.b16 %v1227, %v1226
  %v1513 = vpack.c.b16 %v1229, %v1228
  %v1514 = vpack.c.b16 %v1231, %v1230
  %v1515 = vpack.c.b16 %v1233, %v1232
  %v1516 = vpack.c.b16 %v1235, %v1234
  %v1517 = vpack.c.b16 %v1237, %v1236
  %v1518 = vpack.c.b16 %v1239, %v1238
  %v1519 = vpack.c.b16 %v1241, %v1240
  %v1520 = vpack.c.b16 %v1243, %v1242
  %v1521 = vpack.c.b16 %v1245, %v1244
  %v1522 = vpack.c.b16 %v1247, %v1246
  %v1523 = vpack.c.b16 %v1249, %v1248
  %v1524 = vpack.c.b16 %v1251, %v1250
  %v1525 = vpack.c.b16 %v1253, %v1252
  %v1526 = vpack.c.b16 %v1255, %v1254
  %v1527 = vpack.c.b16 %v1257, %v1256
  %v1528 = vpack.c.b16 %v1259, %v1258
  %v1529 = vpack.c.b16 %v1261, %v1260
  %v1530 = vpack.c.b16 %v1263, %v1262
  %v1531 = vpack.c.b16 %v1265, %v1264
  %v1532 = vpack.c.b16 %v1267, %v1266
  %v1533 = vpack.c.b16 %v1269, %v1268
  %v1534 = vpack.c.b16 %v1271, %v1270
  %v1535 = vpack.c.b16 %v1273, %v1272
  %v1536 = vpack.c.b16 %v1275, %v1274
  %v1537 = vpack.c.b16 %v1277, %v1276
  %v1538 = vpack.c.b16 %v1279, %v1278
  %v1539 = vpack.c.b16 %v1281, %v1280
  %v1540 = vpack.c.b16 %v1283, %v1282
  %v1541 = vpack.c.b16 %v1285, %v1284
  %v1542 = vpack.c.b16 %v1287, %v1286
  %v1543 = vpack.c.b16 %v1289, %v1288
  %v1544 = vpack.c.b16 %v1291, %v1290
  %v1545 = vpack.c.b16 %v1293, %v1292
  %v1546 = vpack.c.b16 %v1295, %v1294
  %v1547 = vpack.c.b16 %v1297, %v1296
  %v1548 = vpack.c.b16 %v1299, %v1298
  %v1549 = vpack.c.b16 %v1301, %v1300
  %v1550 = vpack.c.b16 %v1303, %v1302
  %v1551 = vpack.c.b16 %v1305, %v1304
  %v1552 = vpack.c.b16 %v1307, %v1306
  %v1553 = vpack.c.b16 %v1309, %v1308
  %v1554 = vpack.c.b16 %v1311, %v1310
  %v1555 = vpack.c.b16 %v1313, %v1312
  %v1556 = vpack.c.b16 %v1315, %v1314
  %v1557 = vpack.c.b16 %v1317, %v1316
  %v1558 = vpack.c.b16 %v1319, %v1318
  %v1559 = vpack.c.b16 %v1321, %v1320
  %v1560 = vpack.c.b16 %v1323, %v1322
  %v1561 = vpack.c.b16 %v1325, %v1324
  %v1562 = vpack.c.b16 %v1327, %v1326
  %v1563 = vpack.c.b16 %v1329, %v1328
  %v1564 = vpack.c.b16 %v1331, %v1330
  %v1565 = vpack.c.b16 %v1333, %v1332
  %v1566 = vpack.c.b16 %v1335, %v1334
  %v1567 = vpack.c.b16 %v1337, %v1336
  %v1568 = vpack.c.b16 %v1339, %v1338
  %v1569 = vpack.c.b16 %v1341, %v1340
  %v1570 = vpack.c.b16 %v1343, %v1342
  %v1571 = vpack.c.b16 %v1345, %v1344
  %v1572 = vpack.c.b16 %v1347, %v1346
  %v1573 = vpack.c.b16 %v1349, %v1348
  %v1574 = vpack.c.b16 %v1351, %v1350
  %v1575 = vpack.c.b16 %v1353, %v1352
  %v1576 = vpack.c.b16 %v1355, %v1354
  %v1577 = vpack.c.b16 %v1357, %v1356
  %v1578 = vpack.c.b16 %v1359, %v1358
  %v1579 = vpack.c.b16 %v1361, %v1360
  %v1580 = vpack.c.b16 %v1363, %v1362
  %v1581 = vpack.c.b16 %v1365, %v1364
  %v1582 = vpack.c.b16 %v1367, %v1366
  %v1583 = vpack.c.b16 %v1369, %v1368
  %v1584 = vpack.c.b16 %v1371, %v1370
  %v1585 = vpack.c.b16 %v1373, %v1372
  %v1586 = vpack.c.b16 %v1375, %v1374
  %v1587 = vpack.c.b16 %v1377, %v1376
  %v1588 = vpack.c.b16 %v1379, %v1378
  %v1589 = vpack.c.b16 %v1381, %v1380
  %v1590 = vpack.c.b16 %v1383, %v1382
  %v1591 = vpack.c.b16 %v1385, %v1384
  %v1592 = vpack.c.b16 %v1387, %v1386
  %v1593 = vpack.c.b16 %v1389, %v1388
  %v1594 = vpack.c.b16 %v1391, %v1390
  %v1595 = vpack.c.b16 %v1393, %v1392
  %v1596 = vpack.c.b16 %v1395, %v1394
  %v1597 = vpack.c.b16 %v1397, %v1396
  %v1598 = vpack.c.b16 %v1399, %v1398
  %v1599 = vpack.c.b16 %v1401, %v1400
  %v1600 = vpack.c.b16 %v1403, %v1402
  %v1601 = vpack.c.b16 %v1405, %v1404
  %vm1798 = vcmask 523264
  %v1800 = vsel %vm1798, %v597, 0
  %1802 = vmatprep.subr.bf16.mxu0 0
  %1803 = vmatpush1.bf16.msra.mxu0 %v1406
  %1804 = vmatprep.subr.bf16.mxu0 0
  %1805 = vmatpush1.bf16.msra.mxu0 %v1407
  %1806 = vmatprep.subr.bf16.mxu0 0
  %1807 = vmatpush1.bf16.msra.mxu0 %v1408
  %1808 = vmatprep.subr.bf16.mxu0 0
  %1809 = vmatpush1.bf16.msra.mxu0 %v1409
  %1810 = vmatprep.subr.bf16.mxu0 0
  %1811 = vmatpush1.bf16.msra.mxu0 %v1410
  %1812 = vmatprep.subr.bf16.mxu0 0
  %1813 = vmatpush1.bf16.msra.mxu0 %v1411
  %1814 = vmatprep.subr.bf16.mxu0 0
  %1815 = vmatpush1.bf16.msra.mxu0 %v1412
  %1816 = vmatprep.subr.bf16.mxu0 0
  %1817 = vmatpush1.bf16.msra.mxu0 %v1413
  %1818 = vmatprep.subr.bf16.mxu0 0
  %1819 = vmatpush1.bf16.msra.mxu0 %v1414
  %1820 = vmatprep.subr.bf16.mxu0 0
  %1821 = vmatpush1.bf16.msra.mxu0 %v1415
  %1822 = vmatprep.subr.bf16.mxu0 0
  %1823 = vmatpush1.bf16.msra.mxu0 %v1416
  %1824 = vmatprep.subr.bf16.mxu0 0
  %1825 = vmatpush1.bf16.msra.mxu0 %v1417
  %1826 = vmatprep.subr.bf16.mxu0 0
  %1827 = vmatpush1.bf16.msra.mxu0 %v1418
  %1828 = vmatprep.subr.bf16.mxu0 0
  %1829 = vmatpush1.bf16.msra.mxu0 %v1419
  %1830 = vmatprep.subr.bf16.mxu0 0
  %1831 = vmatpush1.bf16.msra.mxu0 %v1420
  %1832 = vmatprep.subr.bf16.mxu0 0
  %1833 = vmatpush1.bf16.msra.mxu0 %v1421
  %1834 = vmatprep.mubr.bf16.mxu0 %v474
  %1835 = vmatmul.mubr.bf16.gmra.mrb[0].mxu0 %v460
  %v1836 = vpop.f32.mrb[0].mxu0
  %v1837 = vadd.f32 %v431, %v1836
  %v1838 = vpop.f32.mrb[0].mxu0
  %v1839 = vpop.f32.mrb[0].mxu0
  %v1840 = vpop.f32.mrb[0].mxu0
  %1841 = vdwg.mxu0
  %1842 = vmatprep.subr.bf16.mxu0 0
  %1843 = vmatpush1.bf16.msra.mxu0 %v1422
  %1844 = vmatprep.subr.bf16.mxu0 0
  %1845 = vmatpush1.bf16.msra.mxu0 %v1423
  %1846 = vmatprep.subr.bf16.mxu0 0
  %1847 = vmatpush1.bf16.msra.mxu0 %v1424
  %1848 = vmatprep.subr.bf16.mxu0 0
  %1849 = vmatpush1.bf16.msra.mxu0 %v1425
  %1850 = vmatprep.subr.bf16.mxu0 0
  %1851 = vmatpush1.bf16.msra.mxu0 %v1426
  %1852 = vmatprep.subr.bf16.mxu0 0
  %1853 = vmatpush1.bf16.msra.mxu0 %v1427
  %1854 = vmatprep.subr.bf16.mxu0 0
  %1855 = vmatpush1.bf16.msra.mxu0 %v1428
  %1856 = vmatprep.subr.bf16.mxu0 0
  %1857 = vmatpush1.bf16.msra.mxu0 %v1429
  %1858 = vmatprep.subr.bf16.mxu0 0
  %1859 = vmatpush1.bf16.msra.mxu0 %v1430
  %1860 = vmatprep.subr.bf16.mxu0 0
  %1861 = vmatpush1.bf16.msra.mxu0 %v1431
  %1862 = vmatprep.subr.bf16.mxu0 0
  %1863 = vmatpush1.bf16.msra.mxu0 %v1432
  %1864 = vmatprep.subr.bf16.mxu0 0
  %1865 = vmatpush1.bf16.msra.mxu0 %v1433
  %1866 = vmatprep.subr.bf16.mxu0 0
  %1867 = vmatpush1.bf16.msra.mxu0 %v1434
  %1868 = vmatprep.subr.bf16.mxu0 0
  %1869 = vmatpush1.bf16.msra.mxu0 %v1435
  %1870 = vmatprep.subr.bf16.mxu0 0
  %1871 = vmatpush1.bf16.msra.mxu0 %v1436
  %1872 = vmatprep.subr.bf16.mxu0 0
  %1873 = vmatpush1.bf16.msra.mxu0 %v1437
  %1874 = vmatprep.mubr.bf16.mxu0 %v484
  %1875 = vmatmul.mubr.bf16.gmra.mrb[0].mxu0 %v482
  %v1876 = vpop.f32.mrb[0].mxu0
  %v1877 = vadd.f32 %v1837, %v1876
  %v1878 = vpop.f32.mrb[0].mxu0
  %v1879 = vpop.f32.mrb[0].mxu0
  %v1880 = vpop.f32.mrb[0].mxu0
  %1881 = vdwg.mxu0
  %1882 = vmatprep.subr.bf16.mxu0 0
  %1883 = vmatpush1.bf16.msra.mxu0 %v1438
  %1884 = vmatprep.subr.bf16.mxu0 0
  %1885 = vmatpush1.bf16.msra.mxu0 %v1439
  %1886 = vmatprep.subr.bf16.mxu0 0
  %1887 = vmatpush1.bf16.msra.mxu0 %v1440
  %1888 = vmatprep.subr.bf16.mxu0 0
  %1889 = vmatpush1.bf16.msra.mxu0 %v1441
  %1890 = vmatprep.subr.bf16.mxu0 0
  %1891 = vmatpush1.bf16.msra.mxu0 %v1442
  %1892 = vmatprep.subr.bf16.mxu0 0
  %1893 = vmatpush1.bf16.msra.mxu0 %v1443
  %1894 = vmatprep.subr.bf16.mxu0 0
  %1895 = vmatpush1.bf16.msra.mxu0 %v1444
  %1896 = vmatprep.subr.bf16.mxu0 0
  %1897 = vmatpush1.bf16.msra.mxu0 %v1445
  %1898 = vmatprep.subr.bf16.mxu0 0
  %1899 = vmatpush1.bf16.msra.mxu0 %v1446
  %1900 = vmatprep.subr.bf16.mxu0 0
  %1901 = vmatpush1.bf16.msra.mxu0 %v1447
  %1902 = vmatprep.subr.bf16.mxu0 0
  %1903 = vmatpush1.bf16.msra.mxu0 %v1448
  %1904 = vmatprep.subr.bf16.mxu0 0
  %1905 = vmatpush1.bf16.msra.mxu0 %v1449
  %1906 = vmatprep.subr.bf16.mxu0 0
  %1907 = vmatpush1.bf16.msra.mxu0 %v1450
  %1908 = vmatprep.subr.bf16.mxu0 0
  %1909 = vmatpush1.bf16.msra.mxu0 %v1451
  %1910 = vmatprep.subr.bf16.mxu0 0
  %1911 = vmatpush1.bf16.msra.mxu0 %v1452
  %1912 = vmatprep.subr.bf16.mxu0 0
  %1913 = vmatpush1.bf16.msra.mxu0 %v1453
  %1914 = vmatprep.mubr.bf16.mxu0 %v481
  %1915 = vmatmul.mubr.bf16.gmra.mrb[0].mxu0 %v467
  %v1916 = vpop.f32.mrb[0].mxu0
  %v1917 = vadd.f32 %v1877, %v1916
  %v1918 = vpop.f32.mrb[0].mxu0
  %v1919 = vpop.f32.mrb[0].mxu0
  %v1920 = vpop.f32.mrb[0].mxu0
  %1921 = vdwg.mxu0
  %1922 = vmatprep.subr.bf16.mxu0 0
  %1923 = vmatpush1.bf16.msra.mxu0 %v1454
  %1924 = vmatprep.subr.bf16.mxu0 0
  %1925 = vmatpush1.bf16.msra.mxu0 %v1455
  %1926 = vmatprep.subr.bf16.mxu0 0
  %1927 = vmatpush1.bf16.msra.mxu0 %v1456
  %1928 = vmatprep.subr.bf16.mxu0 0
  %1929 = vmatpush1.bf16.msra.mxu0 %v1457
  %1930 = vmatprep.subr.bf16.mxu0 0
  %1931 = vmatpush1.bf16.msra.mxu0 %v1458
  %1932 = vmatprep.subr.bf16.mxu0 0
  %1933 = vmatpush1.bf16.msra.mxu0 %v1459
  %1934 = vmatprep.subr.bf16.mxu0 0
  %1935 = vmatpush1.bf16.msra.mxu0 %v1460
  %1936 = vmatprep.subr.bf16.mxu0 0
  %1937 = vmatpush1.bf16.msra.mxu0 %v1461
  %1938 = vmatprep.subr.bf16.mxu0 0
  %1939 = vmatpush1.bf16.msra.mxu0 %v1462
  %1940 = vmatprep.subr.bf16.mxu0 0
  %1941 = vmatpush1.bf16.msra.mxu0 %v1463
  %1942 = vmatprep.subr.bf16.mxu0 0
  %1943 = vmatpush1.bf16.msra.mxu0 %v1464
  %1944 = vmatprep.subr.bf16.mxu0 0
  %1945 = vmatpush1.bf16.msra.mxu0 %v1465
  %1946 = vmatprep.subr.bf16.mxu0 0
  %1947 = vmatpush1.bf16.msra.mxu0 %v1466
  %1948 = vmatprep.subr.bf16.mxu0 0
  %1949 = vmatpush1.bf16.msra.mxu0 %v1467
  %1950 = vmatprep.subr.bf16.mxu0 0
  %1951 = vmatpush1.bf16.msra.mxu0 %v1468
  %1952 = vmatprep.subr.bf16.mxu0 0
  %1953 = vmatpush1.bf16.msra.mxu0 %v1469
  %1954 = vmatprep.mubr.bf16.mxu0 %v485
  %1955 = vmatmul.mubr.bf16.gmra.mrb[0].mxu0 %v483
  %v1956 = vpop.f32.mrb[0].mxu0
  %v1957 = vadd.f32 %v1917, %v1956
  %v1958 = vpop.f32.mrb[0].mxu0
  %v1959 = vpop.f32.mrb[0].mxu0
  %v1960 = vpop.f32.mrb[0].mxu0
  %1961 = vdwg.mxu0
  %1962 = vmatprep.subr.bf16.mxu0 0
  %1963 = vmatpush1.bf16.msra.mxu0 %v1470
  %1964 = vmatprep.subr.bf16.mxu0 0
  %1965 = vmatpush1.bf16.msra.mxu0 %v1471
  %1966 = vmatprep.subr.bf16.mxu0 0
  %1967 = vmatpush1.bf16.msra.mxu0 %v1472
  %1968 = vmatprep.subr.bf16.mxu0 0
  %1969 = vmatpush1.bf16.msra.mxu0 %v1473
  %1970 = vmatprep.subr.bf16.mxu0 0
  %1971 = vmatpush1.bf16.msra.mxu0 %v1474
  %1972 = vmatprep.subr.bf16.mxu0 0
  %1973 = vmatpush1.bf16.msra.mxu0 %v1475
  %1974 = vmatprep.subr.bf16.mxu0 0
  %1975 = vmatpush1.bf16.msra.mxu0 %v1476
  %1976 = vmatprep.subr.bf16.mxu0 0
  %1977 = vmatpush1.bf16.msra.mxu0 %v1477
  %1978 = vmatprep.subr.bf16.mxu0 0
  %1979 = vmatpush1.bf16.msra.mxu0 %v1478
  %1980 = vmatprep.subr.bf16.mxu0 0
  %1981 = vmatpush1.bf16.msra.mxu0 %v1479
  %1982 = vmatprep.subr.bf16.mxu0 0
  %1983 = vmatpush1.bf16.msra.mxu0 %v1480
  %1984 = vmatprep.subr.bf16.mxu0 0
  %1985 = vmatpush1.bf16.msra.mxu0 %v1481
  %1986 = vmatprep.subr.bf16.mxu0 0
  %1987 = vmatpush1.bf16.msra.mxu0 %v1482
  %1988 = vmatprep.subr.bf16.mxu0 0
  %1989 = vmatpush1.bf16.msra.mxu0 %v1483
  %1990 = vmatprep.subr.bf16.mxu0 0
  %1991 = vmatpush1.bf16.msra.mxu0 %v1484
  %1992 = vmatprep.subr.bf16.mxu0 0
  %1993 = vmatpush1.bf16.msra.mxu0 %v1485
  %1994 = vmatprep.mubr.bf16.mxu0 %v523
  %1995 = vmatmul.mubr.bf16.gmra.mrb[0].mxu0 %v509
  %v1996 = vpop.f32.mrb[0].mxu0
  %v1997 = vadd.f32 %v1957, %v1996
  %v1998 = vpop.f32.mrb[0].mxu0
  %v1999 = vpop.f32.mrb[0].mxu0
  %v2000 = vpop.f32.mrb[0].mxu0
  %2001 = vdwg.mxu0
  %2002 = vmatprep.subr.bf16.mxu0 0
  %2003 = vmatpush1.bf16.msra.mxu0 %v1486
  %2004 = vmatprep.subr.bf16.mxu0 0
  %2005 = vmatpush1.bf16.msra.mxu0 %v1487
  %2006 = vmatprep.subr.bf16.mxu0 0
  %2007 = vmatpush1.bf16.msra.mxu0 %v1488
  %2008 = vmatprep.subr.bf16.mxu0 0
  %2009 = vmatpush1.bf16.msra.mxu0 %v1489
  %2010 = vmatprep.subr.bf16.mxu0 0
  %2011 = vmatpush1.bf16.msra.mxu0 %v1490
  %2012 = vmatprep.subr.bf16.mxu0 0
  %2013 = vmatpush1.bf16.msra.mxu0 %v1491
  %2014 = vmatprep.subr.bf16.mxu0 0
  %2015 = vmatpush1.bf16.msra.mxu0 %v1492
  %2016 = vmatprep.subr.bf16.mxu0 0
  %2017 = vmatpush1.bf16.msra.mxu0 %v1493
  %2018 = vmatprep.subr.bf16.mxu0 0
  %2019 = vmatpush1.bf16.msra.mxu0 %v1494
  %2020 = vmatprep.subr.bf16.mxu0 0
  %2021 = vmatpush1.bf16.msra.mxu0 %v1495
  %2022 = vmatprep.subr.bf16.mxu0 0
  %2023 = vmatpush1.bf16.msra.mxu0 %v1496
  %2024 = vmatprep.subr.bf16.mxu0 0
  %2025 = vmatpush1.bf16.msra.mxu0 %v1497
  %2026 = vmatprep.subr.bf16.mxu0 0
  %2027 = vmatpush1.bf16.msra.mxu0 %v1498
  %2028 = vmatprep.subr.bf16.mxu0 0
  %2029 = vmatpush1.bf16.msra.mxu0 %v1499
  %2030 = vmatprep.subr.bf16.mxu0 0
  %2031 = vmatpush1.bf16.msra.mxu0 %v1500
  %2032 = vmatprep.subr.bf16.mxu0 0
  %2033 = vmatpush1.bf16.msra.mxu0 %v1501
  %2034 = vmatprep.mubr.bf16.mxu0 %v533
  %2035 = vmatmul.mubr.bf16.gmra.mrb[0].mxu0 %v531
  %v2036 = vpop.f32.mrb[0].mxu0
  %v2037 = vadd.f32 %v1997, %v2036
  %v2038 = vpop.f32.mrb[0].mxu0
  %v2039 = vpop.f32.mrb[0].mxu0
  %v2040 = vpop.f32.mrb[0].mxu0
  %2041 = vdwg.mxu0
  %2042 = vmatprep.subr.bf16.mxu0 0
  %2043 = vmatpush1.bf16.msra.mxu0 %v1502
  %2044 = vmatprep.subr.bf16.mxu0 0
  %2045 = vmatpush1.bf16.msra.mxu0 %v1503
  %2046 = vmatprep.subr.bf16.mxu0 0
  %2047 = vmatpush1.bf16.msra.mxu0 %v1504
  %2048 = vmatprep.subr.bf16.mxu0 0
  %2049 = vmatpush1.bf16.msra.mxu0 %v1505
  %2050 = vmatprep.subr.bf16.mxu0 0
  %2051 = vmatpush1.bf16.msra.mxu0 %v1506
  %2052 = vmatprep.subr.bf16.mxu0 0
  %2053 = vmatpush1.bf16.msra.mxu0 %v1507
  %2054 = vmatprep.subr.bf16.mxu0 0
  %2055 = vmatpush1.bf16.msra.mxu0 %v1508
  %2056 = vmatprep.subr.bf16.mxu0 0
  %2057 = vmatpush1.bf16.msra.mxu0 %v1509
  %2058 = vmatprep.subr.bf16.mxu0 0
  %2059 = vmatpush1.bf16.msra.mxu0 %v1510
  %2060 = vmatprep.subr.bf16.mxu0 0
  %2061 = vmatpush1.bf16.msra.mxu0 %v1511
  %2062 = vmatprep.subr.bf16.mxu0 0
  %2063 = vmatpush1.bf16.msra.mxu0 %v1512
  %2064 = vmatprep.subr.bf16.mxu0 0
  %2065 = vmatpush1.bf16.msra.mxu0 %v1513
  %2066 = vmatprep.subr.bf16.mxu0 0
  %2067 = vmatpush1.bf16.msra.mxu0 %v1514
  %2068 = vmatprep.subr.bf16.mxu0 0
  %2069 = vmatpush1.bf16.msra.mxu0 %v1515
  %2070 = vmatprep.subr.bf16.mxu0 0
  %2071 = vmatpush1.bf16.msra.mxu0 %v1516
  %2072 = vmatprep.subr.bf16.mxu0 0
  %2073 = vmatpush1.bf16.msra.mxu0 %v1517
  %2074 = vmatprep.mubr.bf16.mxu0 %v530
  %2075 = vmatmul.mubr.bf16.gmra.mrb[0].mxu0 %v516
  %v2076 = vpop.f32.mrb[0].mxu0
  %v2077 = vadd.f32 %v2037, %v2076
  %v2078 = vpop.f32.mrb[0].mxu0
  %v2079 = vpop.f32.mrb[0].mxu0
  %v2080 = vpop.f32.mrb[0].mxu0
  %2081 = vdwg.mxu0
  %2082 = vmatprep.subr.bf16.mxu0 0
  %2083 = vmatpush1.bf16.msra.mxu0 %v1518
  %2084 = vmatprep.subr.bf16.mxu0 0
  %2085 = vmatpush1.bf16.msra.mxu0 %v1519
  %2086 = vmatprep.subr.bf16.mxu0 0
  %2087 = vmatpush1.bf16.msra.mxu0 %v1520
  %2088 = vmatprep.subr.bf16.mxu0 0
  %2089 = vmatpush1.bf16.msra.mxu0 %v1521
  %2090 = vmatprep.subr.bf16.mxu0 0
  %2091 = vmatpush1.bf16.msra.mxu0 %v1522
  %2092 = vmatprep.subr.bf16.mxu0 0
  %2093 = vmatpush1.bf16.msra.mxu0 %v1523
  %2094 = vmatprep.subr.bf16.mxu0 0
  %2095 = vmatpush1.bf16.msra.mxu0 %v1524
  %2096 = vmatprep.subr.bf16.mxu0 0
  %2097 = vmatpush1.bf16.msra.mxu0 %v1525
  %2098 = vmatprep.subr.bf16.mxu0 0
  %2099 = vmatpush1.bf16.msra.mxu0 %v1526
  %2100 = vmatprep.subr.bf16.mxu0 0
  %2101 = vmatpush1.bf16.msra.mxu0 %v1527
  %2102 = vmatprep.subr.bf16.mxu0 0
  %2103 = vmatpush1.bf16.msra.mxu0 %v1528
  %2104 = vmatprep.subr.bf16.mxu0 0
  %2105 = vmatpush1.bf16.msra.mxu0 %v1529
  %2106 = vmatprep.subr.bf16.mxu0 0
  %2107 = vmatpush1.bf16.msra.mxu0 %v1530
  %2108 = vmatprep.subr.bf16.mxu0 0
  %2109 = vmatpush1.bf16.msra.mxu0 %v1531
  %2110 = vmatprep.subr.bf16.mxu0 0
  %2111 = vmatpush1.bf16.msra.mxu0 %v1532
  %2112 = vmatprep.subr.bf16.mxu0 0
  %2113 = vmatpush1.bf16.msra.mxu0 %v1533
  %2114 = vmatprep.mubr.bf16.mxu0 %v534
  %2115 = vmatmul.mubr.bf16.gmra.mrb[0].mxu0 %v532
  %v2116 = vpop.f32.mrb[0].mxu0
  %v2117 = vadd.f32 %v2077, %v2116
  %v2118 = vpop.f32.mrb[0].mxu0
  %v2119 = vpop.f32.mrb[0].mxu0
  %v2120 = vpop.f32.mrb[0].mxu0
  %2121 = vdwg.mxu0
  %2122 = vmatprep.subr.bf16.mxu0 0
  %2123 = vmatpush1.bf16.msra.mxu0 %v1534
  %2124 = vmatprep.subr.bf16.mxu0 0
  %2125 = vmatpush1.bf16.msra.mxu0 %v1535
  %2126 = vmatprep.subr.bf16.mxu0 0
  %2127 = vmatpush1.bf16.msra.mxu0 %v1536
  %2128 = vmatprep.subr.bf16.mxu0 0
  %2129 = vmatpush1.bf16.msra.mxu0 %v1537
  %2130 = vmatprep.subr.bf16.mxu0 0
  %2131 = vmatpush1.bf16.msra.mxu0 %v1538
  %2132 = vmatprep.subr.bf16.mxu0 0
  %2133 = vmatpush1.bf16.msra.mxu0 %v1539
  %2134 = vmatprep.subr.bf16.mxu0 0
  %2135 = vmatpush1.bf16.msra.mxu0 %v1540
  %2136 = vmatprep.subr.bf16.mxu0 0
  %2137 = vmatpush1.bf16.msra.mxu0 %v1541
  %2138 = vmatprep.subr.bf16.mxu0 0
  %2139 = vmatpush1.bf16.msra.mxu0 %v1542
  %2140 = vmatprep.subr.bf16.mxu0 0
  %2141 = vmatpush1.bf16.msra.mxu0 %v1543
  %2142 = vmatprep.subr.bf16.mxu0 0
  %2143 = vmatpush1.bf16.msra.mxu0 %v1544
  %2144 = vmatprep.subr.bf16.mxu0 0
  %2145 = vmatpush1.bf16.msra.mxu0 %v1545
  %2146 = vmatprep.subr.bf16.mxu0 0
  %2147 = vmatpush1.bf16.msra.mxu0 %v1546
  %2148 = vmatprep.subr.bf16.mxu0 0
  %2149 = vmatpush1.bf16.msra.mxu0 %v1547
  %2150 = vmatprep.subr.bf16.mxu0 0
  %2151 = vmatpush1.bf16.msra.mxu0 %v1548
  %2152 = vmatprep.subr.bf16.mxu0 0
  %2153 = vmatpush1.bf16.msra.mxu0 %v1549
  %2154 = vmatprep.mubr.bf16.mxu0 %v572
  %2155 = vmatmul.mubr.bf16.gmra.mrb[0].mxu0 %v558
  %v2156 = vpop.f32.mrb[0].mxu0
  %v2157 = vadd.f32 %v2117, %v2156
  %v2158 = vpop.f32.mrb[0].mxu0
  %v2159 = vpop.f32.mrb[0].mxu0
  %v2160 = vpop.f32.mrb[0].mxu0
  %2161 = vdwg.mxu0
  %2162 = vmatprep.subr.bf16.mxu0 0
  %2163 = vmatpush1.bf16.msra.mxu0 %v1550
  %2164 = vmatprep.subr.bf16.mxu0 0
  %2165 = vmatpush1.bf16.msra.mxu0 %v1551
  %2166 = vmatprep.subr.bf16.mxu0 0
  %2167 = vmatpush1.bf16.msra.mxu0 %v1552
  %2168 = vmatprep.subr.bf16.mxu0 0
  %2169 = vmatpush1.bf16.msra.mxu0 %v1553
  %2170 = vmatprep.subr.bf16.mxu0 0
  %2171 = vmatpush1.bf16.msra.mxu0 %v1554
  %2172 = vmatprep.subr.bf16.mxu0 0
  %2173 = vmatpush1.bf16.msra.mxu0 %v1555
  %2174 = vmatprep.subr.bf16.mxu0 0
  %2175 = vmatpush1.bf16.msra.mxu0 %v1556
  %2176 = vmatprep.subr.bf16.mxu0 0
  %2177 = vmatpush1.bf16.msra.mxu0 %v1557
  %2178 = vmatprep.subr.bf16.mxu0 0
  %2179 = vmatpush1.bf16.msra.mxu0 %v1558
  %2180 = vmatprep.subr.bf16.mxu0 0
  %2181 = vmatpush1.bf16.msra.mxu0 %v1559
  %2182 = vmatprep.subr.bf16.mxu0 0
  %2183 = vmatpush1.bf16.msra.mxu0 %v1560
  %2184 = vmatprep.subr.bf16.mxu0 0
  %2185 = vmatpush1.bf16.msra.mxu0 %v1561
  %2186 = vmatprep.subr.bf16.mxu0 0
  %2187 = vmatpush1.bf16.msra.mxu0 %v1562
  %2188 = vmatprep.subr.bf16.mxu0 0
  %2189 = vmatpush1.bf16.msra.mxu0 %v1563
  %2190 = vmatprep.subr.bf16.mxu0 0
  %2191 = vmatpush1.bf16.msra.mxu0 %v1564
  %2192 = vmatprep.subr.bf16.mxu0 0
  %2193 = vmatpush1.bf16.msra.mxu0 %v1565
  %2194 = vmatprep.mubr.bf16.mxu0 %v582
  %2195 = vmatmul.mubr.bf16.gmra.mrb[0].mxu0 %v580
  %v2196 = vpop.f32.mrb[0].mxu0
  %v2197 = vadd.f32 %v2157, %v2196
  %v2198 = vpop.f32.mrb[0].mxu0
  %v2199 = vpop.f32.mrb[0].mxu0
  %v2200 = vpop.f32.mrb[0].mxu0
  %2201 = vdwg.mxu0
  %2202 = vmatprep.subr.bf16.mxu0 0
  %2203 = vmatpush1.bf16.msra.mxu0 %v1566
  %2204 = vmatprep.subr.bf16.mxu0 0
  %2205 = vmatpush1.bf16.msra.mxu0 %v1567
  %2206 = vmatprep.subr.bf16.mxu0 0
  %2207 = vmatpush1.bf16.msra.mxu0 %v1568
  %2208 = vmatprep.subr.bf16.mxu0 0
  %2209 = vmatpush1.bf16.msra.mxu0 %v1569
  %2210 = vmatprep.subr.bf16.mxu0 0
  %2211 = vmatpush1.bf16.msra.mxu0 %v1570
  %2212 = vmatprep.subr.bf16.mxu0 0
  %2213 = vmatpush1.bf16.msra.mxu0 %v1571
  %2214 = vmatprep.subr.bf16.mxu0 0
  %2215 = vmatpush1.bf16.msra.mxu0 %v1572
  %2216 = vmatprep.subr.bf16.mxu0 0
  %2217 = vmatpush1.bf16.msra.mxu0 %v1573
  %2218 = vmatprep.subr.bf16.mxu0 0
  %2219 = vmatpush1.bf16.msra.mxu0 %v1574
  %2220 = vmatprep.subr.bf16.mxu0 0
  %2221 = vmatpush1.bf16.msra.mxu0 %v1575
  %2222 = vmatprep.subr.bf16.mxu0 0
  %2223 = vmatpush1.bf16.msra.mxu0 %v1576
  %2224 = vmatprep.subr.bf16.mxu0 0
  %2225 = vmatpush1.bf16.msra.mxu0 %v1577
  %2226 = vmatprep.subr.bf16.mxu0 0
  %2227 = vmatpush1.bf16.msra.mxu0 %v1578
  %2228 = vmatprep.subr.bf16.mxu0 0
  %2229 = vmatpush1.bf16.msra.mxu0 %v1579
  %2230 = vmatprep.subr.bf16.mxu0 0
  %2231 = vmatpush1.bf16.msra.mxu0 %v1580
  %2232 = vmatprep.subr.bf16.mxu0 0
  %2233 = vmatpush1.bf16.msra.mxu0 %v1581
  %2234 = vmatprep.mubr.bf16.mxu0 %v579
  %2235 = vmatmul.mubr.bf16.gmra.mrb[0].mxu0 %v565
  %v2236 = vpop.f32.mrb[0].mxu0
  %v2237 = vadd.f32 %v2197, %v2236
  %v2238 = vpop.f32.mrb[0].mxu0
  %v2239 = vpop.f32.mrb[0].mxu0
  %v2240 = vpop.f32.mrb[0].mxu0
  %2241 = vdwg.mxu0
  %2242 = vmatprep.subr.bf16.mxu0 0
  %2243 = vmatpush1.bf16.msra.mxu0 %v1582
  %2244 = vmatprep.subr.bf16.mxu0 0
  %2245 = vmatpush1.bf16.msra.mxu0 %v1583
  %2246 = vmatprep.subr.bf16.mxu0 0
  %2247 = vmatpush1.bf16.msra.mxu0 %v1584
  %2248 = vmatprep.subr.bf16.mxu0 0
  %2249 = vmatpush1.bf16.msra.mxu0 %v1585
  %2250 = vmatprep.subr.bf16.mxu0 0
  %2251 = vmatpush1.bf16.msra.mxu0 %v1586
  %2252 = vmatprep.subr.bf16.mxu0 0
  %2253 = vmatpush1.bf16.msra.mxu0 %v1587
  %2254 = vmatprep.subr.bf16.mxu0 0
  %2255 = vmatpush1.bf16.msra.mxu0 %v1588
  %2256 = vmatprep.subr.bf16.mxu0 0
  %2257 = vmatpush1.bf16.msra.mxu0 %v1589
  %2258 = vmatprep.subr.bf16.mxu0 0
  %2259 = vmatpush1.bf16.msra.mxu0 %v1590
  %2260 = vmatprep.subr.bf16.mxu0 0
  %2261 = vmatpush1.bf16.msra.mxu0 %v1591
  %2262 = vmatprep.subr.bf16.mxu0 0
  %2263 = vmatpush1.bf16.msra.mxu0 %v1592
  %2264 = vmatprep.subr.bf16.mxu0 0
  %2265 = vmatpush1.bf16.msra.mxu0 %v1593
  %2266 = vmatprep.subr.bf16.mxu0 0
  %2267 = vmatpush1.bf16.msra.mxu0 %v1594
  %2268 = vmatprep.subr.bf16.mxu0 0
  %2269 = vmatpush1.bf16.msra.mxu0 %v1595
  %2270 = vmatprep.subr.bf16.mxu0 0
  %2271 = vmatpush1.bf16.msra.mxu0 %v1596
  %2272 = vmatprep.subr.bf16.mxu0 0
  %2273 = vmatpush1.bf16.msra.mxu0 %v1597
  %2274 = vmatprep.mubr.bf16.mxu0 %v583
  %2275 = vmatmul.mubr.bf16.gmra.mrb[0].mxu0 %v581
  %v2276 = vpop.f32.mrb[0].mxu0
  %v2277 = vadd.f32 %v2237, %v2276
  %v2278 = vpop.f32.mrb[0].mxu0
  %v2279 = vpop.f32.mrb[0].mxu0
  %v2280 = vpop.f32.mrb[0].mxu0
  %2281 = vdwg.mxu0
  %2282 = vmatprep.subr.bf16.mxu0 0
  %2283 = vmatpush1.bf16.msra.mxu0 %v1598
  %2284 = vmatprep.subr.bf16.mxu0 0
  %2285 = vmatpush1.bf16.msra.mxu0 %v1599
  %2286 = vmatprep.subr.bf16.mxu0 0
  %2287 = vmatpush1.bf16.msra.mxu0 %v1600
  %2288 = vmatprep.subr.bf16.mxu0 0
  %2289 = vmatpush1.bf16.msra.mxu0 %v1601
  %2290 = vmatprep.subr.bf16.mxu0 0
  %2291 = vmatpush1.bf16.msra.mxu0 0
  %2292 = vmatprep.subr.bf16.mxu0 0
  %2293 = vmatpush1.bf16.msra.mxu0 0
  %2294 = vmatprep.subr.bf16.mxu0 0
  %2295 = vmatpush1.bf16.msra.mxu0 0
  %2296 = vmatprep.subr.bf16.mxu0 0
  %2297 = vmatpush1.bf16.msra.mxu0 0
  %2298 = vmatprep.subr.bf16.mxu0 0
  %2299 = vmatpush1.bf16.msra.mxu0 0
  %2300 = vmatprep.subr.bf16.mxu0 0
  %2301 = vmatpush1.bf16.msra.mxu0 0
  %2302 = vmatprep.subr.bf16.mxu0 0
  %2303 = vmatpush1.bf16.msra.mxu0 0
  %2304 = vmatprep.subr.bf16.mxu0 0
  %2305 = vmatpush1.bf16.msra.mxu0 0
  %2306 = vmatprep.subr.bf16.mxu0 0
  %2307 = vmatpush1.bf16.msra.mxu0 0
  %2308 = vmatprep.subr.bf16.mxu0 0
  %2309 = vmatpush1.bf16.msra.mxu0 0
  %2310 = vmatprep.subr.bf16.mxu0 0
  %2311 = vmatpush1.bf16.msra.mxu0 0
  %2312 = vmatprep.subr.bf16.mxu0 0
  %2313 = vmatpush1.bf16.msra.mxu0 0
  %2314 = vmatprep.mubr.bf16.mxu0 0
  %2315 = vmatmul.mubr.bf16.gmra.mrb[0].mxu0 %v1800
  %v2316 = vpop.f32.mrb[0].mxu0
  %v2317 = vadd.f32 %v2277, %v2316
  %v2318 = vpop.f32.mrb[0].mxu0
  %v2319 = vpop.f32.mrb[0].mxu0
  %v2320 = vpop.f32.mrb[0].mxu0
  %2321 = vdwg.mxu0
  %v2322 = vmax.f32 %v2317, 0.0
  %v2323 = vpack.c.bf16 %v2322, %v2322
  %v2324 = vld [vmem:[%s3] sm:$0xf]
  %v2325 = vld [vmem:[%s3 + $0x4] sm:$0xf]
  %v2326 = vld [vmem:[%s3 + $0x8] sm:$0xf]
  %v2327 = vld [vmem:[%s3 + $0xc] sm:$0xf]
  %v2328 = vld [vmem:[%s4] sm:$0x1]
  %v2330 = vlaneseq
  %v2331 = vshrl.u32 %v2330, 7
  %v2332 = vsub.s32 0, %v2331
  %v2333 = vrot.slane %v2328, %v2332
  %v2339 = vunpack.c.l.b16 %v2324
  %v2340 = vunpack.c.l.b16 %v2325
  %v2341 = vunpack.c.l.b16 %v2326
  %v2342 = vunpack.c.l.b16 %v2327
  %v2343 = vpack.c.b16 %v2340, %v2339
  %v2344 = vpack.c.b16 %v2342, %v2341
  %vm2347 = vcmask 261120
  %v2349 = vsel %vm2347, %v2323, 0
  %2351 = vmatprep.subr.bf16.mxu0 0
  %2352 = vmatpush1.bf16.msra.mxu0 %v2343
  %2353 = vmatprep.subr.bf16.mxu0 0
  %2354 = vmatpush1.bf16.msra.mxu0 %v2344
  %2355 = vmatprep.subr.bf16.mxu0 0
  %2356 = vmatpush1.bf16.msra.mxu0 0
  %2357 = vmatprep.subr.bf16.mxu0 0
  %2358 = vmatpush1.bf16.msra.mxu0 0
  %2359 = vmatprep.subr.bf16.mxu0 0
  %2360 = vmatpush1.bf16.msra.mxu0 0
  %2361 = vmatprep.subr.bf16.mxu0 0
  %2362 = vmatpush1.bf16.msra.mxu0 0
  %2363 = vmatprep.subr.bf16.mxu0 0
  %2364 = vmatpush1.bf16.msra.mxu0 0
  %2365 = vmatprep.subr.bf16.mxu0 0
  %2366 = vmatpush1.bf16.msra.mxu0 0
  %2367 = vmatprep.subr.bf16.mxu0 0
  %2368 = vmatpush1.bf16.msra.mxu0 0
  %2369 = vmatprep.subr.bf16.mxu0 0
  %2370 = vmatpush1.bf16.msra.mxu0 0
  %2371 = vmatprep.subr.bf16.mxu0 0
  %2372 = vmatpush1.bf16.msra.mxu0 0
  %2373 = vmatprep.subr.bf16.mxu0 0
  %2374 = vmatpush1.bf16.msra.mxu0 0
  %2375 = vmatprep.subr.bf16.mxu0 0
  %2376 = vmatpush1.bf16.msra.mxu0 0
  %2377 = vmatprep.subr.bf16.mxu0 0
  %2378 = vmatpush1.bf16.msra.mxu0 0
  %2379 = vmatprep.subr.bf16.mxu0 0
  %2380 = vmatpush1.bf16.msra.mxu0 0
  %2381 = vmatprep.subr.bf16.mxu0 0
  %2382 = vmatpush1.bf16.msra.mxu0 0
  %2383 = vmatprep.mubr.bf16.mxu0 0
  %2384 = vmatmul.mubr.bf16.gmra.mrb[0].mxu0 %v2349
  %v2385 = vpop.f32.mrb[0].mxu0
  %v2386 = vadd.f32 %v2333, %v2385
  %v2387 = vpop.f32.mrb[0].mxu0
  %v2388 = vpop.f32.mrb[0].mxu0
  %v2389 = vpop.f32.mrb[0].mxu0
  %2390 = vdwg.mxu0
  %v2391 = vmax.f32 %v2386, 0.0
  %v2392 = vpack.c.bf16 %v2391, %v2391
  %v2393 = vld [vmem:[%s5] sm:$0xf]
  %v2394 = vld [vmem:[%s5 + $0x4] sm:$0xf]
  %v2395 = vld [vmem:[%s5 + $0x8] sm:$0xf]
  %v2396 = vld [vmem:[%s5 + $0xc] sm:$0xf]
  %v2397 = vld [vmem:[%s6] sm:$0x1]
  %v2399 = vlaneseq
  %v2400 = vshrl.u32 %v2399, 7
  %v2401 = vsub.s32 0, %v2400
  %v2402 = vrot.slane %v2397, %v2401
  %v2408 = vunpack.c.l.b16 %v2393
  %v2409 = vunpack.c.l.b16 %v2394
  %v2410 = vunpack.c.l.b16 %v2395
  %v2411 = vunpack.c.l.b16 %v2396
  %v2412 = vpack.c.b16 %v2409, %v2408
  %v2413 = vpack.c.b16 %v2411, %v2410
  %v2417 = vsel %vm2347, %v2392, 0
  %2419 = vmatprep.subr.bf16.mxu0 0
  %2420 = vmatpush1.bf16.msra.mxu0 %v2412
  %2421 = vmatprep.subr.bf16.mxu0 0
  %2422 = vmatpush1.bf16.msra.mxu0 %v2413
  %2423 = vmatprep.subr.bf16.mxu0 0
  %2424 = vmatpush1.bf16.msra.mxu0 0
  %2425 = vmatprep.subr.bf16.mxu0 0
  %2426 = vmatpush1.bf16.msra.mxu0 0
  %2427 = vmatprep.subr.bf16.mxu0 0
  %2428 = vmatpush1.bf16.msra.mxu0 0
  %2429 = vmatprep.subr.bf16.mxu0 0
  %2430 = vmatpush1.bf16.msra.mxu0 0
  %2431 = vmatprep.subr.bf16.mxu0 0
  %2432 = vmatpush1.bf16.msra.mxu0 0
  %2433 = vmatprep.subr.bf16.mxu0 0
  %2434 = vmatpush1.bf16.msra.mxu0 0
  %2435 = vmatprep.subr.bf16.mxu0 0
  %2436 = vmatpush1.bf16.msra.mxu0 0
  %2437 = vmatprep.subr.bf16.mxu0 0
  %2438 = vmatpush1.bf16.msra.mxu0 0
  %2439 = vmatprep.subr.bf16.mxu0 0
  %2440 = vmatpush1.bf16.msra.mxu0 0
  %2441 = vmatprep.subr.bf16.mxu0 0
  %2442 = vmatpush1.bf16.msra.mxu0 0
  %2443 = vmatprep.subr.bf16.mxu0 0
  %2444 = vmatpush1.bf16.msra.mxu0 0
  %2445 = vmatprep.subr.bf16.mxu0 0
  %2446 = vmatpush1.bf16.msra.mxu0 0
  %2447 = vmatprep.subr.bf16.mxu0 0
  %2448 = vmatpush1.bf16.msra.mxu0 0
  %2449 = vmatprep.subr.bf16.mxu0 0
  %2450 = vmatpush1.bf16.msra.mxu0 0
  %2451 = vmatprep.mubr.bf16.mxu0 0
  %2452 = vmatmul.mubr.bf16.gmra.mrb[0].mxu0 %v2417
  %v2453 = vpop.f32.mrb[0].mxu0
  %v2454 = vadd.f32 %v2402, %v2453
  %v2455 = vpop.f32.mrb[0].mxu0
  %v2456 = vpop.f32.mrb[0].mxu0
  %v2457 = vpop.f32.mrb[0].mxu0
  %2458 = vdwg.mxu0
  %v2459 = vmax.f32 %v2454, -20.0
  %v2460 = vmin.f32 %v2459, 2.0
  %v2461 = vmul.f32 %v2460, 1.442695
  %v2462 = vpow.pop %v2461
  %v2463 = vld [vmem:[%s7] sm:$0x3]
  %2465 = vrot.lane.b32.xlu0 %v2463, 6
  %v2466 = vpop.permute.xlu0 %2465
  %v2468 = vmul.f32 %v2462, %v2466
  %2470 = vrot.lane.b32.xlu0 %v2468, 122
  %v2471 = vpop.permute.xlu0 %2470
  %v2473 = vadd.f32 %v2454, %v2471
  %v2474 = vtanh.pop %v2473
  %v2475 = vmul.f32 %v2463, -0.5
  %v2476 = vmul.f32 %v2475, %v2463
  %2478 = vrot.lane.b32.xlu0 %v2460, 122
  %v2479 = vpop.permute.xlu0 %2478
  %v2481 = vsub.f32 %v2476, %v2479
  %v2482 = vsub.f32 %v2481, 0.9189385
  %vm2483 = vcmask 41984
  %v2484 = vsel %vm2483, %v2482, 0.0
  %2485 = vadd.xlane.f32.xlu0 %v2484
  %v2486 = vpop.xlane.xlu0 %2485
  %v2487 = vmul.f32 %v2473, -2.0
  %v2488 = vmax.f32 %v2487, 0.0
  %v2489 = vand.u32 2147483647, %v2487
  %v2490 = vsub.f32 0.0, %v2489
  %v2491 = vmul.f32 %v2490, 1.442695
  %v2492 = vpow.pop %v2491
  %v2493 = vadd.f32 %v2492, 1.0
  %v2494 = vlog2.pop %v2493
  %v2495 = vmul.f32 %v2494, 0.6931472
  %v2496 = vmul.f32 -0.5, %v2492
  %v2497 = vadd.f32 %v2496, 1.0
  %v2498 = vmul.f32 %v2497, %v2492
  %v2499 = vand.u32 2147483647, %v2492
  %vm2500 = vcmp.lt.f32.partialorder %v2499, 0.0004427343
  %v2501 = vsel %vm2500, %v2498, %v2495
  %v2502 = vadd.f32 %v2488, %v2501
  %v2503 = vsub.f32 0.6931472, %v2473
  %v2504 = vsub.f32 %v2503, %v2502
  %v2505 = vmul.f32 %v2504, 2.0
  %v2506 = vsel %vm2483, %v2505, 0.0
  %2507 = vadd.xlane.f32.xlu0 %v2506
  %v2508 = vpop.xlane.xlu0 %2507
  %v2509 = vsub.f32 %v2486, %v2508
  %vm2510 = vcmask 48128
  %v2511 = vsel %vm2510, %v2474, %v2509
  %vm2512 = vcmask 56320
  %v2513 = vsel %vm2512, %v2511, 0.0
  %2514 = vst [vmem:[%s8] sm:$0x3] %v2513
  // Predicated region
  $region34: #{actor_forward.7} parent=0 // pred_check
    _
  $region35: #{actor_forward.7} parent=0 // pred_check_branch
    %2516 = sbr.rel (0) target = $region37
  $region36: #{actor_forward.7} parent=0 // pred_region
    _
  $region37: #{actor_forward.7} parent=0 // pred_fallthru
    _
  // Predicated region
  $region38: #{actor_forward.7} parent=0 // pred_check
    _
  $region39: #{actor_forward.7} parent=0 // pred_check_branch
    %2518 = sbr.rel (0) target = $region41
  $region40: #{actor_forward.7} parent=0 // pred_region
    _
  $region41: #{actor_forward.7} parent=0 // pred_fallthru
    _

</llo_original>
